<compile_context>
chip_gen: v6e
topology: v6e:2x2x1
jax: 0.10.0
libtpu: 0.0.40
codegen_flags: <defaults>
</compile_context>

<pallas_src>
import functools

import jax
import jax.numpy as jnp
from jax import lax
from jax.experimental import pallas as pl
from jax.experimental.pallas import tpu as pltpu


# ----------------------------------------------------------------------------
# Weight re-layout helpers (pure JAX glue; for inference these would be
# precomputed once outside the per-call path).
# ----------------------------------------------------------------------------
def build_upconv_weight(up_w, w_img):
    """ConvTranspose2d(k=2,s=2) weight (C0,C1,2,2) -> block-diag (W*C0, 4*W*C1).

    Row index    = w*C0 + ci                       (lane-flattened NHWC input)
    Column index = di*(2*W*C1) + (2*w+dj)*C1 + co  (lane-flattened upsampled
                                                    output, di-major so the
                                                    output block is exactly the
                                                    row pair (2h, 2h+1)).
    """
    c0, c1 = up_w.shape[0], up_w.shape[1]
    base = jnp.transpose(up_w, (0, 2, 3, 1))                 # (C0, di, dj, C1)
    eye = jnp.eye(w_img, dtype=up_w.dtype)                   # (W, W)
    big = (eye[:, None, None, :, None, None] *
           base[None, :, :, None, :, :])                     # (W,C0,2,W,2,C1)
    return big.reshape(w_img * c0, 2 * w_img * 2 * c1)


def build_banded_conv_weight(w_hwio, w_img):
    """3x3 conv weight slab (3,3,Ci,Co) -> banded (3, W*Ci, W*Co) per row-tap.

    band[kh, w_in*Ci+ci, w_out*Co+co] = w[kh, w_in-w_out+1, ci, co] when
    |w_in - w_out| <= 1, else 0.  The zero band edges implement the kw
    (left/right) SAME padding for free; the kh (top/bottom) halo is handled
    inside the kernel.
    """
    _, _, ci, co = w_hwio.shape
    w_in = jnp.arange(w_img)[:, None]
    w_out = jnp.arange(w_img)[None, :]
    delta = w_in - w_out + 1                                  # (W, W)
    valid = (delta >= 0) & (delta <= 2)
    delta_c = jnp.clip(delta, 0, 2)
    bands = []
    for kh in range(3):
        t = w_hwio[kh][delta_c]                               # (W, W, Ci, Co)
        t = jnp.where(valid[:, :, None, None], t, 0.0)
        t = jnp.transpose(t, (0, 2, 1, 3)).reshape(w_img * ci, w_img * co)
        bands.append(t)
    return jnp.stack(bands, axis=0)                           # (3, W*Ci, W*Co)


# ----------------------------------------------------------------------------
# Kernel 1: ConvTranspose2d(k=2,s=2) + folded BatchNorm + ReLU.
# One lane-dense matmul per (batch, row-tile); no transpose, no bias input.
# ----------------------------------------------------------------------------
def upconv_bn_relu_kernel(x_ref, w_ref, scale_ref, shift_ref, o_ref):
    # x_ref:     (1, TH, W*C0)    lane-flattened NHWC input rows
    # w_ref:     (W*C0, 4*W*C1)   block-diagonal deconv weight
    # scale_ref: (1, 4*W*C1) f32  folded BN scale (per output lane)
    # shift_ref: (1, 4*W*C1) f32  folded BN shift + deconv bias
    # o_ref:     (1, TH, 4*W*C1)  == upsampled rows (2h, 2h+1) per input row h
    z = jnp.dot(x_ref[0], w_ref[...], preferred_element_type=jnp.float32)
    y = z * scale_ref[...] + shift_ref[...]        # f32 epilogue (v5e-safe)
    o_ref[0] = jnp.maximum(y, 0.0).astype(o_ref.dtype)


def upconv_bn_relu(x_flat, w_big, scale_lane, shift_lane, row_tile):
    n, h, k = x_flat.shape
    l_out = w_big.shape[1]
    assert h % row_tile == 0
    grid = (n, h // row_tile)
    return pl.pallas_call(
        upconv_bn_relu_kernel,
        out_shape=jax.ShapeDtypeStruct((n, h, l_out), x_flat.dtype),
        grid_spec=pltpu.PrefetchScalarGridSpec(
            num_scalar_prefetch=0,
            grid=grid,
            in_specs=[
                pl.BlockSpec((1, row_tile, k), lambda i, r: (i, r, 0)),
                pl.BlockSpec((k, l_out), lambda i, r: (0, 0)),
                pl.BlockSpec((1, l_out), lambda i, r: (0, 0)),
                pl.BlockSpec((1, l_out), lambda i, r: (0, 0)),
            ],
            out_specs=pl.BlockSpec((1, row_tile, l_out), lambda i, r: (i, r, 0)),
        ),
        compiler_params=pltpu.CompilerParams(
            dimension_semantics=("parallel", "parallel"),
            vmem_limit_bytes=32 * 1024 * 1024),
    )(x_flat, w_big, scale_lane, shift_lane)


# ----------------------------------------------------------------------------
# Kernel 2: 3x3 conv (+ fused channel-concat across `n_slabs` inputs) + ReLU.
# The per-batch input slabs stay resident in VMEM across row tiles; the kh
# halo is assembled in an f32 VMEM scratch (top/bottom rows zeroed at image
# edges).  3 banded matmuls per slab per row-tile, f32 accumulation.
# ----------------------------------------------------------------------------
def make_conv3x3_kernel(n_slabs, row_tile, lhs_dtype):
    def kernel(*refs):
        x_refs = refs[:n_slabs]
        w_refs = refs[n_slabs:2 * n_slabs]
        b_ref = refs[2 * n_slabs]
        o_ref = refs[2 * n_slabs + 1]
        pad_refs = refs[2 * n_slabs + 2:]

        r = pl.program_id(1)
        nr = pl.num_programs(1)
        r0 = pl.multiple_of(r * row_tile, row_tile)

        for s in range(n_slabs):
            x = x_refs[s]
            pad = pad_refs[s]
            lane = x.shape[2]
            zrow = jnp.zeros((1, lane), jnp.float32)
            pad[0:1, :] = zrow
            pad[row_tile + 1:row_tile + 2, :] = zrow
            pad[1:row_tile + 1, :] = (
                x[0, pl.ds(r0, row_tile), :].astype(jnp.float32))

            # Halo rows are fetched via aligned row_tile-sized chunks (only the
            # needed row is used) so packed (bf16) dynamic slices stay aligned.
            @pl.when(r > 0)
            def _top(x=x, pad=pad):
                chunk = x[0, pl.ds(r0 - row_tile, row_tile), :]
                pad[0:1, :] = chunk[row_tile - 1:row_tile, :].astype(jnp.float32)

            @pl.when(r < nr - 1)
            def _bot(x=x, pad=pad):
                chunk = x[0, pl.ds(r0 + row_tile, row_tile), :]
                pad[row_tile + 1:row_tile + 2, :] = (
                    chunk[0:1, :].astype(jnp.float32))

        l_out = o_ref.shape[2]
        acc = jnp.zeros((row_tile, l_out), jnp.float32)
        for kh in range(3):
            for s in range(n_slabs):
                lhs = pad_refs[s][kh:kh + row_tile, :].astype(lhs_dtype)
                acc = acc + jnp.dot(lhs, w_refs[s][kh],
                                    preferred_element_type=jnp.float32)
        y = acc + b_ref[...]                       # f32 epilogue
        o_ref[0] = jnp.maximum(y, 0.0).astype(o_ref.dtype)

    return kernel


def conv3x3_relu(slabs, w_bands, bias_lane, row_tile):
    # slabs:   list of (N, Himg, Wimg*Ci_s) lane-flattened activations
    # w_bands: list of (3, Wimg*Ci_s, Wimg*Cout) banded weights (same order)
    # bias_lane: (1, Wimg*Cout) f32
    n, h_img, _ = slabs[0].shape
    l_out = w_bands[0].shape[2]
    ns = len(slabs)
    assert h_img % row_tile == 0
    grid = (n, h_img // row_tile)

    # Per-batch input slabs resident across the row-tile axis (index map
    # ignores r -> no re-DMA between row tiles of the same batch element).
    # TODO(synk): at very large H switch to a manual halo DMA so the input
    # block no longer scales with the full image height.
    in_specs = [pl.BlockSpec((1, h_img, s.shape[2]), lambda i, r: (i, 0, 0))
                for s in slabs]
    in_specs += [pl.BlockSpec(tuple(w.shape), lambda i, r: (0, 0, 0))
                 for w in w_bands]
    in_specs += [pl.BlockSpec((1, l_out), lambda i, r: (0, 0))]
    scratch = [pltpu.VMEM((row_tile + 2, s.shape[2]), jnp.float32)
               for s in slabs]

    return pl.pallas_call(
        make_conv3x3_kernel(ns, row_tile, slabs[0].dtype),
        out_shape=jax.ShapeDtypeStruct((n, h_img, l_out), slabs[0].dtype),
        grid_spec=pltpu.PrefetchScalarGridSpec(
            num_scalar_prefetch=0,
            grid=grid,
            in_specs=in_specs,
            out_specs=pl.BlockSpec((1, row_tile, l_out), lambda i, r: (i, r, 0)),
            scratch_shapes=scratch,
        ),
        compiler_params=pltpu.CompilerParams(
            dimension_semantics=("parallel", "parallel"),
            vmem_limit_bytes=32 * 1024 * 1024),
    )(*slabs, *w_bands, bias_lane)


# ----------------------------------------------------------------------------
# Glue: parameter init, center crop, full UpSample forward.
# ----------------------------------------------------------------------------
def init_params(key, channels):
    C0, C1, C2, C3 = channels
    ks = jax.random.split(key, 10)
    p = {}
    p["up_w"] = jax.random.normal(ks[0], (C0, C1, 2, 2), jnp.float32) * 0.1
    p["up_b"] = jax.random.normal(ks[1], (C1,), jnp.float32) * 0.1
    p["bn_gamma"] = 1.0 + 0.1 * jax.random.normal(ks[2], (C1,), jnp.float32)
    p["bn_beta"] = 0.1 * jax.random.normal(ks[3], (C1,), jnp.float32)
    p["bn_mean"] = 0.1 * jax.random.normal(ks[4], (C1,), jnp.float32)
    p["bn_var"] = 1.0 + 0.1 * jax.random.uniform(ks[5], (C1,), jnp.float32)
    p["c1_w"] = jax.random.normal(ks[6], (C2, 2 * C1, 3, 3), jnp.float32) * 0.1
    p["c1_b"] = jax.random.normal(ks[7], (C2,), jnp.float32) * 0.1
    p["c2_w"] = jax.random.normal(ks[8], (C3, C2, 3, 3), jnp.float32) * 0.1
    p["c2_b"] = jax.random.normal(ks[9], (C3,), jnp.float32) * 0.1
    return p


def center_crop(skip_nhwc, target_h, target_w):
    _, H, W, _ = skip_nhwc.shape
    top = (H - target_h) // 2
    left = (W - target_w) // 2
    return skip_nhwc[:, top:top + target_h, left:left + target_w, :]


@functools.partial(jax.jit, static_argnames=("mxu_dtype", "row_tile"))
def upsample_forward(x_nchw, skip_nchw, params, *, mxu_dtype=jnp.float32,
                     row_tile=8):
    eps = 1e-5
    c0, c1 = params["up_w"].shape[0], params["up_w"].shape[1]
    c3 = params["c2_w"].shape[0]
    n, _, h, wd = x_nchw.shape
    h_out, w_out = 2 * h, 2 * wd

    # NCHW -> lane-flattened NHWC (N, H, W*C)  (free reshape after transpose)
    x = jnp.transpose(x_nchw, (0, 2, 3, 1)).reshape(n, h, wd * c0)
    x = x.astype(mxu_dtype)

    # Fold ConvTranspose bias + BatchNorm (inference running stats) into a
    # single per-lane scale/shift, kept in f32.
    scale = params["bn_gamma"] / jnp.sqrt(params["bn_var"] + eps)
    shift = (params["bn_beta"] - params["bn_mean"] * scale
             + params["up_b"] * scale)
    scale_lane = jnp.tile(scale, 4 * wd).reshape(1, -1).astype(jnp.float32)
    shift_lane = jnp.tile(shift, 4 * wd).reshape(1, -1).astype(jnp.float32)
    w_up = build_upconv_weight(params["up_w"], wd).astype(mxu_dtype)

    # 1) ConvTranspose2d(k=2,s=2) + BN + ReLU
    y = upconv_bn_relu(x, w_up, scale_lane, shift_lane, row_tile)
    y = y.reshape(n, h_out, w_out * c1)            # free reshape (row split)

    # 2+3) CenterConcat(skip, y) fused into conv1 (two slabs, split weight).
    skip = jnp.transpose(skip_nchw, (0, 2, 3, 1))
    skip = center_crop(skip, h_out, w_out)
    skip = skip.reshape(n, h_out, w_out * c1).astype(mxu_dtype)

    w1 = jnp.transpose(params["c1_w"], (2, 3, 1, 0))     # HWIO (3,3,2*C1,C2)
    wb1_skip = build_banded_conv_weight(w1[:, :, :c1, :], w_out).astype(mxu_dtype)
    wb1_y = build_banded_conv_weight(w1[:, :, c1:, :], w_out).astype(mxu_dtype)
    b1 = jnp.tile(params["c1_b"], w_out).reshape(1, -1).astype(jnp.float32)
    y = conv3x3_relu([skip, y], [wb1_skip, wb1_y], b1, row_tile)

    # 4) conv2 + ReLU
    w2 = jnp.transpose(params["c2_w"], (2, 3, 1, 0))     # (3,3,C2,C3)
    wb2 = build_banded_conv_weight(w2, w_out).astype(mxu_dtype)
    b2 = jnp.tile(params["c2_b"], w_out).reshape(1, -1).astype(jnp.float32)
    y = conv3x3_relu([y], [wb2], b2, row_tile)

    # lane-flattened NHWC -> NCHW (PyTorch convention)
    y = y.reshape(n, h_out, w_out, c3).astype(jnp.float32)
    return jnp.transpose(y, (0, 3, 1, 2))


# ----------------------------------------------------------------------------
# Pure-JAX reference (correctness check only).
# ----------------------------------------------------------------------------
def reference_forward(x_nchw, skip_nchw, params):
    eps = 1e-5
    x = jnp.transpose(x_nchw, (0, 2, 3, 1))
    skip = jnp.transpose(skip_nchw, (0, 2, 3, 1))
    N, H, W, _ = x.shape
    t = jnp.einsum("nhwc,cokl->nhkwlo", x, params["up_w"])
    y = t.reshape(N, 2 * H, 2 * W, -1) + params["up_b"]
    scale = params["bn_gamma"] / jnp.sqrt(params["bn_var"] + eps)
    shift = params["bn_beta"] - params["bn_mean"] * scale
    y = jnp.maximum(y * scale + shift, 0.0)
    skip_c = center_crop(skip, y.shape[1], y.shape[2])
    y = jnp.concatenate([skip_c, y], axis=-1)

    def conv3(x_, w_pt, b):
        w = jnp.transpose(w_pt, (2, 3, 1, 0))
        out = lax.conv_general_dilated(
            x_, w, window_strides=(1, 1), padding="SAME",
            dimension_numbers=("NHWC", "HWIO", "NHWC"))
        return jnp.maximum(out + b, 0.0)

    y = conv3(y, params["c1_w"], params["c1_b"])
    y = conv3(y, params["c2_w"], params["c2_b"])
    return jnp.transpose(y, (0, 3, 1, 2))


if __name__ == "__main__":
    key = jax.random.PRNGKey(0)
    channels = (8, 4, 8, 4)        # (C0, C1, C2, C3)
    N, H, W = 2, 16, 16            # x spatial; skip spatial = 2H x 2W

    k1, k2, k3 = jax.random.split(key, 3)
    x = jax.random.normal(k1, (N, channels[0], H, W), jnp.float32)
    skip = jax.random.normal(k2, (N, channels[1], 2 * H, 2 * W), jnp.float32)
    params = init_params(k3, channels)

    out = jax.block_until_ready(upsample_forward(x, skip, params))
    ref = jax.block_until_ready(reference_forward(x, skip, params))
    assert out.shape == (N, channels[3], 2 * H, 2 * W), out.shape
    err = float(jnp.max(jnp.abs(out - ref)))
    assert err < 1e-3, f"f32 mismatch vs reference: max abs err {err}"

    # bf16 activations/weights for the v6e/v7x MXU path; epilogues stay f32.
    out_bf16 = jax.block_until_ready(
        upsample_forward(x, skip, params, mxu_dtype=jnp.bfloat16, row_tile=16))
    assert out_bf16.shape == out.shape
    err16 = float(jnp.max(jnp.abs(out_bf16.astype(jnp.float32) - ref)))
    assert err16 < 0.25, f"bf16 sanity check failed: max abs err {err16}"

    print("KERNEL_OK")
</pallas_src>

<mosaic_0001>
module attributes {stable_mosaic.version = 11 : i64} {
  func.func @upconv_bn_relu_kernel(%arg0: i32, %arg1: i32, %arg2: memref<1x8x128xf32, #tpu.memory_space<vmem>>, %arg3: memref<128x256xf32, #tpu.memory_space<vmem>>, %arg4: memref<1x256xf32, #tpu.memory_space<vmem>>, %arg5: memref<1x256xf32, #tpu.memory_space<vmem>>, %arg6: memref<1x8x256xf32, #tpu.memory_space<vmem>>) attributes {dimension_semantics = [#tpu.dimension_semantics<parallel>, #tpu.dimension_semantics<parallel>], iteration_bounds = array<i64: 2, 2>, scalar_prefetch = 0 : i64, scratch_operands = 0 : i64, tpu.core_type = #tpu.core_type<tc>, window_params = [{transform_indices = @transform_0, window_bounds = array<i64: 1, 8, 128>}, {pipeline_mode = #tpu.pipeline_mode<synchronous>, transform_indices = @transform_1, window_bounds = array<i64: 128, 256>}, {pipeline_mode = #tpu.pipeline_mode<synchronous>, transform_indices = @transform_2, window_bounds = array<i64: 1, 256>}, {pipeline_mode = #tpu.pipeline_mode<synchronous>, transform_indices = @transform_3, window_bounds = array<i64: 1, 256>}, {transform_indices = @transform_4, window_bounds = array<i64: 1, 8, 256>}]} {
    %c0 = arith.constant 0 : index
    %c0_0 = arith.constant 0 : index
    %c0_1 = arith.constant 0 : index
    %0 = vector.load %arg2[%c0, %c0_0, %c0_1] : memref<1x8x128xf32, #tpu.memory_space<vmem>>, vector<1x8x128xf32>
    %1 = vector.shape_cast %0 : vector<1x8x128xf32> to vector<8x128xf32>
    %c0_2 = arith.constant 0 : index
    %c0_3 = arith.constant 0 : index
    %2 = vector.load %arg3[%c0_2, %c0_3] : memref<128x256xf32, #tpu.memory_space<vmem>>, vector<128x256xf32>
    %cst = arith.constant dense<0.000000e+00> : vector<8x256xf32>
    %3 = tpu.matmul %1, %2, %cst {dimension_numbers = #tpu.dot_dimension_numbers<[1], [0], [0], [1], [0, 0, 1, 1], [], []>} : vector<8x128xf32>, vector<128x256xf32>, vector<8x256xf32> -> vector<8x256xf32>
    %c0_4 = arith.constant 0 : index
    %c0_5 = arith.constant 0 : index
    %4 = vector.load %arg4[%c0_4, %c0_5] : memref<1x256xf32, #tpu.memory_space<vmem>>, vector<1x256xf32>
    %5 = vector.broadcast %4 : vector<1x256xf32> to vector<8x256xf32>
    %6 = arith.mulf %3, %5 : vector<8x256xf32>
    %c0_6 = arith.constant 0 : index
    %c0_7 = arith.constant 0 : index
    %7 = vector.load %arg5[%c0_6, %c0_7] : memref<1x256xf32, #tpu.memory_space<vmem>>, vector<1x256xf32>
    %8 = vector.broadcast %7 : vector<1x256xf32> to vector<8x256xf32>
    %9 = arith.addf %6, %8 : vector<8x256xf32>
    %cst_8 = arith.constant 0.000000e+00 : f32
    %10 = vector.broadcast %cst_8 : f32 to vector<8x256xf32>
    %11 = arith.maximumf %9, %10 : vector<8x256xf32>
    %c0_9 = arith.constant 0 : index
    %c0_10 = arith.constant 0 : index
    %c0_11 = arith.constant 0 : index
    %12 = vector.load %arg6[%c0_9, %c0_10, %c0_11] : memref<1x8x256xf32, #tpu.memory_space<vmem>>, vector<1x8x256xf32>
    %13 = vector.shape_cast %12 : vector<1x8x256xf32> to vector<8x256xf32>
    %14 = vector.shape_cast %11 : vector<8x256xf32> to vector<1x8x256xf32>
    tpu.vector_store %arg6[%c0_9, %c0_10, %c0_11], %14 {strides = array<i32>} : memref<1x8x256xf32, #tpu.memory_space<vmem>>, vector<1x8x256xf32>,
    return
  }
  func.func @transform_0(%arg0: i32, %arg1: i32) -> (i32, i32, i32) {
    %c0_i32 = arith.constant 0 : i32
    %c0_i32_0 = arith.constant 0 : i32
    return %arg0, %arg1, %c0_i32 : i32, i32, i32
  }
  func.func @transform_1(%arg0: i32, %arg1: i32) -> (i32, i32) {
    %c0_i32 = arith.constant 0 : i32
    %c0_i32_0 = arith.constant 0 : i32
    %c0_i32_1 = arith.constant 0 : i32
    return %c0_i32, %c0_i32_0 : i32, i32
  }
  func.func @transform_2(%arg0: i32, %arg1: i32) -> (i32, i32) {
    %c0_i32 = arith.constant 0 : i32
    %c0_i32_0 = arith.constant 0 : i32
    %c0_i32_1 = arith.constant 0 : i32
    return %c0_i32, %c0_i32_0 : i32, i32
  }
  func.func @transform_3(%arg0: i32, %arg1: i32) -> (i32, i32) {
    %c0_i32 = arith.constant 0 : i32
    %c0_i32_0 = arith.constant 0 : i32
    %c0_i32_1 = arith.constant 0 : i32
    return %c0_i32, %c0_i32_0 : i32, i32
  }
  func.func @transform_4(%arg0: i32, %arg1: i32) -> (i32, i32, i32) {
    %c0_i32 = arith.constant 0 : i32
    %c0_i32_0 = arith.constant 0 : i32
    return %arg0, %arg1, %c0_i32 : i32, i32, i32
  }
}

module attributes {stable_mosaic.version = 11 : i64} {
  func.func @kernel(%arg0: i32, %arg1: i32, %arg2: memref<1x32x128xf32, #tpu.memory_space<vmem>>, %arg3: memref<1x32x128xf32, #tpu.memory_space<vmem>>, %arg4: memref<3x128x256xf32, #tpu.memory_space<vmem>>, %arg5: memref<3x128x256xf32, #tpu.memory_space<vmem>>, %arg6: memref<1x256xf32, #tpu.memory_space<vmem>>, %arg7: memref<1x8x256xf32, #tpu.memory_space<vmem>>, %arg8: memref<10x128xf32, #tpu.memory_space<vmem>>, %arg9: memref<10x128xf32, #tpu.memory_space<vmem>>) attributes {dimension_semantics = [#tpu.dimension_semantics<parallel>, #tpu.dimension_semantics<parallel>], iteration_bounds = array<i64: 2, 4>, scalar_prefetch = 0 : i64, scratch_operands = 2 : i64, tpu.core_type = #tpu.core_type<tc>, window_params = [{transform_indices = @transform_0, window_bounds = array<i64: 1, 32, 128>}, {transform_indices = @transform_1, window_bounds = array<i64: 1, 32, 128>}, {pipeline_mode = #tpu.pipeline_mode<synchronous>, transform_indices = @transform_2, window_bounds = array<i64: 3, 128, 256>}, {pipeline_mode = #tpu.pipeline_mode<synchronous>, transform_indices = @transform_3, window_bounds = array<i64: 3, 128, 256>}, {pipeline_mode = #tpu.pipeline_mode<synchronous>, transform_indices = @transform_4, window_bounds = array<i64: 1, 256>}, {transform_indices = @transform_5, window_bounds = array<i64: 1, 8, 256>}]} {
    %c8_i32 = arith.constant 8 : i32
    %0 = arith.muli %arg1, %c8_i32 : i32
    %1 = tpu.assume_multiple %0, 8 : i32
    %cst = arith.constant 0.000000e+00 : f32
    %2 = vector.broadcast %cst : f32 to vector<1x128xf32>
    %c0 = arith.constant 0 : index
    %c0_0 = arith.constant 0 : index
    %3 = vector.load %arg8[%c0, %c0_0] : memref<10x128xf32, #tpu.memory_space<vmem>>, vector<1x128xf32>
    tpu.vector_store %arg8[%c0, %c0_0], %2 {strides = array<i32>} : memref<10x128xf32, #tpu.memory_space<vmem>>, vector<1x128xf32>,
    %c9 = arith.constant 9 : index
    %c0_1 = arith.constant 0 : index
    %4 = vector.load %arg8[%c9, %c0_1] : memref<10x128xf32, #tpu.memory_space<vmem>>, vector<1x128xf32>
    tpu.vector_store %arg8[%c9, %c0_1], %2 {strides = array<i32>} : memref<10x128xf32, #tpu.memory_space<vmem>>, vector<1x128xf32>,
    %c0_2 = arith.constant 0 : index
    %5 = arith.index_cast %1 : i32 to index
    %c0_3 = arith.constant 0 : index
    %6 = vector.load %arg2[%c0_2, %5, %c0_3] : memref<1x32x128xf32, #tpu.memory_space<vmem>>, vector<1x8x128xf32>
    %7 = vector.shape_cast %6 : vector<1x8x128xf32> to vector<8x128xf32>
    %c1 = arith.constant 1 : index
    %c0_4 = arith.constant 0 : index
    %8 = vector.load %arg8[%c1, %c0_4] : memref<10x128xf32, #tpu.memory_space<vmem>>, vector<8x128xf32>
    tpu.vector_store %arg8[%c1, %c0_4], %7 {strides = array<i32>} : memref<10x128xf32, #tpu.memory_space<vmem>>, vector<8x128xf32>,
    %c0_i32 = arith.constant 0 : i32
    %9 = arith.cmpi sgt, %arg1, %c0_i32 : i32
    %10 = arith.extui %9 : i1 to i32
    %c0_i32_5 = arith.constant 0 : i32
    %11 = arith.cmpi ne, %10, %c0_i32_5 : i32
    scf.if %11 {
      %c8_i32_62 = arith.constant 8 : i32
      %67 = arith.subi %1, %c8_i32_62 : i32
      %c0_63 = arith.constant 0 : index
      %68 = arith.index_cast %67 : i32 to index
      %c0_64 = arith.constant 0 : index
      %69 = vector.load %arg2[%c0_63, %68, %c0_64] : memref<1x32x128xf32, #tpu.memory_space<vmem>>, vector<1x8x128xf32>
      %70 = vector.shape_cast %69 : vector<1x8x128xf32> to vector<8x128xf32>
      %71 = vector.extract_strided_slice %70 {offsets = [7, 0], sizes = [1, 128], strides = [1, 1]} : vector<8x128xf32> to vector<1x128xf32>
      %c0_65 = arith.constant 0 : index
      %c0_66 = arith.constant 0 : index
      %72 = vector.load %arg8[%c0_65, %c0_66] : memref<10x128xf32, #tpu.memory_space<vmem>>, vector<1x128xf32>
      tpu.vector_store %arg8[%c0_65, %c0_66], %71 {strides = array<i32>} : memref<10x128xf32, #tpu.memory_space<vmem>>, vector<1x128xf32>,
    } else {
    }
    %c3_i32 = arith.constant 3 : i32
    %12 = arith.cmpi slt, %arg1, %c3_i32 : i32
    %13 = arith.extui %12 : i1 to i32
    %c0_i32_6 = arith.constant 0 : i32
    %14 = arith.cmpi ne, %13, %c0_i32_6 : i32
    scf.if %14 {
      %c8_i32_62 = arith.constant 8 : i32
      %67 = arith.addi %1, %c8_i32_62 : i32
      %c0_63 = arith.constant 0 : index
      %68 = arith.index_cast %67 : i32 to index
      %c0_64 = arith.constant 0 : index
      %69 = vector.load %arg2[%c0_63, %68, %c0_64] : memref<1x32x128xf32, #tpu.memory_space<vmem>>, vector<1x8x128xf32>
      %70 = vector.shape_cast %69 : vector<1x8x128xf32> to vector<8x128xf32>
      %71 = vector.extract_strided_slice %70 {offsets = [0, 0], sizes = [1, 128], strides = [1, 1]} : vector<8x128xf32> to vector<1x128xf32>
      %c9_65 = arith.constant 9 : index
      %c0_66 = arith.constant 0 : index
      %72 = vector.load %arg8[%c9_65, %c0_66] : memref<10x128xf32, #tpu.memory_space<vmem>>, vector<1x128xf32>
      tpu.vector_store %arg8[%c9_65, %c0_66], %71 {strides = array<i32>} : memref<10x128xf32, #tpu.memory_space<vmem>>, vector<1x128xf32>,
    } else {
    }
    %cst_7 = arith.constant 0.000000e+00 : f32
    %15 = vector.broadcast %cst_7 : f32 to vector<1x128xf32>
    %c0_8 = arith.constant 0 : index
    %c0_9 = arith.constant 0 : index
    %16 = vector.load %arg9[%c0_8, %c0_9] : memref<10x128xf32, #tpu.memory_space<vmem>>, vector<1x128xf32>
    tpu.vector_store %arg9[%c0_8, %c0_9], %15 {strides = array<i32>} : memref<10x128xf32, #tpu.memory_space<vmem>>, vector<1x128xf32>,
    %c9_10 = arith.constant 9 : index
    %c0_11 = arith.constant 0 : index
    %17 = vector.load %arg9[%c9_10, %c0_11] : memref<10x128xf32, #tpu.memory_space<vmem>>, vector<1x128xf32>
    tpu.vector_store %arg9[%c9_10, %c0_11], %15 {strides = array<i32>} : memref<10x128xf32, #tpu.memory_space<vmem>>, vector<1x128xf32>,
    %c0_12 = arith.constant 0 : index
    %18 = arith.index_cast %1 : i32 to index
    %c0_13 = arith.constant 0 : index
    %19 = vector.load %arg3[%c0_12, %18, %c0_13] : memref<1x32x128xf32, #tpu.memory_space<vmem>>, vector<1x8x128xf32>
    %20 = vector.shape_cast %19 : vector<1x8x128xf32> to vector<8x128xf32>
    %c1_14 = arith.constant 1 : index
    %c0_15 = arith.constant 0 : index
    %21 = vector.load %arg9[%c1_14, %c0_15] : memref<10x128xf32, #tpu.memory_space<vmem>>, vector<8x128xf32>
    tpu.vector_store %arg9[%c1_14, %c0_15], %20 {strides = array<i32>} : memref<10x128xf32, #tpu.memory_space<vmem>>, vector<8x128xf32>,
    %c0_i32_16 = arith.constant 0 : i32
    %22 = arith.cmpi sgt, %arg1, %c0_i32_16 : i32
    %23 = arith.extui %22 : i1 to i32
    %c0_i32_17 = arith.constant 0 : i32
    %24 = arith.cmpi ne, %23, %c0_i32_17 : i32
    scf.if %24 {
      %c8_i32_62 = arith.constant 8 : i32
      %67 = arith.subi %1, %c8_i32_62 : i32
      %c0_63 = arith.constant 0 : index
      %68 = arith.index_cast %67 : i32 to index
      %c0_64 = arith.constant 0 : index
      %69 = vector.load %arg3[%c0_63, %68, %c0_64] : memref<1x32x128xf32, #tpu.memory_space<vmem>>, vector<1x8x128xf32>
      %70 = vector.shape_cast %69 : vector<1x8x128xf32> to vector<8x128xf32>
      %71 = vector.extract_strided_slice %70 {offsets = [7, 0], sizes = [1, 128], strides = [1, 1]} : vector<8x128xf32> to vector<1x128xf32>
      %c0_65 = arith.constant 0 : index
      %c0_66 = arith.constant 0 : index
      %72 = vector.load %arg9[%c0_65, %c0_66] : memref<10x128xf32, #tpu.memory_space<vmem>>, vector<1x128xf32>
      tpu.vector_store %arg9[%c0_65, %c0_66], %71 {strides = array<i32>} : memref<10x128xf32, #tpu.memory_space<vmem>>, vector<1x128xf32>,
    } else {
    }
    %c3_i32_18 = arith.constant 3 : i32
    %25 = arith.cmpi slt, %arg1, %c3_i32_18 : i32
    %26 = arith.extui %25 : i1 to i32
    %c0_i32_19 = arith.constant 0 : i32
    %27 = arith.cmpi ne, %26, %c0_i32_19 : i32
    scf.if %27 {
      %c8_i32_62 = arith.constant 8 : i32
      %67 = arith.addi %1, %c8_i32_62 : i32
      %c0_63 = arith.constant 0 : index
      %68 = arith.index_cast %67 : i32 to index
      %c0_64 = arith.constant 0 : index
      %69 = vector.load %arg3[%c0_63, %68, %c0_64] : memref<1x32x128xf32, #tpu.memory_space<vmem>>, vector<1x8x128xf32>
      %70 = vector.shape_cast %69 : vector<1x8x128xf32> to vector<8x128xf32>
      %71 = vector.extract_strided_slice %70 {offsets = [0, 0], sizes = [1, 128], strides = [1, 1]} : vector<8x128xf32> to vector<1x128xf32>
      %c9_65 = arith.constant 9 : index
      %c0_66 = arith.constant 0 : index
      %72 = vector.load %arg9[%c9_65, %c0_66] : memref<10x128xf32, #tpu.memory_space<vmem>>, vector<1x128xf32>
      tpu.vector_store %arg9[%c9_65, %c0_66], %71 {strides = array<i32>} : memref<10x128xf32, #tpu.memory_space<vmem>>, vector<1x128xf32>,
    } else {
    }
    %cst_20 = arith.constant 0.000000e+00 : f32
    %28 = vector.broadcast %cst_20 : f32 to vector<8x256xf32>
    %c0_21 = arith.constant 0 : index
    %c0_22 = arith.constant 0 : index
    %29 = vector.load %arg8[%c0_21, %c0_22] : memref<10x128xf32, #tpu.memory_space<vmem>>, vector<8x128xf32>
    %c0_23 = arith.constant 0 : index
    %c0_24 = arith.constant 0 : index
    %c0_25 = arith.constant 0 : index
    %30 = vector.load %arg4[%c0_23, %c0_24, %c0_25] : memref<3x128x256xf32, #tpu.memory_space<vmem>>, vector<1x128x256xf32>
    %31 = vector.shape_cast %30 : vector<1x128x256xf32> to vector<128x256xf32>
    %cst_26 = arith.constant dense<0.000000e+00> : vector<8x256xf32>
    %32 = tpu.matmul %29, %31, %cst_26 {dimension_numbers = #tpu.dot_dimension_numbers<[1], [0], [0], [1], [0, 0, 1, 1], [], []>} : vector<8x128xf32>, vector<128x256xf32>, vector<8x256xf32> -> vector<8x256xf32>
    %33 = arith.addf %28, %32 : vector<8x256xf32>
    %c0_27 = arith.constant 0 : index
    %c0_28 = arith.constant 0 : index
    %34 = vector.load %arg9[%c0_27, %c0_28] : memref<10x128xf32, #tpu.memory_space<vmem>>, vector<8x128xf32>
    %c0_29 = arith.constant 0 : index
    %c0_30 = arith.constant 0 : index
    %c0_31 = arith.constant 0 : index
    %35 = vector.load %arg5[%c0_29, %c0_30, %c0_31] : memref<3x128x256xf32, #tpu.memory_space<vmem>>, vector<1x128x256xf32>
    %36 = vector.shape_cast %35 : vector<1x128x256xf32> to vector<128x256xf32>
    %cst_32 = arith.constant dense<0.000000e+00> : vector<8x256xf32>
    %37 = tpu.matmul %34, %36, %cst_32 {dimension_numbers = #tpu.dot_dimension_numbers<[1], [0], [0], [1], [0, 0, 1, 1], [], []>} : vector<8x128xf32>, vector<128x256xf32>, vector<8x256xf32> -> vector<8x256xf32>
    %38 = arith.addf %33, %37 : vector<8x256xf32>
    %c1_33 = arith.constant 1 : index
    %c0_34 = arith.constant 0 : index
    %39 = vector.load %arg8[%c1_33, %c0_34] : memref<10x128xf32, #tpu.memory_space<vmem>>, vector<8x128xf32>
    %c1_35 = arith.constant 1 : index
    %c0_36 = arith.constant 0 : index
    %c0_37 = arith.constant 0 : index
    %40 = vector.load %arg4[%c1_35, %c0_36, %c0_37] : memref<3x128x256xf32, #tpu.memory_space<vmem>>, vector<1x128x256xf32>
    %41 = vector.shape_cast %40 : vector<1x128x256xf32> to vector<128x256xf32>
    %cst_38 = arith.constant dense<0.000000e+00> : vector<8x256xf32>
    %42 = tpu.matmul %39, %41, %cst_38 {dimension_numbers = #tpu.dot_dimension_numbers<[1], [0], [0], [1], [0, 0, 1, 1], [], []>} : vector<8x128xf32>, vector<128x256xf32>, vector<8x256xf32> -> vector<8x256xf32>
    %43 = arith.addf %38, %42 : vector<8x256xf32>
    %c1_39 = arith.constant 1 : index
    %c0_40 = arith.constant 0 : index
    %44 = vector.load %arg9[%c1_39, %c0_40] : memref<10x128xf32, #tpu.memory_space<vmem>>, vector<8x128xf32>
    %c1_41 = arith.constant 1 : index
    %c0_42 = arith.constant 0 : index
    %c0_43 = arith.constant 0 : index
    %45 = vector.load %arg5[%c1_41, %c0_42, %c0_43] : memref<3x128x256xf32, #tpu.memory_space<vmem>>, vector<1x128x256xf32>
    %46 = vector.shape_cast %45 : vector<1x128x256xf32> to vector<128x256xf32>
    %cst_44 = arith.constant dense<0.000000e+00> : vector<8x256xf32>
    %47 = tpu.matmul %44, %46, %cst_44 {dimension_numbers = #tpu.dot_dimension_numbers<[1], [0], [0], [1], [0, 0, 1, 1], [], []>} : vector<8x128xf32>, vector<128x256xf32>, vector<8x256xf32> -> vector<8x256xf32>
    %48 = arith.addf %43, %47 : vector<8x256xf32>
    %c2 = arith.constant 2 : index
    %c0_45 = arith.constant 0 : index
    %49 = vector.load %arg8[%c2, %c0_45] : memref<10x128xf32, #tpu.memory_space<vmem>>, vector<8x128xf32>
    %c2_46 = arith.constant 2 : index
    %c0_47 = arith.constant 0 : index
    %c0_48 = arith.constant 0 : index
    %50 = vector.load %arg4[%c2_46, %c0_47, %c0_48] : memref<3x128x256xf32, #tpu.memory_space<vmem>>, vector<1x128x256xf32>
    %51 = vector.shape_cast %50 : vector<1x128x256xf32> to vector<128x256xf32>
    %cst_49 = arith.constant dense<0.000000e+00> : vector<8x256xf32>
    %52 = tpu.matmul %49, %51, %cst_49 {dimension_numbers = #tpu.dot_dimension_numbers<[1], [0], [0], [1], [0, 0, 1, 1], [], []>} : vector<8x128xf32>, vector<128x256xf32>, vector<8x256xf32> -> vector<8x256xf32>
    %53 = arith.addf %48, %52 : vector<8x256xf32>
    %c2_50 = arith.constant 2 : index
    %c0_51 = arith.constant 0 : index
    %54 = vector.load %arg9[%c2_50, %c0_51] : memref<10x128xf32, #tpu.memory_space<vmem>>, vector<8x128xf32>
    %c2_52 = arith.constant 2 : index
    %c0_53 = arith.constant 0 : index
    %c0_54 = arith.constant 0 : index
    %55 = vector.load %arg5[%c2_52, %c0_53, %c0_54] : memref<3x128x256xf32, #tpu.memory_space<vmem>>, vector<1x128x256xf32>
    %56 = vector.shape_cast %55 : vector<1x128x256xf32> to vector<128x256xf32>
    %cst_55 = arith.constant dense<0.000000e+00> : vector<8x256xf32>
    %57 = tpu.matmul %54, %56, %cst_55 {dimension_numbers = #tpu.dot_dimension_numbers<[1], [0], [0], [1], [0, 0, 1, 1], [], []>} : vector<8x128xf32>, vector<128x256xf32>, vector<8x256xf32> -> vector<8x256xf32>
    %58 = arith.addf %53, %57 : vector<8x256xf32>
    %c0_56 = arith.constant 0 : index
    %c0_57 = arith.constant 0 : index
    %59 = vector.load %arg6[%c0_56, %c0_57] : memref<1x256xf32, #tpu.memory_space<vmem>>, vector<1x256xf32>
    %60 = vector.broadcast %59 : vector<1x256xf32> to vector<8x256xf32>
    %61 = arith.addf %58, %60 : vector<8x256xf32>
    %cst_58 = arith.constant 0.000000e+00 : f32
    %62 = vector.broadcast %cst_58 : f32 to vector<8x256xf32>
    %63 = arith.maximumf %61, %62 : vector<8x256xf32>
    %c0_59 = arith.constant 0 : index
    %c0_60 = arith.constant 0 : index
    %c0_61 = arith.constant 0 : index
    %64 = vector.load %arg7[%c0_59, %c0_60, %c0_61] : memref<1x8x256xf32, #tpu.memory_space<vmem>>, vector<1x8x256xf32>
    %65 = vector.shape_cast %64 : vector<1x8x256xf32> to vector<8x256xf32>
    %66 = vector.shape_cast %63 : vector<8x256xf32> to vector<1x8x256xf32>
    tpu.vector_store %arg7[%c0_59, %c0_60, %c0_61], %66 {strides = array<i32>} : memref<1x8x256xf32, #tpu.memory_space<vmem>>, vector<1x8x256xf32>,
    return
  }
  func.func @transform_0(%arg0: i32, %arg1: i32) -> (i32, i32, i32) {
    %c0_i32 = arith.constant 0 : i32
    %c0_i32_0 = arith.constant 0 : i32
    %c0_i32_1 = arith.constant 0 : i32
    return %arg0, %c0_i32, %c0_i32_0 : i32, i32, i32
  }
  func.func @transform_1(%arg0: i32, %arg1: i32) -> (i32, i32, i32) {
    %c0_i32 = arith.constant 0 : i32
    %c0_i32_0 = arith.constant 0 : i32
    %c0_i32_1 = arith.constant 0 : i32
    return %arg0, %c0_i32, %c0_i32_0 : i32, i32, i32
  }
  func.func @transform_2(%arg0: i32, %arg1: i32) -> (i32, i32, i32) {
    %c0_i32 = arith.constant 0 : i32
    %c0_i32_0 = arith.constant 0 : i32
    %c0_i32_1 = arith.constant 0 : i32
    %c0_i32_2 = arith.constant 0 : i32
    return %c0_i32, %c0_i32_0, %c0_i32_1 : i32, i32, i32
  }
  func.func @transform_3(%arg0: i32, %arg1: i32) -> (i32, i32, i32) {
    %c0_i32 = arith.constant 0 : i32
    %c0_i32_0 = arith.constant 0 : i32
    %c0_i32_1 = arith.constant 0 : i32
    %c0_i32_2 = arith.constant 0 : i32
    return %c0_i32, %c0_i32_0, %c0_i32_1 : i32, i32, i32
  }
  func.func @transform_4(%arg0: i32, %arg1: i32) -> (i32, i32) {
    %c0_i32 = arith.constant 0 : i32
    %c0_i32_0 = arith.constant 0 : i32
    %c0_i32_1 = arith.constant 0 : i32
    return %c0_i32, %c0_i32_0 : i32, i32
  }
  func.func @transform_5(%arg0: i32, %arg1: i32) -> (i32, i32, i32) {
    %c0_i32 = arith.constant 0 : i32
    %c0_i32_0 = arith.constant 0 : i32
    return %arg0, %arg1, %c0_i32 : i32, i32, i32
  }
}

module attributes {stable_mosaic.version = 11 : i64} {
  func.func @kernel(%arg0: i32, %arg1: i32, %arg2: memref<1x32x256xf32, #tpu.memory_space<vmem>>, %arg3: memref<3x256x128xf32, #tpu.memory_space<vmem>>, %arg4: memref<1x128xf32, #tpu.memory_space<vmem>>, %arg5: memref<1x8x128xf32, #tpu.memory_space<vmem>>, %arg6: memref<10x256xf32, #tpu.memory_space<vmem>>) attributes {dimension_semantics = [#tpu.dimension_semantics<parallel>, #tpu.dimension_semantics<parallel>], iteration_bounds = array<i64: 2, 4>, scalar_prefetch = 0 : i64, scratch_operands = 1 : i64, tpu.core_type = #tpu.core_type<tc>, window_params = [{transform_indices = @transform_0, window_bounds = array<i64: 1, 32, 256>}, {pipeline_mode = #tpu.pipeline_mode<synchronous>, transform_indices = @transform_1, window_bounds = array<i64: 3, 256, 128>}, {pipeline_mode = #tpu.pipeline_mode<synchronous>, transform_indices = @transform_2, window_bounds = array<i64: 1, 128>}, {transform_indices = @transform_3, window_bounds = array<i64: 1, 8, 128>}]} {
    %c8_i32 = arith.constant 8 : i32
    %0 = arith.muli %arg1, %c8_i32 : i32
    %1 = tpu.assume_multiple %0, 8 : i32
    %cst = arith.constant 0.000000e+00 : f32
    %2 = vector.broadcast %cst : f32 to vector<1x256xf32>
    %c0 = arith.constant 0 : index
    %c0_0 = arith.constant 0 : index
    %3 = vector.load %arg6[%c0, %c0_0] : memref<10x256xf32, #tpu.memory_space<vmem>>, vector<1x256xf32>
    tpu.vector_store %arg6[%c0, %c0_0], %2 {strides = array<i32>} : memref<10x256xf32, #tpu.memory_space<vmem>>, vector<1x256xf32>,
    %c9 = arith.constant 9 : index
    %c0_1 = arith.constant 0 : index
    %4 = vector.load %arg6[%c9, %c0_1] : memref<10x256xf32, #tpu.memory_space<vmem>>, vector<1x256xf32>
    tpu.vector_store %arg6[%c9, %c0_1], %2 {strides = array<i32>} : memref<10x256xf32, #tpu.memory_space<vmem>>, vector<1x256xf32>,
    %c0_2 = arith.constant 0 : index
    %5 = arith.index_cast %1 : i32 to index
    %c0_3 = arith.constant 0 : index
    %6 = vector.load %arg2[%c0_2, %5, %c0_3] : memref<1x32x256xf32, #tpu.memory_space<vmem>>, vector<1x8x256xf32>
    %7 = vector.shape_cast %6 : vector<1x8x256xf32> to vector<8x256xf32>
    %c1 = arith.constant 1 : index
    %c0_4 = arith.constant 0 : index
    %8 = vector.load %arg6[%c1, %c0_4] : memref<10x256xf32, #tpu.memory_space<vmem>>, vector<8x256xf32>
    tpu.vector_store %arg6[%c1, %c0_4], %7 {strides = array<i32>} : memref<10x256xf32, #tpu.memory_space<vmem>>, vector<8x256xf32>,
    %c0_i32 = arith.constant 0 : i32
    %9 = arith.cmpi sgt, %arg1, %c0_i32 : i32
    %10 = arith.extui %9 : i1 to i32
    %c0_i32_5 = arith.constant 0 : i32
    %11 = arith.cmpi ne, %10, %c0_i32_5 : i32
    scf.if %11 {
      %c8_i32_31 = arith.constant 8 : i32
      %39 = arith.subi %1, %c8_i32_31 : i32
      %c0_32 = arith.constant 0 : index
      %40 = arith.index_cast %39 : i32 to index
      %c0_33 = arith.constant 0 : index
      %41 = vector.load %arg2[%c0_32, %40, %c0_33] : memref<1x32x256xf32, #tpu.memory_space<vmem>>, vector<1x8x256xf32>
      %42 = vector.shape_cast %41 : vector<1x8x256xf32> to vector<8x256xf32>
      %43 = vector.extract_strided_slice %42 {offsets = [7, 0], sizes = [1, 256], strides = [1, 1]} : vector<8x256xf32> to vector<1x256xf32>
      %c0_34 = arith.constant 0 : index
      %c0_35 = arith.constant 0 : index
      %44 = vector.load %arg6[%c0_34, %c0_35] : memref<10x256xf32, #tpu.memory_space<vmem>>, vector<1x256xf32>
      tpu.vector_store %arg6[%c0_34, %c0_35], %43 {strides = array<i32>} : memref<10x256xf32, #tpu.memory_space<vmem>>, vector<1x256xf32>,
    } else {
    }
    %c3_i32 = arith.constant 3 : i32
    %12 = arith.cmpi slt, %arg1, %c3_i32 : i32
    %13 = arith.extui %12 : i1 to i32
    %c0_i32_6 = arith.constant 0 : i32
    %14 = arith.cmpi ne, %13, %c0_i32_6 : i32
    scf.if %14 {
      %c8_i32_31 = arith.constant 8 : i32
      %39 = arith.addi %1, %c8_i32_31 : i32
      %c0_32 = arith.constant 0 : index
      %40 = arith.index_cast %39 : i32 to index
      %c0_33 = arith.constant 0 : index
      %41 = vector.load %arg2[%c0_32, %40, %c0_33] : memref<1x32x256xf32, #tpu.memory_space<vmem>>, vector<1x8x256xf32>
      %42 = vector.shape_cast %41 : vector<1x8x256xf32> to vector<8x256xf32>
      %43 = vector.extract_strided_slice %42 {offsets = [0, 0], sizes = [1, 256], strides = [1, 1]} : vector<8x256xf32> to vector<1x256xf32>
      %c9_34 = arith.constant 9 : index
      %c0_35 = arith.constant 0 : index
      %44 = vector.load %arg6[%c9_34, %c0_35] : memref<10x256xf32, #tpu.memory_space<vmem>>, vector<1x256xf32>
      tpu.vector_store %arg6[%c9_34, %c0_35], %43 {strides = array<i32>} : memref<10x256xf32, #tpu.memory_space<vmem>>, vector<1x256xf32>,
    } else {
    }
    %cst_7 = arith.constant 0.000000e+00 : f32
    %15 = vector.broadcast %cst_7 : f32 to vector<8x128xf32>
    %c0_8 = arith.constant 0 : index
    %c0_9 = arith.constant 0 : index
    %16 = vector.load %arg6[%c0_8, %c0_9] : memref<10x256xf32, #tpu.memory_space<vmem>>, vector<8x256xf32>
    %c0_10 = arith.constant 0 : index
    %c0_11 = arith.constant 0 : index
    %c0_12 = arith.constant 0 : index
    %17 = vector.load %arg3[%c0_10, %c0_11, %c0_12] : memref<3x256x128xf32, #tpu.memory_space<vmem>>, vector<1x256x128xf32>
    %18 = vector.shape_cast %17 : vector<1x256x128xf32> to vector<256x128xf32>
    %cst_13 = arith.constant dense<0.000000e+00> : vector<8x128xf32>
    %19 = tpu.matmul %16, %18, %cst_13 {dimension_numbers = #tpu.dot_dimension_numbers<[1], [0], [0], [1], [0, 0, 1, 1], [], []>} : vector<8x256xf32>, vector<256x128xf32>, vector<8x128xf32> -> vector<8x128xf32>
    %20 = arith.addf %15, %19 : vector<8x128xf32>
    %c1_14 = arith.constant 1 : index
    %c0_15 = arith.constant 0 : index
    %21 = vector.load %arg6[%c1_14, %c0_15] : memref<10x256xf32, #tpu.memory_space<vmem>>, vector<8x256xf32>
    %c1_16 = arith.constant 1 : index
    %c0_17 = arith.constant 0 : index
    %c0_18 = arith.constant 0 : index
    %22 = vector.load %arg3[%c1_16, %c0_17, %c0_18] : memref<3x256x128xf32, #tpu.memory_space<vmem>>, vector<1x256x128xf32>
    %23 = vector.shape_cast %22 : vector<1x256x128xf32> to vector<256x128xf32>
    %cst_19 = arith.constant dense<0.000000e+00> : vector<8x128xf32>
    %24 = tpu.matmul %21, %23, %cst_19 {dimension_numbers = #tpu.dot_dimension_numbers<[1], [0], [0], [1], [0, 0, 1, 1], [], []>} : vector<8x256xf32>, vector<256x128xf32>, vector<8x128xf32> -> vector<8x128xf32>
    %25 = arith.addf %20, %24 : vector<8x128xf32>
    %c2 = arith.constant 2 : index
    %c0_20 = arith.constant 0 : index
    %26 = vector.load %arg6[%c2, %c0_20] : memref<10x256xf32, #tpu.memory_space<vmem>>, vector<8x256xf32>
    %c2_21 = arith.constant 2 : index
    %c0_22 = arith.constant 0 : index
    %c0_23 = arith.constant 0 : index
    %27 = vector.load %arg3[%c2_21, %c0_22, %c0_23] : memref<3x256x128xf32, #tpu.memory_space<vmem>>, vector<1x256x128xf32>
    %28 = vector.shape_cast %27 : vector<1x256x128xf32> to vector<256x128xf32>
    %cst_24 = arith.constant dense<0.000000e+00> : vector<8x128xf32>
    %29 = tpu.matmul %26, %28, %cst_24 {dimension_numbers = #tpu.dot_dimension_numbers<[1], [0], [0], [1], [0, 0, 1, 1], [], []>} : vector<8x256xf32>, vector<256x128xf32>, vector<8x128xf32> -> vector<8x128xf32>
    %30 = arith.addf %25, %29 : vector<8x128xf32>
    %c0_25 = arith.constant 0 : index
    %c0_26 = arith.constant 0 : index
    %31 = vector.load %arg4[%c0_25, %c0_26] : memref<1x128xf32, #tpu.memory_space<vmem>>, vector<1x128xf32>
    %32 = vector.broadcast %31 : vector<1x128xf32> to vector<8x128xf32>
    %33 = arith.addf %30, %32 : vector<8x128xf32>
    %cst_27 = arith.constant 0.000000e+00 : f32
    %34 = vector.broadcast %cst_27 : f32 to vector<8x128xf32>
    %35 = arith.maximumf %33, %34 : vector<8x128xf32>
    %c0_28 = arith.constant 0 : index
    %c0_29 = arith.constant 0 : index
    %c0_30 = arith.constant 0 : index
    %36 = vector.load %arg5[%c0_28, %c0_29, %c0_30] : memref<1x8x128xf32, #tpu.memory_space<vmem>>, vector<1x8x128xf32>
    %37 = vector.shape_cast %36 : vector<1x8x128xf32> to vector<8x128xf32>
    %38 = vector.shape_cast %35 : vector<8x128xf32> to vector<1x8x128xf32>
    tpu.vector_store %arg5[%c0_28, %c0_29, %c0_30], %38 {strides = array<i32>} : memref<1x8x128xf32, #tpu.memory_space<vmem>>, vector<1x8x128xf32>,
    return
  }
  func.func @transform_0(%arg0: i32, %arg1: i32) -> (i32, i32, i32) {
    %c0_i32 = arith.constant 0 : i32
    %c0_i32_0 = arith.constant 0 : i32
    %c0_i32_1 = arith.constant 0 : i32
    return %arg0, %c0_i32, %c0_i32_0 : i32, i32, i32
  }
  func.func @transform_1(%arg0: i32, %arg1: i32) -> (i32, i32, i32) {
    %c0_i32 = arith.constant 0 : i32
    %c0_i32_0 = arith.constant 0 : i32
    %c0_i32_1 = arith.constant 0 : i32
    %c0_i32_2 = arith.constant 0 : i32
    return %c0_i32, %c0_i32_0, %c0_i32_1 : i32, i32, i32
  }
  func.func @transform_2(%arg0: i32, %arg1: i32) -> (i32, i32) {
    %c0_i32 = arith.constant 0 : i32
    %c0_i32_0 = arith.constant 0 : i32
    %c0_i32_1 = arith.constant 0 : i32
    return %c0_i32, %c0_i32_0 : i32, i32
  }
  func.func @transform_3(%arg0: i32, %arg1: i32) -> (i32, i32, i32) {
    %c0_i32 = arith.constant 0 : i32
    %c0_i32_0 = arith.constant 0 : i32
    return %arg0, %arg1, %c0_i32 : i32, i32, i32
  }
}

</mosaic_0001>

<llo_original>
// kernel: tile.23
$region0: #{tile.23}
  #allocation0 [shape = 's32[1]{0}', space=sflag, size = 0x4, scoped, tag = 'scoped memory for tile.23']
  %s0 = inlined_call_operand.vmem [shape: f32[4], index: 0, kind: input, shape index: {}]
  %s1 = inlined_call_operand.vmem [shape: f32[64,4], index: 1, kind: output, shape index: {}]
  // Predicated region
  $region2: #{tile.23} parent=0 // pred_check
    _
  $region3: #{tile.23} parent=0 // pred_check_branch
    %3 = sbr.rel (0) target = $region5
  $region4: #{tile.23} parent=0 // pred_region
    _
  $region5: #{tile.23} parent=0 // pred_fallthru
    _
  %v4 = vld [vmem:[%s0] ss:$0 sm:$0xff]
  %5 = vst [vmem:[%s1] sm:$0xff] %v4
  %s6 = scalar_lea.vmem %s1, 8
  %7 = vst [vmem:[%s6] sm:$0xff] %v4
  %s8 = scalar_lea.vmem %s1, 16
  %9 = vst [vmem:[%s8] sm:$0xff] %v4
  %s10 = scalar_lea.vmem %s1, 24
  %11 = vst [vmem:[%s10] sm:$0xff] %v4
  %s12 = scalar_lea.vmem %s1, 32
  %13 = vst [vmem:[%s12] sm:$0xff] %v4
  %s14 = scalar_lea.vmem %s1, 40
  %15 = vst [vmem:[%s14] sm:$0xff] %v4
  %s16 = scalar_lea.vmem %s1, 48
  %17 = vst [vmem:[%s16] sm:$0xff] %v4
  %s18 = scalar_lea.vmem %s1, 56
  %19 = vst [vmem:[%s18] sm:$0xff] %v4

// kernel: tile.24
$region0: #{tile.24}
  %s0 = inlined_call_operand.vmem [shape: f32[64,4], index: 0, kind: input, shape index: {}]
  %s1 = inlined_call_operand.vmem [shape: f32[1,256], index: 1, kind: output, shape index: {}]
  $region1: #{tile.24} parent=0
    #allocation0 [shape = 'u8[8192]{0}', space=vmem, size = 0x2000, scoped, tag = 'scoped mem for output reshape']
    %v2 = vld [vmem:[%s0] sm:$0x1]
    %s3 = scalar_lea.vmem %s0, 31
    %v4 = vld [vmem:[%s3] sm:$0x2]
    %vm5 = vcmask 1041409
    %v6 = vsel %vm5, %v4, %v2
    %vm7 = vcmask 31744
    %8 = vst.msk [vmem:[#allocation0] ss:$8 sm:$0x3] %vm7, %v6
    %s9 = scalar_lea.vmem %s0, 31
    %v10 = vld [vmem:[%s9] sm:$0x1]
    %s11 = scalar_lea.vmem %s0, 62
    %v12 = vld [vmem:[%s11] sm:$0x2]
    %vm13 = vcmask 1041409
    %v14 = vsel %vm13, %v12, %v10
    %15 = vrot.lane.b32.xlu0 %v14, 124
    %v16 = vpop.permute.xlu0 %15
    %vm17 = vcmask 1048544
    %18 = vst.msk [vmem:[#allocation0] ss:$8 sm:$0x3] %vm17, %v16
    %s19 = scalar_lea.vmem %s0, 30
    %v20 = vld [vmem:[%s19] sm:$0x1]
    %s21 = scalar_lea.vmem %s0, 61
    %v22 = vld [vmem:[%s21] sm:$0x2]
    %vm23 = vcmask 1041409
    %v24 = vsel %vm23, %v22, %v20
    %25 = vrot.lane.b32.xlu0 %v24, 120
    %v26 = vpop.permute.xlu0 %25
    %vm27 = vcmask 1015744
    %28 = vst.msk [vmem:[#allocation0] ss:$8 sm:$0x3] %vm27, %v26
    %s29 = scalar_lea.vmem %s0, 29
    %v30 = vld [vmem:[%s29] sm:$0x1]
    %s31 = scalar_lea.vmem %s0, 60
    %v32 = vld [vmem:[%s31] sm:$0x2]
    %vm33 = vcmask 1041409
    %v34 = vsel %vm33, %v32, %v30
    %35 = vrot.lane.b32.xlu0 %v34, 116
    %v36 = vpop.permute.xlu0 %35
    %vm37 = vcmask 982944
    %38 = vst.msk [vmem:[#allocation0] ss:$8 sm:$0x3] %vm37, %v36
    %s39 = scalar_lea.vmem %s0, 28
    %v40 = vld [vmem:[%s39] sm:$0x1]
    %s41 = scalar_lea.vmem %s0, 59
    %v42 = vld [vmem:[%s41] sm:$0x2]
    %vm43 = vcmask 1041409
    %v44 = vsel %vm43, %v42, %v40
    %45 = vrot.lane.b32.xlu0 %v44, 112
    %v46 = vpop.permute.xlu0 %45
    %vm47 = vcmask 950144
    %48 = vst.msk [vmem:[#allocation0] ss:$8 sm:$0x3] %vm47, %v46
    %s49 = scalar_lea.vmem %s0, 27
    %v50 = vld [vmem:[%s49] sm:$0x1]
    %s51 = scalar_lea.vmem %s0, 58
    %v52 = vld [vmem:[%s51] sm:$0x2]
    %vm53 = vcmask 1041409
    %v54 = vsel %vm53, %v52, %v50
    %55 = vrot.lane.b32.xlu0 %v54, 108
    %v56 = vpop.permute.xlu0 %55
    %vm57 = vcmask 917344
    %58 = vst.msk [vmem:[#allocation0] ss:$8 sm:$0x3] %vm57, %v56
    %s59 = scalar_lea.vmem %s0, 26
    %v60 = vld [vmem:[%s59] sm:$0x1]
    %s61 = scalar_lea.vmem %s0, 57
    %v62 = vld [vmem:[%s61] sm:$0x2]
    %vm63 = vcmask 1041409
    %v64 = vsel %vm63, %v62, %v60
    %65 = vrot.lane.b32.xlu0 %v64, 104
    %v66 = vpop.permute.xlu0 %65
    %vm67 = vcmask 884544
    %68 = vst.msk [vmem:[#allocation0] ss:$8 sm:$0x3] %vm67, %v66
    %s69 = scalar_lea.vmem %s0, 25
    %v70 = vld [vmem:[%s69] sm:$0x1]
    %s71 = scalar_lea.vmem %s0, 56
    %v72 = vld [vmem:[%s71] sm:$0x2]
    %vm73 = vcmask 1041409
    %v74 = vsel %vm73, %v72, %v70
    %75 = vrot.lane.b32.xlu0 %v74, 100
    %v76 = vpop.permute.xlu0 %75
    %vm77 = vcmask 851744
    %78 = vst.msk [vmem:[#allocation0] ss:$8 sm:$0x3] %vm77, %v76
    %s79 = scalar_lea.vmem %s0, 24
    %v80 = vld [vmem:[%s79] sm:$0x1]
    %s81 = scalar_lea.vmem %s0, 55
    %v82 = vld [vmem:[%s81] sm:$0x2]
    %vm83 = vcmask 1041409
    %v84 = vsel %vm83, %v82, %v80
    %85 = vrot.lane.b32.xlu0 %v84, 96
    %v86 = vpop.permute.xlu0 %85
    %vm87 = vcmask 818944
    %88 = vst.msk [vmem:[#allocation0] ss:$8 sm:$0x3] %vm87, %v86
    %s89 = scalar_lea.vmem %s0, 23
    %v90 = vld [vmem:[%s89] sm:$0x1]
    %s91 = scalar_lea.vmem %s0, 54
    %v92 = vld [vmem:[%s91] sm:$0x2]
    %vm93 = vcmask 1041409
    %v94 = vsel %vm93, %v92, %v90
    %95 = vrot.lane.b32.xlu0 %v94, 92
    %v96 = vpop.permute.xlu0 %95
    %vm97 = vcmask 786144
    %98 = vst.msk [vmem:[#allocation0] ss:$8 sm:$0x3] %vm97, %v96
    %s99 = scalar_lea.vmem %s0, 22
    %v100 = vld [vmem:[%s99] sm:$0x1]
    %s101 = scalar_lea.vmem %s0, 53
    %v102 = vld [vmem:[%s101] sm:$0x2]
    %vm103 = vcmask 1041409
    %v104 = vsel %vm103, %v102, %v100
    %105 = vrot.lane.b32.xlu0 %v104, 88
    %v106 = vpop.permute.xlu0 %105
    %vm107 = vcmask 753344
    %108 = vst.msk [vmem:[#allocation0] ss:$8 sm:$0x3] %vm107, %v106
    %s109 = scalar_lea.vmem %s0, 21
    %v110 = vld [vmem:[%s109] sm:$0x1]
    %s111 = scalar_lea.vmem %s0, 52
    %v112 = vld [vmem:[%s111] sm:$0x2]
    %vm113 = vcmask 1041409
    %v114 = vsel %vm113, %v112, %v110
    %115 = vrot.lane.b32.xlu0 %v114, 84
    %v116 = vpop.permute.xlu0 %115
    %vm117 = vcmask 720544
    %118 = vst.msk [vmem:[#allocation0] ss:$8 sm:$0x3] %vm117, %v116
    %s119 = scalar_lea.vmem %s0, 20
    %v120 = vld [vmem:[%s119] sm:$0x1]
    %s121 = scalar_lea.vmem %s0, 51
    %v122 = vld [vmem:[%s121] sm:$0x2]
    %vm123 = vcmask 1041409
    %v124 = vsel %vm123, %v122, %v120
    %125 = vrot.lane.b32.xlu0 %v124, 80
    %v126 = vpop.permute.xlu0 %125
    %vm127 = vcmask 687744
    %128 = vst.msk [vmem:[#allocation0] ss:$8 sm:$0x3] %vm127, %v126
    %s129 = scalar_lea.vmem %s0, 19
    %v130 = vld [vmem:[%s129] sm:$0x1]
    %s131 = scalar_lea.vmem %s0, 50
    %v132 = vld [vmem:[%s131] sm:$0x2]
    %vm133 = vcmask 1041409
    %v134 = vsel %vm133, %v132, %v130
    %135 = vrot.lane.b32.xlu0 %v134, 76
    %v136 = vpop.permute.xlu0 %135
    %vm137 = vcmask 654944
    %138 = vst.msk [vmem:[#allocation0] ss:$8 sm:$0x3] %vm137, %v136
    %s139 = scalar_lea.vmem %s0, 18
    %v140 = vld [vmem:[%s139] sm:$0x1]
    %s141 = scalar_lea.vmem %s0, 49
    %v142 = vld [vmem:[%s141] sm:$0x2]
    %vm143 = vcmask 1041409
    %v144 = vsel %vm143, %v142, %v140
    %145 = vrot.lane.b32.xlu0 %v144, 72
    %v146 = vpop.permute.xlu0 %145
    %vm147 = vcmask 622144
    %148 = vst.msk [vmem:[#allocation0] ss:$8 sm:$0x3] %vm147, %v146
    %s149 = scalar_lea.vmem %s0, 17
    %v150 = vld [vmem:[%s149] sm:$0x1]
    %s151 = scalar_lea.vmem %s0, 48
    %v152 = vld [vmem:[%s151] sm:$0x2]
    %vm153 = vcmask 1041409
    %v154 = vsel %vm153, %v152, %v150
    %155 = vrot.lane.b32.xlu0 %v154, 68
    %v156 = vpop.permute.xlu0 %155
    %vm157 = vcmask 589344
    %158 = vst.msk [vmem:[#allocation0] ss:$8 sm:$0x3] %vm157, %v156
    %s159 = scalar_lea.vmem %s0, 16
    %v160 = vld [vmem:[%s159] sm:$0x1]
    %s161 = scalar_lea.vmem %s0, 47
    %v162 = vld [vmem:[%s161] sm:$0x2]
    %vm163 = vcmask 1041409
    %v164 = vsel %vm163, %v162, %v160
    %165 = vrot.lane.b32.xlu0 %v164, 64
    %v166 = vpop.permute.xlu0 %165
    %vm167 = vcmask 556544
    %168 = vst.msk [vmem:[#allocation0] ss:$8 sm:$0x3] %vm167, %v166
    %s169 = scalar_lea.vmem %s0, 15
    %v170 = vld [vmem:[%s169] sm:$0x1]
    %s171 = scalar_lea.vmem %s0, 46
    %v172 = vld [vmem:[%s171] sm:$0x2]
    %vm173 = vcmask 1041409
    %v174 = vsel %vm173, %v172, %v170
    %175 = vrot.lane.b32.xlu0 %v174, 60
    %v176 = vpop.permute.xlu0 %175
    %vm177 = vcmask 523744
    %178 = vst.msk [vmem:[#allocation0] ss:$8 sm:$0x3] %vm177, %v176
    %s179 = scalar_lea.vmem %s0, 14
    %v180 = vld [vmem:[%s179] sm:$0x1]
    %s181 = scalar_lea.vmem %s0, 45
    %v182 = vld [vmem:[%s181] sm:$0x2]
    %vm183 = vcmask 1041409
    %v184 = vsel %vm183, %v182, %v180
    %185 = vrot.lane.b32.xlu0 %v184, 56
    %v186 = vpop.permute.xlu0 %185
    %vm187 = vcmask 490944
    %188 = vst.msk [vmem:[#allocation0] ss:$8 sm:$0x3] %vm187, %v186
    %s189 = scalar_lea.vmem %s0, 13
    %v190 = vld [vmem:[%s189] sm:$0x1]
    %s191 = scalar_lea.vmem %s0, 44
    %v192 = vld [vmem:[%s191] sm:$0x2]
    %vm193 = vcmask 1041409
    %v194 = vsel %vm193, %v192, %v190
    %195 = vrot.lane.b32.xlu0 %v194, 52
    %v196 = vpop.permute.xlu0 %195
    %vm197 = vcmask 458144
    %198 = vst.msk [vmem:[#allocation0] ss:$8 sm:$0x3] %vm197, %v196
    %s199 = scalar_lea.vmem %s0, 12
    %v200 = vld [vmem:[%s199] sm:$0x1]
    %s201 = scalar_lea.vmem %s0, 43
    %v202 = vld [vmem:[%s201] sm:$0x2]
    %vm203 = vcmask 1041409
    %v204 = vsel %vm203, %v202, %v200
    %205 = vrot.lane.b32.xlu0 %v204, 48
    %v206 = vpop.permute.xlu0 %205
    %vm207 = vcmask 425344
    %208 = vst.msk [vmem:[#allocation0] ss:$8 sm:$0x3] %vm207, %v206
    %s209 = scalar_lea.vmem %s0, 11
    %v210 = vld [vmem:[%s209] sm:$0x1]
    %s211 = scalar_lea.vmem %s0, 42
    %v212 = vld [vmem:[%s211] sm:$0x2]
    %vm213 = vcmask 1041409
    %v214 = vsel %vm213, %v212, %v210
    %215 = vrot.lane.b32.xlu0 %v214, 44
    %v216 = vpop.permute.xlu0 %215
    %vm217 = vcmask 392544
    %218 = vst.msk [vmem:[#allocation0] ss:$8 sm:$0x3] %vm217, %v216
    %s219 = scalar_lea.vmem %s0, 10
    %v220 = vld [vmem:[%s219] sm:$0x1]
    %s221 = scalar_lea.vmem %s0, 41
    %v222 = vld [vmem:[%s221] sm:$0x2]
    %vm223 = vcmask 1041409
    %v224 = vsel %vm223, %v222, %v220
    %225 = vrot.lane.b32.xlu0 %v224, 40
    %v226 = vpop.permute.xlu0 %225
    %vm227 = vcmask 359744
    %228 = vst.msk [vmem:[#allocation0] ss:$8 sm:$0x3] %vm227, %v226
    %s229 = scalar_lea.vmem %s0, 9
    %v230 = vld [vmem:[%s229] sm:$0x1]
    %s231 = scalar_lea.vmem %s0, 40
    %v232 = vld [vmem:[%s231] sm:$0x2]
    %vm233 = vcmask 1041409
    %v234 = vsel %vm233, %v232, %v230
    %235 = vrot.lane.b32.xlu0 %v234, 36
    %v236 = vpop.permute.xlu0 %235
    %vm237 = vcmask 326944
    %238 = vst.msk [vmem:[#allocation0] ss:$8 sm:$0x3] %vm237, %v236
    %s239 = scalar_lea.vmem %s0, 8
    %v240 = vld [vmem:[%s239] sm:$0x1]
    %s241 = scalar_lea.vmem %s0, 39
    %v242 = vld [vmem:[%s241] sm:$0x2]
    %vm243 = vcmask 1041409
    %v244 = vsel %vm243, %v242, %v240
    %245 = vrot.lane.b32.xlu0 %v244, 32
    %v246 = vpop.permute.xlu0 %245
    %vm247 = vcmask 294144
    %248 = vst.msk [vmem:[#allocation0] ss:$8 sm:$0x3] %vm247, %v246
    %s249 = scalar_lea.vmem %s0, 7
    %v250 = vld [vmem:[%s249] sm:$0x1]
    %s251 = scalar_lea.vmem %s0, 38
    %v252 = vld [vmem:[%s251] sm:$0x2]
    %vm253 = vcmask 1041409
    %v254 = vsel %vm253, %v252, %v250
    %255 = vrot.lane.b32.xlu0 %v254, 28
    %v256 = vpop.permute.xlu0 %255
    %vm257 = vcmask 261344
    %258 = vst.msk [vmem:[#allocation0] ss:$8 sm:$0x3] %vm257, %v256
    %s259 = scalar_lea.vmem %s0, 6
    %v260 = vld [vmem:[%s259] sm:$0x1]
    %s261 = scalar_lea.vmem %s0, 37
    %v262 = vld [vmem:[%s261] sm:$0x2]
    %vm263 = vcmask 1041409
    %v264 = vsel %vm263, %v262, %v260
    %265 = vrot.lane.b32.xlu0 %v264, 24
    %v266 = vpop.permute.xlu0 %265
    %vm267 = vcmask 228544
    %268 = vst.msk [vmem:[#allocation0] ss:$8 sm:$0x3] %vm267, %v266
    %s269 = scalar_lea.vmem %s0, 5
    %v270 = vld [vmem:[%s269] sm:$0x1]
    %s271 = scalar_lea.vmem %s0, 36
    %v272 = vld [vmem:[%s271] sm:$0x2]
    %vm273 = vcmask 1041409
    %v274 = vsel %vm273, %v272, %v270
    %275 = vrot.lane.b32.xlu0 %v274, 20
    %v276 = vpop.permute.xlu0 %275
    %vm277 = vcmask 195744
    %278 = vst.msk [vmem:[#allocation0] ss:$8 sm:$0x3] %vm277, %v276
    %s279 = scalar_lea.vmem %s0, 4
    %v280 = vld [vmem:[%s279] sm:$0x1]
    %s281 = scalar_lea.vmem %s0, 35
    %v282 = vld [vmem:[%s281] sm:$0x2]
    %vm283 = vcmask 1041409
    %v284 = vsel %vm283, %v282, %v280
    %285 = vrot.lane.b32.xlu0 %v284, 16
    %v286 = vpop.permute.xlu0 %285
    %vm287 = vcmask 162944
    %288 = vst.msk [vmem:[#allocation0] ss:$8 sm:$0x3] %vm287, %v286
    %s289 = scalar_lea.vmem %s0, 3
    %v290 = vld [vmem:[%s289] sm:$0x1]
    %s291 = scalar_lea.vmem %s0, 34
    %v292 = vld [vmem:[%s291] sm:$0x2]
    %vm293 = vcmask 1041409
    %v294 = vsel %vm293, %v292, %v290
    %295 = vrot.lane.b32.xlu0 %v294, 12
    %v296 = vpop.permute.xlu0 %295
    %vm297 = vcmask 130144
    %298 = vst.msk [vmem:[#allocation0] ss:$8 sm:$0x3] %vm297, %v296
    %s299 = scalar_lea.vmem %s0, 2
    %v300 = vld [vmem:[%s299] sm:$0x1]
    %s301 = scalar_lea.vmem %s0, 33
    %v302 = vld [vmem:[%s301] sm:$0x2]
    %vm303 = vcmask 1041409
    %v304 = vsel %vm303, %v302, %v300
    %305 = vrot.lane.b32.xlu0 %v304, 8
    %v306 = vpop.permute.xlu0 %305
    %vm307 = vcmask 97344
    %308 = vst.msk [vmem:[#allocation0] ss:$8 sm:$0x3] %vm307, %v306
    %s309 = scalar_lea.vmem %s0, 1
    %v310 = vld [vmem:[%s309] sm:$0x1]
    %s311 = scalar_lea.vmem %s0, 32
    %v312 = vld [vmem:[%s311] sm:$0x2]
    %vm313 = vcmask 1041409
    %v314 = vsel %vm313, %v312, %v310
    %315 = vrot.lane.b32.xlu0 %v314, 4
    %v316 = vpop.permute.xlu0 %315
    %vm317 = vcmask 64544
    %318 = vst.msk [vmem:[#allocation0] ss:$8 sm:$0x3] %vm317, %v316
    %s320 = sshll.u32 1, 1
    %s321 = ssub.s32 %s320, 1
    %v323 = vld [vmem:[#allocation0] sm:%s321]
    %s324 = sshll.u32 1, 1
    %s325 = ssub.s32 %s324, 1
    %326 = vst [vmem:[%s1] sm:%s325] %v323
    %s327 = scalar_lea.vmem [#allocation0], 8
    %v328 = vld [vmem:[%s327] sm:%s321]
    %s329 = sshll.u32 1, 1
    %s330 = ssub.s32 %s329, 1
    %s331 = scalar_lea.vmem %s1, 1
    %332 = vst [vmem:[%s331] sm:%s330] %v328

// kernel: upsample_forward.3
$region0: #{upsample_forward.3}
  #allocation0 [shape = 'u32[]', space=smem, size = 0x4, offset = 0x4, fixed_abs, tag = 'smem constant byte address 0x4 - core index']
  #allocation1 [shape = 'u32[144,128]{1,0:T(1,128)}', space=vmem, size = 0x12000, scoped, tag = 'internal scratch']
  %s0 = inlined_call_operand.vmem [shape: f32[2,16,128], index: 0, kind: input, shape index: {}]
  %s1 = inlined_call_operand.vmem [shape: f32[128,256], index: 1, kind: input, shape index: {}]
  %s2 = inlined_call_operand.vmem [shape: f32[1,256], index: 2, kind: input, shape index: {}]
  %s3 = inlined_call_operand.vmem [shape: f32[1,256], index: 3, kind: input, shape index: {}]
  %s4 = inlined_call_operand.vmem [shape: f32[2,16,256], index: 4, kind: output, shape index: {}]
  %s5 = sld [smem:[#allocation0]]
  $region49: #{upsample_forward.3} parent=0
    _
  %s7 = ssub.s32 1, %s5
  %s8 = scalar_select 0, %s7, %s5
  loop: start=0, step=1, limit=6
  $region2: #{upsample_forward.3} parent=0 // loop_pre_header
    _
  $region3: #{upsample_forward.3} parent=0 // loop_header
    %s10 = sphi 0, %s14
    %p11 = scmp.ge.s32.totalorder %s10, 6
    %s17 = sphi 0, %s29
    %s18 = sphi 0, %s25
    %s19 = sphi 0, %s17
    %s20 = sphi 0, %s18
    %s21 = sphi 0, %s19
    %s22 = sphi 0, %s20
    %s34 = sphi 0, %s36
    %s37 = sphi 0, %s34
    %s38 = sphi 0, %s37
    %s54 = sphi 0, %s38
    %s58 = sphi 0, %s58
    %s60 = sphi 0, %s58
    %s61 = sphi 0, %s60
    %s75 = sphi 0, %s61
    %s79 = sphi 0, %s79
    %s81 = sphi 0, %s79
    %s82 = sphi 0, %s81
    %s96 = sphi 0, %s82
    %s100 = sphi 0, %s100
    %s102 = sphi 0, %s100
    %s103 = sphi 0, %s102
    %s117 = sphi 0, %s103
    %s125 = sphi 0, %s127
    %s128 = sphi 0, %s125
    %s129 = sphi 0, %s128
    %s145 = sphi 0, %s129
  $region4: #{upsample_forward.3} parent=0 // loop_header_branch
    %13 = sbr.rel (%p11) target = $region8
  $region5: #{upsample_forward.3} parent=0 // loop_body
    %s15 = ssub.s32 %s10, 1
    %s16 = ssub.s32 %s10, 2
    %s23 = sadd.s32 1, %s18
    %p24 = scmp.ge.s32.totalorder %s23, 2
    %s25 = scalar_select %p24, 0, %s23
    %s26 = sadd.s32 1, %s17
    %s27 = scalar_select %p24, %s26, %s17
    %p28 = scmp.ge.s32.totalorder %s27, 2
    %s29 = scalar_select %p28, 0, %s27
    %s30 = ssub.s32 %s17, %s29
    %s31 = ssub.s32 %s18, %s25
    %s32 = sor.u32 %s30, %s31
    %p33 = scmp.eq.s32.totalorder %s32, 0
    %s35 = sadd.s32 %s34, 1
    %s36 = scalar_select %p33, %s34, %s35
    %p39 = pneg %p33
    %p40 = scmp.eq.s32.totalorder %s10, 3
    %p41 = por %p39, %p40
    %p42 = scmp.ne.s32.totalorder %s34, %s37
    %p43 = scmp.eq.s32.totalorder %s10, 0
    %p44 = por %p42, %p43
    %p45 = scmp.ne.s32.totalorder %s34, %s37
    %p46 = scmp.eq.s32.totalorder %s15, 3
    %p47 = por %p45, %p46
    %p48 = scmp.ne.s32.totalorder %s37, %s38
    %p49 = scmp.eq.s32.totalorder %s15, 0
    %p50 = por %p48, %p49
    %p51 = scmp.ne.s32.totalorder %s37, %s38
    %p52 = scmp.eq.s32.totalorder %s16, 3
    %p53 = por %p51, %p52
    %p55 = scmp.ne.s32.totalorder %s38, %s54
    %p56 = scmp.eq.s32.totalorder %s16, 0
    %p57 = por %p55, %p56
    %s59 = sadd.s32 %s58, 1
    %p62 = scmp.eq.s32.totalorder %s10, 3
    %p63 = scmp.ne.s32.totalorder %s58, %s60
    %p64 = scmp.eq.s32.totalorder %s10, 0
    %p65 = por %p63, %p64
    %p66 = scmp.ne.s32.totalorder %s58, %s60
    %p67 = scmp.eq.s32.totalorder %s15, 3
    %p68 = por %p66, %p67
    %p69 = scmp.ne.s32.totalorder %s60, %s61
    %p70 = scmp.eq.s32.totalorder %s15, 0
    %p71 = por %p69, %p70
    %p72 = scmp.ne.s32.totalorder %s60, %s61
    %p73 = scmp.eq.s32.totalorder %s16, 3
    %p74 = por %p72, %p73
    %p76 = scmp.ne.s32.totalorder %s61, %s75
    %p77 = scmp.eq.s32.totalorder %s16, 0
    %p78 = por %p76, %p77
    %s80 = sadd.s32 %s79, 1
    %p83 = scmp.eq.s32.totalorder %s10, 3
    %p84 = scmp.ne.s32.totalorder %s79, %s81
    %p85 = scmp.eq.s32.totalorder %s10, 0
    %p86 = por %p84, %p85
    %p87 = scmp.ne.s32.totalorder %s79, %s81
    %p88 = scmp.eq.s32.totalorder %s15, 3
    %p89 = por %p87, %p88
    %p90 = scmp.ne.s32.totalorder %s81, %s82
    %p91 = scmp.eq.s32.totalorder %s15, 0
    %p92 = por %p90, %p91
    %p93 = scmp.ne.s32.totalorder %s81, %s82
    %p94 = scmp.eq.s32.totalorder %s16, 3
    %p95 = por %p93, %p94
    %p97 = scmp.ne.s32.totalorder %s82, %s96
    %p98 = scmp.eq.s32.totalorder %s16, 0
    %p99 = por %p97, %p98
    %s101 = sadd.s32 %s100, 1
    %p104 = scmp.eq.s32.totalorder %s10, 3
    %p105 = scmp.ne.s32.totalorder %s100, %s102
    %p106 = scmp.eq.s32.totalorder %s10, 0
    %p107 = por %p105, %p106
    %p108 = scmp.ne.s32.totalorder %s100, %s102
    %p109 = scmp.eq.s32.totalorder %s15, 3
    %p110 = por %p108, %p109
    %p111 = scmp.ne.s32.totalorder %s102, %s103
    %p112 = scmp.eq.s32.totalorder %s15, 0
    %p113 = por %p111, %p112
    %p114 = scmp.ne.s32.totalorder %s102, %s103
    %p115 = scmp.eq.s32.totalorder %s16, 3
    %p116 = por %p114, %p115
    %p118 = scmp.ne.s32.totalorder %s103, %s117
    %p119 = scmp.eq.s32.totalorder %s16, 0
    %p120 = por %p118, %p119
    %s121 = ssub.s32 %s17, %s29
    %s122 = ssub.s32 %s18, %s25
    %s123 = sor.u32 %s121, %s122
    %p124 = scmp.eq.s32.totalorder %s123, 0
    %s126 = sadd.s32 %s125, 1
    %s127 = scalar_select %p124, %s125, %s126
    %p130 = pneg %p124
    %p131 = scmp.eq.s32.totalorder %s10, 3
    %p132 = por %p130, %p131
    %p133 = scmp.ne.s32.totalorder %s125, %s128
    %p134 = scmp.eq.s32.totalorder %s10, 0
    %p135 = por %p133, %p134
    %p136 = scmp.ne.s32.totalorder %s125, %s128
    %p137 = scmp.eq.s32.totalorder %s15, 3
    %p138 = por %p136, %p137
    %p139 = scmp.ne.s32.totalorder %s128, %s129
    %p140 = scmp.eq.s32.totalorder %s15, 0
    %p141 = por %p139, %p140
    %p142 = scmp.ne.s32.totalorder %s128, %s129
    %p143 = scmp.eq.s32.totalorder %s16, 3
    %p144 = por %p142, %p143
    %p146 = scmp.ne.s32.totalorder %s129, %s145
    %p147 = scmp.eq.s32.totalorder %s16, 0
    %p148 = por %p146, %p147
    %p149 = scmp.le.s32.totalorder 1, %s10
    %p150 = scmp.lt.s32.totalorder %s10, 5
    %p151 = pnand %p149, %p150
    %p152 = pneg %p151
    // Predicated region
    $region9: #{upsample_forward.3} parent=5 // pred_check
      _
    $region10: #{upsample_forward.3} parent=5 // pred_check_branch
      %154 = sbr.rel (%p151) target = $region12
    $region11: #{upsample_forward.3} parent=5 // pred_region
      %s155 = ssub.s32 %s10, 1
      // Predicated region
      $region13: #{upsample_forward.3} parent=11 // pred_check
        %p156 = pneg %p71
      $region14: #{upsample_forward.3} parent=11 // pred_check_branch
        %158 = sbr.rel (%p156) target = $region16
      $region15: #{upsample_forward.3} parent=11 // pred_region
        _
      $region16: #{upsample_forward.3} parent=11 // pred_fallthru
        _
      // Predicated region
      $region17: #{upsample_forward.3} parent=11 // pred_check
        %p159 = pneg %p92
      $region18: #{upsample_forward.3} parent=11 // pred_check_branch
        %161 = sbr.rel (%p159) target = $region20
      $region19: #{upsample_forward.3} parent=11 // pred_region
        _
      $region20: #{upsample_forward.3} parent=11 // pred_fallthru
        _
      // Predicated region
      $region21: #{upsample_forward.3} parent=11 // pred_check
        %p162 = pneg %p113
      $region22: #{upsample_forward.3} parent=11 // pred_check_branch
        %164 = sbr.rel (%p162) target = $region24
      $region23: #{upsample_forward.3} parent=11 // pred_region
        _
      $region24: #{upsample_forward.3} parent=11 // pred_fallthru
        _
    $region12: #{upsample_forward.3} parent=5 // pred_fallthru
      _
    %p165 = scmp.lt.s32.totalorder %s10, 4
    // Predicated region
    $region25: #{upsample_forward.3} parent=5 // pred_check
      %p166 = pneg %p165
    $region26: #{upsample_forward.3} parent=5 // pred_check_branch
      %168 = sbr.rel (%p166) target = $region28
    $region27: #{upsample_forward.3} parent=5 // pred_region
      // Predicated region
      $region29: #{upsample_forward.3} parent=27 // pred_check
        %p169 = pneg %p44
      $region30: #{upsample_forward.3} parent=27 // pred_check_branch
        %171 = sbr.rel (%p169) target = $region32
      $region31: #{upsample_forward.3} parent=27 // pred_region
        %p172 = scmp.lt.s32.totalorder %s17, 1
        %s173 = scalar_select %p172, %s17, 1
        %p174 = scmp.lt.s32.totalorder %s18, 1
        %s175 = scalar_select %p174, %s18, 1
        %s176 = smul.addr %s173, 2
        %s177 = sadd.s32 %s175, %s176
        %s178 = smul.addr %s177, 8
        %s179 = scalar_lea.vmem %s0, %s178
      $region32: #{upsample_forward.3} parent=27 // pred_fallthru
        _
    $region28: #{upsample_forward.3} parent=5 // pred_fallthru
      _
    %p180 = scmp.le.s32.totalorder 1, %s10
    %p181 = scmp.lt.s32.totalorder %s10, 5
    %p182 = pnand %p180, %p181
    %p183 = pneg %p182
    // Predicated region
    $region33: #{upsample_forward.3} parent=5 // pred_check
      _
    $region34: #{upsample_forward.3} parent=5 // pred_check_branch
      %185 = sbr.rel (%p182) target = $region36
    $region35: #{upsample_forward.3} parent=5 // pred_region
      %s186 = ssub.s32 %s10, 1
      %p187 = scmp.lt.s32.totalorder %s19, 1
      %s188 = scalar_select %p187, %s19, 1
      %p189 = scmp.lt.s32.totalorder %s20, 1
      %s190 = scalar_select %p189, %s20, 1
      %s191 = smul.addr %s188, 2
      %s192 = sadd.s32 %s190, %s191
      %s193 = smul.addr %s192, 8
      %s194 = scalar_lea.vmem %s0, %s193
      %p195 = pneg %p50
      %p196 = pneg %p47
      %p197 = pneg %p71
      %p198 = pneg %p68
      %p199 = pneg %p92
      %p200 = pneg %p89
      %p201 = pneg %p113
      %p202 = pneg %p110
      %p203 = pneg %p141
      %p204 = pneg %p138
      %p205 = scmp.lt.s32.totalorder %s19, 1
      %s206 = scalar_select %p205, %s19, 1
      %p207 = scmp.lt.s32.totalorder %s20, 1
      %s208 = scalar_select %p207, %s20, 1
      %s209 = smul.addr %s208, 2
      %s210 = smul.addr %s206, 4
      %s211 = sadd.s32 %s209, %s210
      %s212 = smul.addr %s211, 8
      %s213 = scalar_lea.vmem %s4, %s212
      %p214 = scmp.lt.s32.totalorder %s19, 1
      %s215 = scalar_select %p214, %s19, 1
      %p216 = scmp.lt.s32.totalorder %s20, 1
      %s217 = scalar_select %p216, %s20, 1
      %s218 = smul.addr %s215, 2
      %s219 = sadd.s32 %s217, %s218
      %s220 = smul.addr %s219, 8
      %s221 = scalar_lea.vmem %s0, %s220
      %p222 = scmp.lt.s32.totalorder %s19, 1
      %s223 = scalar_select %p222, %s19, 1
      %p224 = scmp.lt.s32.totalorder %s20, 1
      %s225 = scalar_select %p224, %s20, 1
      %s226 = smul.addr %s225, 2
      %s227 = smul.addr %s223, 4
      %s228 = sadd.s32 %s226, %s227
      %s229 = smul.addr %s228, 8
      %s230 = scalar_lea.vmem %s4, %s229
      %v231 = vld [vmem:[%s221] sm:$0xff]
      %v232 = vld [vmem:[%s1] sm:$0xff]
      %v233 = vld [vmem:[%s1 + $0x8] sm:$0xff]
      %v234 = vld [vmem:[%s1 + $0x10] sm:$0xff]
      %v235 = vld [vmem:[%s1 + $0x18] sm:$0xff]
      %v236 = vld [vmem:[%s1 + $0x20] sm:$0xff]
      %v237 = vld [vmem:[%s1 + $0x28] sm:$0xff]
      %v238 = vld [vmem:[%s1 + $0x30] sm:$0xff]
      %v239 = vld [vmem:[%s1 + $0x38] sm:$0xff]
      %v240 = vld [vmem:[%s1 + $0x40] sm:$0xff]
      %v241 = vld [vmem:[%s1 + $0x48] sm:$0xff]
      %v242 = vld [vmem:[%s1 + $0x50] sm:$0xff]
      %v243 = vld [vmem:[%s1 + $0x58] sm:$0xff]
      %v244 = vld [vmem:[%s1 + $0x60] sm:$0xff]
      %v245 = vld [vmem:[%s1 + $0x68] sm:$0xff]
      %v246 = vld [vmem:[%s1 + $0x70] sm:$0xff]
      %v247 = vld [vmem:[%s1 + $0x78] sm:$0xff]
      %v248 = vld [vmem:[%s1 + $0x80] sm:$0xff]
      %v249 = vld [vmem:[%s1 + $0x88] sm:$0xff]
      %v250 = vld [vmem:[%s1 + $0x90] sm:$0xff]
      %v251 = vld [vmem:[%s1 + $0x98] sm:$0xff]
      %v252 = vld [vmem:[%s1 + $0xa0] sm:$0xff]
      %v253 = vld [vmem:[%s1 + $0xa8] sm:$0xff]
      %v254 = vld [vmem:[%s1 + $0xb0] sm:$0xff]
      %v255 = vld [vmem:[%s1 + $0xb8] sm:$0xff]
      %v256 = vld [vmem:[%s1 + $0xc0] sm:$0xff]
      %v257 = vld [vmem:[%s1 + $0xc8] sm:$0xff]
      %v258 = vld [vmem:[%s1 + $0xd0] sm:$0xff]
      %v259 = vld [vmem:[%s1 + $0xd8] sm:$0xff]
      %v260 = vld [vmem:[%s1 + $0xe0] sm:$0xff]
      %v261 = vld [vmem:[%s1 + $0xe8] sm:$0xff]
      %v262 = vld [vmem:[%s1 + $0xf0] sm:$0xff]
      %v263 = vld [vmem:[%s1 + $0xf8] sm:$0xff]
      %264 = vmatprep.subr.mxu0 %v263
      %265 = vmatpush1.msra.mxu0 %v262
      %266 = vmatprep.subr.mxu0 %v261
      %267 = vmatpush1.msra.mxu0 %v260
      %268 = vmatprep.subr.mxu0 %v259
      %269 = vmatpush1.msra.mxu0 %v258
      %270 = vmatprep.subr.mxu0 %v257
      %271 = vmatpush1.msra.mxu0 %v256
      %272 = vmatprep.subr.mxu0 %v255
      %273 = vmatpush1.msra.mxu0 %v254
      %274 = vmatprep.subr.mxu0 %v253
      %275 = vmatpush1.msra.mxu0 %v252
      %276 = vmatprep.subr.mxu0 %v251
      %277 = vmatpush1.msra.mxu0 %v250
      %278 = vmatprep.subr.mxu0 %v249
      %279 = vmatpush1.msra.mxu0 %v248
      %280 = vmatprep.subr.mxu0 %v247
      %281 = vmatpush1.msra.mxu0 %v246
      %282 = vmatprep.subr.mxu0 %v245
      %283 = vmatpush1.msra.mxu0 %v244
      %284 = vmatprep.subr.mxu0 %v243
      %285 = vmatpush1.msra.mxu0 %v242
      %286 = vmatprep.subr.mxu0 %v241
      %287 = vmatpush1.msra.mxu0 %v240
      %288 = vmatprep.subr.mxu0 %v239
      %289 = vmatpush1.msra.mxu0 %v238
      %290 = vmatprep.subr.mxu0 %v237
      %291 = vmatpush1.msra.mxu0 %v236
      %292 = vmatprep.subr.mxu0 %v235
      %293 = vmatpush1.msra.mxu0 %v234
      %294 = vmatprep.subr.mxu0 %v233
      %295 = vmatpush1.msra.mxu0 %v232
      %296 = vmatprep.subr.mxu0 0.0
      %297 = vmatpush2.msra.mxu0 0.0
      %298 = vmatprep.subr.mxu0 0.0
      %299 = vmatpush2.msra.mxu0 0.0
      %300 = vmatprep.subr.mxu0 0.0
      %301 = vmatpush2.msra.mxu0 0.0
      %302 = vmatprep.subr.mxu0 0.0
      %303 = vmatpush2.msra.mxu0 0.0
      %304 = vmatprep.subr.mxu0 0.0
      %305 = vmatpush2.msra.mxu0 0.0
      %306 = vmatprep.subr.mxu0 0.0
      %307 = vmatpush2.msra.mxu0 0.0
      %308 = vmatprep.subr.mxu0 0.0
      %309 = vmatpush2.msra.mxu0 0.0
      %310 = vmatprep.subr.mxu0 0.0
      %311 = vmatpush2.msra.mxu0 0.0
      %312 = vmatprep.subr.mxu0 0.0
      %313 = vmatpush2.msra.mxu0 0.0
      %314 = vmatprep.subr.mxu0 0.0
      %315 = vmatpush2.msra.mxu0 0.0
      %316 = vmatprep.subr.mxu0 0.0
      %317 = vmatpush2.msra.mxu0 0.0
      %318 = vmatprep.subr.mxu0 0.0
      %319 = vmatpush2.msra.mxu0 0.0
      %320 = vmatprep.subr.mxu0 0.0
      %321 = vmatpush2.msra.mxu0 0.0
      %322 = vmatprep.subr.mxu0 0.0
      %323 = vmatpush2.msra.mxu0 0.0
      %324 = vmatprep.subr.mxu0 0.0
      %325 = vmatpush2.msra.mxu0 0.0
      %326 = vmatprep.subr.mxu0 0.0
      %327 = vmatpush2.msra.mxu0 0.0
      %328 = vmatprep.mubr.f32.mxu0 0.0
      %329 = vmatmul.mubr.f32.gmra.mxu0 %v231
      %v330 = vpop.f32.mrf.mxu0
      %v331 = vadd.f32 0.0, %v330
      %v332 = vpop.f32.mrf.mxu0
      %v333 = vadd.f32 0.0, %v332
      %334 = vdwg.mxu0
      %v335 = vld [vmem:[%s2] sm:$0x3]
      %v337 = vlaneseq
      %v338 = vshrl.u32 %v337, 7
      %v339 = vsub.s32 0, %v338
      %v340 = vrot.slane %v335, %v339
      %v341 = vlaneseq
      %v342 = vshrl.u32 %v341, 7
      %v343 = vsub.s32 1, %v342
      %v344 = vrot.slane %v335, %v343
      %v347 = vmul.f32 %v331, %v340
      %v348 = vmul.f32 %v333, %v344
      %v349 = vld [vmem:[%s3] sm:$0x3]
      %v351 = vlaneseq
      %v352 = vshrl.u32 %v351, 7
      %v353 = vsub.s32 0, %v352
      %v354 = vrot.slane %v349, %v353
      %v355 = vlaneseq
      %v356 = vshrl.u32 %v355, 7
      %v357 = vsub.s32 1, %v356
      %v358 = vrot.slane %v349, %v357
      %v361 = vadd.f32 %v347, %v354
      %v362 = vadd.f32 %v348, %v358
      %v363 = vmax.f32 %v361, 0.0
      %v364 = vmax.f32 %v362, 0.0
      %365 = vst [vmem:[%s230] sm:$0xff] %v363
      %366 = vst [vmem:[%s230 + $0x8] sm:$0xff] %v364
      %p367 = scmp.lt.s32.totalorder %s19, 1
      %s368 = scalar_select %p367, %s19, 1
      %p369 = scmp.lt.s32.totalorder %s20, 1
      %s370 = scalar_select %p369, %s20, 1
      %s371 = smul.addr %s370, 2
      %s372 = smul.addr %s368, 4
      %s373 = sadd.s32 %s371, %s372
      %s374 = smul.addr %s373, 8
      %s375 = scalar_lea.vmem %s4, %s374
      // Predicated region
      $region37: #{upsample_forward.3} parent=35 // pred_check
        %p376 = pneg %p138
      $region38: #{upsample_forward.3} parent=35 // pred_check_branch
        %378 = sbr.rel (%p376) target = $region40
      $region39: #{upsample_forward.3} parent=35 // pred_region
        _
      $region40: #{upsample_forward.3} parent=35 // pred_fallthru
        _
    $region36: #{upsample_forward.3} parent=5 // pred_fallthru
      _
    %p379 = scmp.le.s32.totalorder 2, %s10
    // Predicated region
    $region41: #{upsample_forward.3} parent=5 // pred_check
      %p380 = pneg %p379
    $region42: #{upsample_forward.3} parent=5 // pred_check_branch
      %382 = sbr.rel (%p380) target = $region44
    $region43: #{upsample_forward.3} parent=5 // pred_region
      %s383 = ssub.s32 %s10, 2
      // Predicated region
      $region45: #{upsample_forward.3} parent=43 // pred_check
        %p384 = pneg %p144
      $region46: #{upsample_forward.3} parent=43 // pred_check_branch
        %386 = sbr.rel (%p384) target = $region48
      $region47: #{upsample_forward.3} parent=43 // pred_region
        %p387 = scmp.lt.s32.totalorder %s21, 1
        %s388 = scalar_select %p387, %s21, 1
        %p389 = scmp.lt.s32.totalorder %s22, 1
        %s390 = scalar_select %p389, %s22, 1
        %s391 = smul.addr %s390, 2
        %s392 = smul.addr %s388, 4
        %s393 = sadd.s32 %s391, %s392
        %s394 = smul.addr %s393, 8
        %s395 = scalar_lea.vmem %s4, %s394
      $region48: #{upsample_forward.3} parent=43 // pred_fallthru
        _
    $region44: #{upsample_forward.3} parent=5 // pred_fallthru
      _
  $region6: #{upsample_forward.3} parent=0 // loop_footer
    %s14 = sadd.s32 1, %s10
  $region7: #{upsample_forward.3} parent=0 // loop_footer_branch
    %9 = sbr.rel target = $region3
  $region8: #{upsample_forward.3} parent=0 // loop_exit
    _

// kernel: tile.33
$region0: #{tile.33}
  #allocation0 [shape = 's32[1]{0}', space=sflag, size = 0x4, scoped, tag = 'scoped memory for tile.33']
  %s0 = inlined_call_operand.vmem [shape: f32[8], index: 0, kind: input, shape index: {}]
  %s1 = inlined_call_operand.vmem [shape: f32[32,8], index: 1, kind: output, shape index: {}]
  // Predicated region
  $region2: #{tile.33} parent=0 // pred_check
    _
  $region3: #{tile.33} parent=0 // pred_check_branch
    %3 = sbr.rel (0) target = $region5
  $region4: #{tile.33} parent=0 // pred_region
    _
  $region5: #{tile.33} parent=0 // pred_fallthru
    _
  %v4 = vld [vmem:[%s0] ss:$0 sm:$0xff]
  %5 = vst [vmem:[%s1] sm:$0xff] %v4
  %s6 = scalar_lea.vmem %s1, 8
  %7 = vst [vmem:[%s6] sm:$0xff] %v4
  %s8 = scalar_lea.vmem %s1, 16
  %9 = vst [vmem:[%s8] sm:$0xff] %v4
  %s10 = scalar_lea.vmem %s1, 24
  %11 = vst [vmem:[%s10] sm:$0xff] %v4

// kernel: tile.34
$region0: #{tile.34}
  %s0 = inlined_call_operand.vmem [shape: f32[32,8], index: 0, kind: input, shape index: {}]
  %s1 = inlined_call_operand.vmem [shape: f32[1,256], index: 1, kind: output, shape index: {}]
  $region1: #{tile.34} parent=0
    #allocation0 [shape = 'u8[8192]{0}', space=vmem, size = 0x2000, scoped, tag = 'scoped mem for output reshape']
    %s2 = smov 3
    %v3 = vld [vmem:[%s0] ss:$16 sm:%s2]
    %vm4 = vcmask 64512
    %5 = vst.msk [vmem:[#allocation0] ss:$8 sm:$0x3] %vm4, %v3
    %s6 = scalar_lea.vmem %s0, 15
    %s7 = smov 3
    %v8 = vld [vmem:[%s6] ss:$16 sm:%s7]
    %9 = vrot.lane.b32.xlu0 %v8, 120
    %v10 = vpop.permute.xlu0 %9
    %vm11 = vcmask 1048512
    %12 = vst.msk [vmem:[#allocation0] ss:$8 sm:$0x3] %vm11, %v10
    %s13 = scalar_lea.vmem %s0, 14
    %s14 = smov 3
    %v15 = vld [vmem:[%s13] ss:$16 sm:%s14]
    %16 = vrot.lane.b32.xlu0 %v15, 112
    %v17 = vpop.permute.xlu0 %16
    %vm18 = vcmask 982912
    %19 = vst.msk [vmem:[#allocation0] ss:$8 sm:$0x3] %vm18, %v17
    %s20 = scalar_lea.vmem %s0, 13
    %s21 = smov 3
    %v22 = vld [vmem:[%s20] ss:$16 sm:%s21]
    %23 = vrot.lane.b32.xlu0 %v22, 104
    %v24 = vpop.permute.xlu0 %23
    %vm25 = vcmask 917312
    %26 = vst.msk [vmem:[#allocation0] ss:$8 sm:$0x3] %vm25, %v24
    %s27 = scalar_lea.vmem %s0, 12
    %s28 = smov 3
    %v29 = vld [vmem:[%s27] ss:$16 sm:%s28]
    %30 = vrot.lane.b32.xlu0 %v29, 96
    %v31 = vpop.permute.xlu0 %30
    %vm32 = vcmask 851712
    %33 = vst.msk [vmem:[#allocation0] ss:$8 sm:$0x3] %vm32, %v31
    %s34 = scalar_lea.vmem %s0, 11
    %s35 = smov 3
    %v36 = vld [vmem:[%s34] ss:$16 sm:%s35]
    %37 = vrot.lane.b32.xlu0 %v36, 88
    %v38 = vpop.permute.xlu0 %37
    %vm39 = vcmask 786112
    %40 = vst.msk [vmem:[#allocation0] ss:$8 sm:$0x3] %vm39, %v38
    %s41 = scalar_lea.vmem %s0, 10
    %s42 = smov 3
    %v43 = vld [vmem:[%s41] ss:$16 sm:%s42]
    %44 = vrot.lane.b32.xlu0 %v43, 80
    %v45 = vpop.permute.xlu0 %44
    %vm46 = vcmask 720512
    %47 = vst.msk [vmem:[#allocation0] ss:$8 sm:$0x3] %vm46, %v45
    %s48 = scalar_lea.vmem %s0, 9
    %s49 = smov 3
    %v50 = vld [vmem:[%s48] ss:$16 sm:%s49]
    %51 = vrot.lane.b32.xlu0 %v50, 72
    %v52 = vpop.permute.xlu0 %51
    %vm53 = vcmask 654912
    %54 = vst.msk [vmem:[#allocation0] ss:$8 sm:$0x3] %vm53, %v52
    %s55 = scalar_lea.vmem %s0, 8
    %s56 = smov 3
    %v57 = vld [vmem:[%s55] ss:$16 sm:%s56]
    %58 = vrot.lane.b32.xlu0 %v57, 64
    %v59 = vpop.permute.xlu0 %58
    %vm60 = vcmask 589312
    %61 = vst.msk [vmem:[#allocation0] ss:$8 sm:$0x3] %vm60, %v59
    %s62 = scalar_lea.vmem %s0, 7
    %s63 = smov 3
    %v64 = vld [vmem:[%s62] ss:$16 sm:%s63]
    %65 = vrot.lane.b32.xlu0 %v64, 56
    %v66 = vpop.permute.xlu0 %65
    %vm67 = vcmask 523712
    %68 = vst.msk [vmem:[#allocation0] ss:$8 sm:$0x3] %vm67, %v66
    %s69 = scalar_lea.vmem %s0, 6
    %s70 = smov 3
    %v71 = vld [vmem:[%s69] ss:$16 sm:%s70]
    %72 = vrot.lane.b32.xlu0 %v71, 48
    %v73 = vpop.permute.xlu0 %72
    %vm74 = vcmask 458112
    %75 = vst.msk [vmem:[#allocation0] ss:$8 sm:$0x3] %vm74, %v73
    %s76 = scalar_lea.vmem %s0, 5
    %s77 = smov 3
    %v78 = vld [vmem:[%s76] ss:$16 sm:%s77]
    %79 = vrot.lane.b32.xlu0 %v78, 40
    %v80 = vpop.permute.xlu0 %79
    %vm81 = vcmask 392512
    %82 = vst.msk [vmem:[#allocation0] ss:$8 sm:$0x3] %vm81, %v80
    %s83 = scalar_lea.vmem %s0, 4
    %s84 = smov 3
    %v85 = vld [vmem:[%s83] ss:$16 sm:%s84]
    %86 = vrot.lane.b32.xlu0 %v85, 32
    %v87 = vpop.permute.xlu0 %86
    %vm88 = vcmask 326912
    %89 = vst.msk [vmem:[#allocation0] ss:$8 sm:$0x3] %vm88, %v87
    %s90 = scalar_lea.vmem %s0, 3
    %s91 = smov 3
    %v92 = vld [vmem:[%s90] ss:$16 sm:%s91]
    %93 = vrot.lane.b32.xlu0 %v92, 24
    %v94 = vpop.permute.xlu0 %93
    %vm95 = vcmask 261312
    %96 = vst.msk [vmem:[#allocation0] ss:$8 sm:$0x3] %vm95, %v94
    %s97 = scalar_lea.vmem %s0, 2
    %s98 = smov 3
    %v99 = vld [vmem:[%s97] ss:$16 sm:%s98]
    %100 = vrot.lane.b32.xlu0 %v99, 16
    %v101 = vpop.permute.xlu0 %100
    %vm102 = vcmask 195712
    %103 = vst.msk [vmem:[#allocation0] ss:$8 sm:$0x3] %vm102, %v101
    %s104 = scalar_lea.vmem %s0, 1
    %s105 = smov 3
    %v106 = vld [vmem:[%s104] ss:$16 sm:%s105]
    %107 = vrot.lane.b32.xlu0 %v106, 8
    %v108 = vpop.permute.xlu0 %107
    %vm109 = vcmask 130112
    %110 = vst.msk [vmem:[#allocation0] ss:$8 sm:$0x3] %vm109, %v108
    %s112 = sshll.u32 1, 1
    %s113 = ssub.s32 %s112, 1
    %v115 = vld [vmem:[#allocation0] sm:%s113]
    %s116 = sshll.u32 1, 1
    %s117 = ssub.s32 %s116, 1
    %118 = vst [vmem:[%s1] sm:%s117] %v115
    %s119 = scalar_lea.vmem [#allocation0], 8
    %v120 = vld [vmem:[%s119] sm:%s113]
    %s121 = sshll.u32 1, 1
    %s122 = ssub.s32 %s121, 1
    %s123 = scalar_lea.vmem %s1, 1
    %124 = vst [vmem:[%s123] sm:%s122] %v120

// kernel: upsample_forward.4
$region0: #{upsample_forward.4}
  #allocation0 [shape = 'u32[]', space=smem, size = 0x4, offset = 0x4, fixed_abs, tag = 'smem constant byte address 0x4 - core index']
  #allocation1 [shape = 'u32[144,128]{1,0:T(1,128)}', space=vmem, size = 0x12000, scoped, tag = 'internal scratch']
  #allocation2 [shape = 'f32[10,128]{1,0:T(8,128)}', space=vmem, size = 0x2000, scoped, tag = 'scratch operand']
  #allocation3 [shape = 'f32[10,128]{1,0:T(8,128)}', space=vmem, size = 0x2000, scoped, tag = 'scratch operand']
  %s0 = inlined_call_operand.vmem [shape: f32[2,32,128], index: 0, kind: input, shape index: {}]
  %s1 = inlined_call_operand.vmem [shape: f32[2,32,128], index: 1, kind: input, shape index: {}]
  %s2 = inlined_call_operand.vmem [shape: f32[3,128,256], index: 2, kind: input, shape index: {}]
  %s3 = inlined_call_operand.vmem [shape: f32[3,128,256], index: 3, kind: input, shape index: {}]
  %s4 = inlined_call_operand.vmem [shape: f32[1,256], index: 4, kind: input, shape index: {}]
  %s5 = inlined_call_operand.vmem [shape: f32[2,32,256], index: 5, kind: output, shape index: {}]
  %s6 = sld [smem:[#allocation0]]
  $region69: #{upsample_forward.4} parent=0
    _
  %s8 = ssub.s32 1, %s6
  %s9 = scalar_select 0, %s8, %s6
  loop: start=0, step=1, limit=10
  $region2: #{upsample_forward.4} parent=0 // loop_pre_header
    _
  $region3: #{upsample_forward.4} parent=0 // loop_header
    %s11 = sphi 0, %s15
    %p12 = scmp.ge.s32.totalorder %s11, 10
    %s18 = sphi 0, %s30
    %s19 = sphi 0, %s26
    %s20 = sphi 0, %s18
    %s21 = sphi 0, %s19
    %s22 = sphi 0, %s20
    %s23 = sphi 0, %s21
    %s33 = sphi 0, %s35
    %s36 = sphi 0, %s33
    %s37 = sphi 0, %s36
    %s53 = sphi 0, %s37
    %s59 = sphi 0, %s61
    %s62 = sphi 0, %s59
    %s63 = sphi 0, %s62
    %s79 = sphi 0, %s63
    %s83 = sphi 0, %s83
    %s85 = sphi 0, %s83
    %s86 = sphi 0, %s85
    %s100 = sphi 0, %s86
    %s104 = sphi 0, %s104
    %s106 = sphi 0, %s104
    %s107 = sphi 0, %s106
    %s121 = sphi 0, %s107
    %s125 = sphi 0, %s125
    %s127 = sphi 0, %s125
    %s128 = sphi 0, %s127
    %s142 = sphi 0, %s128
    %s150 = sphi 0, %s152
    %s153 = sphi 0, %s150
    %s154 = sphi 0, %s153
    %s170 = sphi 0, %s154
  $region4: #{upsample_forward.4} parent=0 // loop_header_branch
    %14 = sbr.rel (%p12) target = $region8
  $region5: #{upsample_forward.4} parent=0 // loop_body
    %s16 = ssub.s32 %s11, 1
    %s17 = ssub.s32 %s11, 2
    %s24 = sadd.s32 1, %s19
    %p25 = scmp.ge.s32.totalorder %s24, 4
    %s26 = scalar_select %p25, 0, %s24
    %s27 = sadd.s32 1, %s18
    %s28 = scalar_select %p25, %s27, %s18
    %p29 = scmp.ge.s32.totalorder %s28, 2
    %s30 = scalar_select %p29, 0, %s28
    %s31 = ssub.s32 %s18, %s30
    %p32 = scmp.eq.s32.totalorder %s31, 0
    %s34 = sadd.s32 %s33, 1
    %s35 = scalar_select %p32, %s33, %s34
    %p38 = pneg %p32
    %p39 = scmp.eq.s32.totalorder %s11, 7
    %p40 = por %p38, %p39
    %p41 = scmp.ne.s32.totalorder %s33, %s36
    %p42 = scmp.eq.s32.totalorder %s11, 0
    %p43 = por %p41, %p42
    %p44 = scmp.ne.s32.totalorder %s33, %s36
    %p45 = scmp.eq.s32.totalorder %s16, 7
    %p46 = por %p44, %p45
    %p47 = scmp.ne.s32.totalorder %s36, %s37
    %p48 = scmp.eq.s32.totalorder %s16, 0
    %p49 = por %p47, %p48
    %p50 = scmp.ne.s32.totalorder %s36, %s37
    %p51 = scmp.eq.s32.totalorder %s17, 7
    %p52 = por %p50, %p51
    %p54 = scmp.ne.s32.totalorder %s37, %s53
    %p55 = scmp.eq.s32.totalorder %s17, 0
    %p56 = por %p54, %p55
    %s57 = ssub.s32 %s18, %s30
    %p58 = scmp.eq.s32.totalorder %s57, 0
    %s60 = sadd.s32 %s59, 1
    %s61 = scalar_select %p58, %s59, %s60
    %p64 = pneg %p58
    %p65 = scmp.eq.s32.totalorder %s11, 7
    %p66 = por %p64, %p65
    %p67 = scmp.ne.s32.totalorder %s59, %s62
    %p68 = scmp.eq.s32.totalorder %s11, 0
    %p69 = por %p67, %p68
    %p70 = scmp.ne.s32.totalorder %s59, %s62
    %p71 = scmp.eq.s32.totalorder %s16, 7
    %p72 = por %p70, %p71
    %p73 = scmp.ne.s32.totalorder %s62, %s63
    %p74 = scmp.eq.s32.totalorder %s16, 0
    %p75 = por %p73, %p74
    %p76 = scmp.ne.s32.totalorder %s62, %s63
    %p77 = scmp.eq.s32.totalorder %s17, 7
    %p78 = por %p76, %p77
    %p80 = scmp.ne.s32.totalorder %s63, %s79
    %p81 = scmp.eq.s32.totalorder %s17, 0
    %p82 = por %p80, %p81
    %s84 = sadd.s32 %s83, 1
    %p87 = scmp.eq.s32.totalorder %s11, 7
    %p88 = scmp.ne.s32.totalorder %s83, %s85
    %p89 = scmp.eq.s32.totalorder %s11, 0
    %p90 = por %p88, %p89
    %p91 = scmp.ne.s32.totalorder %s83, %s85
    %p92 = scmp.eq.s32.totalorder %s16, 7
    %p93 = por %p91, %p92
    %p94 = scmp.ne.s32.totalorder %s85, %s86
    %p95 = scmp.eq.s32.totalorder %s16, 0
    %p96 = por %p94, %p95
    %p97 = scmp.ne.s32.totalorder %s85, %s86
    %p98 = scmp.eq.s32.totalorder %s17, 7
    %p99 = por %p97, %p98
    %p101 = scmp.ne.s32.totalorder %s86, %s100
    %p102 = scmp.eq.s32.totalorder %s17, 0
    %p103 = por %p101, %p102
    %s105 = sadd.s32 %s104, 1
    %p108 = scmp.eq.s32.totalorder %s11, 7
    %p109 = scmp.ne.s32.totalorder %s104, %s106
    %p110 = scmp.eq.s32.totalorder %s11, 0
    %p111 = por %p109, %p110
    %p112 = scmp.ne.s32.totalorder %s104, %s106
    %p113 = scmp.eq.s32.totalorder %s16, 7
    %p114 = por %p112, %p113
    %p115 = scmp.ne.s32.totalorder %s106, %s107
    %p116 = scmp.eq.s32.totalorder %s16, 0
    %p117 = por %p115, %p116
    %p118 = scmp.ne.s32.totalorder %s106, %s107
    %p119 = scmp.eq.s32.totalorder %s17, 7
    %p120 = por %p118, %p119
    %p122 = scmp.ne.s32.totalorder %s107, %s121
    %p123 = scmp.eq.s32.totalorder %s17, 0
    %p124 = por %p122, %p123
    %s126 = sadd.s32 %s125, 1
    %p129 = scmp.eq.s32.totalorder %s11, 7
    %p130 = scmp.ne.s32.totalorder %s125, %s127
    %p131 = scmp.eq.s32.totalorder %s11, 0
    %p132 = por %p130, %p131
    %p133 = scmp.ne.s32.totalorder %s125, %s127
    %p134 = scmp.eq.s32.totalorder %s16, 7
    %p135 = por %p133, %p134
    %p136 = scmp.ne.s32.totalorder %s127, %s128
    %p137 = scmp.eq.s32.totalorder %s16, 0
    %p138 = por %p136, %p137
    %p139 = scmp.ne.s32.totalorder %s127, %s128
    %p140 = scmp.eq.s32.totalorder %s17, 7
    %p141 = por %p139, %p140
    %p143 = scmp.ne.s32.totalorder %s128, %s142
    %p144 = scmp.eq.s32.totalorder %s17, 0
    %p145 = por %p143, %p144
    %s146 = ssub.s32 %s18, %s30
    %s147 = ssub.s32 %s19, %s26
    %s148 = sor.u32 %s146, %s147
    %p149 = scmp.eq.s32.totalorder %s148, 0
    %s151 = sadd.s32 %s150, 1
    %s152 = scalar_select %p149, %s150, %s151
    %p155 = pneg %p149
    %p156 = scmp.eq.s32.totalorder %s11, 7
    %p157 = por %p155, %p156
    %p158 = scmp.ne.s32.totalorder %s150, %s153
    %p159 = scmp.eq.s32.totalorder %s11, 0
    %p160 = por %p158, %p159
    %p161 = scmp.ne.s32.totalorder %s150, %s153
    %p162 = scmp.eq.s32.totalorder %s16, 7
    %p163 = por %p161, %p162
    %p164 = scmp.ne.s32.totalorder %s153, %s154
    %p165 = scmp.eq.s32.totalorder %s16, 0
    %p166 = por %p164, %p165
    %p167 = scmp.ne.s32.totalorder %s153, %s154
    %p168 = scmp.eq.s32.totalorder %s17, 7
    %p169 = por %p167, %p168
    %p171 = scmp.ne.s32.totalorder %s154, %s170
    %p172 = scmp.eq.s32.totalorder %s17, 0
    %p173 = por %p171, %p172
    %p174 = scmp.le.s32.totalorder 1, %s11
    %p175 = scmp.lt.s32.totalorder %s11, 9
    %p176 = pnand %p174, %p175
    %p177 = pneg %p176
    // Predicated region
    $region9: #{upsample_forward.4} parent=5 // pred_check
      _
    $region10: #{upsample_forward.4} parent=5 // pred_check_branch
      %179 = sbr.rel (%p176) target = $region12
    $region11: #{upsample_forward.4} parent=5 // pred_region
      %s180 = ssub.s32 %s11, 1
      // Predicated region
      $region13: #{upsample_forward.4} parent=11 // pred_check
        %p181 = pneg %p96
      $region14: #{upsample_forward.4} parent=11 // pred_check_branch
        %183 = sbr.rel (%p181) target = $region16
      $region15: #{upsample_forward.4} parent=11 // pred_region
        _
      $region16: #{upsample_forward.4} parent=11 // pred_fallthru
        _
      // Predicated region
      $region17: #{upsample_forward.4} parent=11 // pred_check
        %p184 = pneg %p117
      $region18: #{upsample_forward.4} parent=11 // pred_check_branch
        %186 = sbr.rel (%p184) target = $region20
      $region19: #{upsample_forward.4} parent=11 // pred_region
        _
      $region20: #{upsample_forward.4} parent=11 // pred_fallthru
        _
      // Predicated region
      $region21: #{upsample_forward.4} parent=11 // pred_check
        %p187 = pneg %p138
      $region22: #{upsample_forward.4} parent=11 // pred_check_branch
        %189 = sbr.rel (%p187) target = $region24
      $region23: #{upsample_forward.4} parent=11 // pred_region
        _
      $region24: #{upsample_forward.4} parent=11 // pred_fallthru
        _
    $region12: #{upsample_forward.4} parent=5 // pred_fallthru
      _
    %p190 = scmp.lt.s32.totalorder %s11, 8
    // Predicated region
    $region25: #{upsample_forward.4} parent=5 // pred_check
      %p191 = pneg %p190
    $region26: #{upsample_forward.4} parent=5 // pred_check_branch
      %193 = sbr.rel (%p191) target = $region28
    $region27: #{upsample_forward.4} parent=5 // pred_region
      // Predicated region
      $region29: #{upsample_forward.4} parent=27 // pred_check
        %p194 = pneg %p43
      $region30: #{upsample_forward.4} parent=27 // pred_check_branch
        %196 = sbr.rel (%p194) target = $region32
      $region31: #{upsample_forward.4} parent=27 // pred_region
        %p197 = scmp.lt.s32.totalorder %s18, 1
        %s198 = scalar_select %p197, %s18, 1
        %s199 = smul.addr %s198, 4
        %s200 = smul.addr %s199, 8
        %s201 = scalar_lea.vmem %s0, %s200
      $region32: #{upsample_forward.4} parent=27 // pred_fallthru
        _
      // Predicated region
      $region33: #{upsample_forward.4} parent=27 // pred_check
        %p202 = pneg %p69
      $region34: #{upsample_forward.4} parent=27 // pred_check_branch
        %204 = sbr.rel (%p202) target = $region36
      $region35: #{upsample_forward.4} parent=27 // pred_region
        %p205 = scmp.lt.s32.totalorder %s18, 1
        %s206 = scalar_select %p205, %s18, 1
        %s207 = smul.addr %s206, 4
        %s208 = smul.addr %s207, 8
        %s209 = scalar_lea.vmem %s1, %s208
      $region36: #{upsample_forward.4} parent=27 // pred_fallthru
        _
    $region28: #{upsample_forward.4} parent=5 // pred_fallthru
      _
    %p210 = scmp.le.s32.totalorder 1, %s11
    %p211 = scmp.lt.s32.totalorder %s11, 9
    %p212 = pnand %p210, %p211
    %p213 = pneg %p212
    // Predicated region
    $region37: #{upsample_forward.4} parent=5 // pred_check
      _
    $region38: #{upsample_forward.4} parent=5 // pred_check_branch
      %215 = sbr.rel (%p212) target = $region40
    $region39: #{upsample_forward.4} parent=5 // pred_region
      %s216 = ssub.s32 %s11, 1
      %p217 = scmp.lt.s32.totalorder %s20, 1
      %s218 = scalar_select %p217, %s20, 1
      %s219 = smul.addr %s218, 4
      %s220 = smul.addr %s219, 8
      %s221 = scalar_lea.vmem %s0, %s220
      %p222 = pneg %p49
      %p223 = pneg %p46
      %p224 = scmp.lt.s32.totalorder %s20, 1
      %s225 = scalar_select %p224, %s20, 1
      %s226 = smul.addr %s225, 4
      %s227 = smul.addr %s226, 8
      %s228 = scalar_lea.vmem %s1, %s227
      %p229 = pneg %p75
      %p230 = pneg %p72
      %p231 = pneg %p96
      %p232 = pneg %p93
      %p233 = pneg %p117
      %p234 = pneg %p114
      %p235 = pneg %p138
      %p236 = pneg %p135
      %p237 = pneg %p166
      %p238 = pneg %p163
      %p239 = scmp.lt.s32.totalorder %s20, 1
      %s240 = scalar_select %p239, %s20, 1
      %p241 = scmp.lt.s32.totalorder %s21, 3
      %s242 = scalar_select %p241, %s21, 3
      %s243 = smul.addr %s242, 2
      %s244 = smul.addr %s240, 8
      %s245 = sadd.s32 %s243, %s244
      %s246 = smul.addr %s245, 8
      %s247 = scalar_lea.vmem %s5, %s246
      %p248 = scmp.lt.s32.totalorder %s20, 1
      %s249 = scalar_select %p248, %s20, 1
      %s250 = smul.addr %s249, 4
      %s251 = smul.addr %s250, 8
      %s252 = scalar_lea.vmem %s0, %s251
      %p253 = scmp.lt.s32.totalorder %s20, 1
      %s254 = scalar_select %p253, %s20, 1
      %s255 = smul.addr %s254, 4
      %s256 = smul.addr %s255, 8
      %s257 = scalar_lea.vmem %s1, %s256
      %p258 = scmp.lt.s32.totalorder %s20, 1
      %s259 = scalar_select %p258, %s20, 1
      %p260 = scmp.lt.s32.totalorder %s21, 3
      %s261 = scalar_select %p260, %s21, 3
      %s262 = smul.addr %s261, 2
      %s263 = smul.addr %s259, 8
      %s264 = sadd.s32 %s262, %s263
      %s265 = smul.addr %s264, 8
      %s266 = scalar_lea.vmem %s5, %s265
      %s267 = smul.u32 %s21, 8
      %268 = vst [vmem:[#allocation2] sm:$0x1] 0.0
      %269 = vst [vmem:[#allocation2 + $0x9] sm:$0x1] 0.0
      %s270 = scalar_lea.vmem %s252, %s267
      %v271 = vld [vmem:[%s270] sm:$0xff]
      %272 = vst [vmem:[#allocation2 + $0x1] sm:$0xff] %v271
      %p273 = scmp.gt.s32.totalorder %s21, 0
      // Predicated region
      $region41: #{upsample_forward.4} parent=39 // pred_check
        %p274 = pneg %p273
      $region42: #{upsample_forward.4} parent=39 // pred_check_branch
        %276 = sbr.rel (%p274) target = $region44
      $region43: #{upsample_forward.4} parent=39 // pred_region
        %s277 = ssub.s32 %s267, 8
        %s278 = scalar_lea.vmem %s252, %s277
        %v279 = vld [vmem:[%s278] sm:$0xff]
        %280 = vst [vmem:[#allocation2 - $0x7] sm:$0x80] %v279
      $region44: #{upsample_forward.4} parent=39 // pred_fallthru
        _
      %p281 = scmp.lt.s32.totalorder %s21, 3
      // Predicated region
      $region45: #{upsample_forward.4} parent=39 // pred_check
        %p282 = pneg %p281
      $region46: #{upsample_forward.4} parent=39 // pred_check_branch
        %284 = sbr.rel (%p282) target = $region48
      $region47: #{upsample_forward.4} parent=39 // pred_region
        %s285 = sadd.s32 %s267, 8
        %s286 = scalar_lea.vmem %s252, %s285
        %v287 = vld [vmem:[%s286] sm:$0xff]
        %288 = vst [vmem:[#allocation2 + $0x9] sm:$0x1] %v287
      $region48: #{upsample_forward.4} parent=39 // pred_fallthru
        _
      %289 = vst [vmem:[#allocation3] sm:$0x1] 0.0
      %290 = vst [vmem:[#allocation3 + $0x9] sm:$0x1] 0.0
      %s291 = scalar_lea.vmem %s257, %s267
      %v292 = vld [vmem:[%s291] sm:$0xff]
      %293 = vst [vmem:[#allocation3 + $0x1] sm:$0xff] %v292
      // Predicated region
      $region49: #{upsample_forward.4} parent=39 // pred_check
        %p294 = pneg %p273
      $region50: #{upsample_forward.4} parent=39 // pred_check_branch
        %296 = sbr.rel (%p294) target = $region52
      $region51: #{upsample_forward.4} parent=39 // pred_region
        %s297 = ssub.s32 %s267, 8
        %s298 = scalar_lea.vmem %s257, %s297
        %v299 = vld [vmem:[%s298] sm:$0xff]
        %300 = vst [vmem:[#allocation3 - $0x7] sm:$0x80] %v299
      $region52: #{upsample_forward.4} parent=39 // pred_fallthru
        _
      // Predicated region
      $region53: #{upsample_forward.4} parent=39 // pred_check
        %p301 = pneg %p281
      $region54: #{upsample_forward.4} parent=39 // pred_check_branch
        %303 = sbr.rel (%p301) target = $region56
      $region55: #{upsample_forward.4} parent=39 // pred_region
        %s304 = sadd.s32 %s267, 8
        %s305 = scalar_lea.vmem %s257, %s304
        %v306 = vld [vmem:[%s305] sm:$0xff]
        %307 = vst [vmem:[#allocation3 + $0x9] sm:$0x1] %v306
      $region56: #{upsample_forward.4} parent=39 // pred_fallthru
        _
      %v308 = vld [vmem:[#allocation2] sm:$0xff]
      %v309 = vld [vmem:[%s2] sm:$0xff]
      %v310 = vld [vmem:[%s2 + $0x8] sm:$0xff]
      %v311 = vld [vmem:[%s2 + $0x10] sm:$0xff]
      %v312 = vld [vmem:[%s2 + $0x18] sm:$0xff]
      %v313 = vld [vmem:[%s2 + $0x20] sm:$0xff]
      %v314 = vld [vmem:[%s2 + $0x28] sm:$0xff]
      %v315 = vld [vmem:[%s2 + $0x30] sm:$0xff]
      %v316 = vld [vmem:[%s2 + $0x38] sm:$0xff]
      %v317 = vld [vmem:[%s2 + $0x40] sm:$0xff]
      %v318 = vld [vmem:[%s2 + $0x48] sm:$0xff]
      %v319 = vld [vmem:[%s2 + $0x50] sm:$0xff]
      %v320 = vld [vmem:[%s2 + $0x58] sm:$0xff]
      %v321 = vld [vmem:[%s2 + $0x60] sm:$0xff]
      %v322 = vld [vmem:[%s2 + $0x68] sm:$0xff]
      %v323 = vld [vmem:[%s2 + $0x70] sm:$0xff]
      %v324 = vld [vmem:[%s2 + $0x78] sm:$0xff]
      %v325 = vld [vmem:[%s2 + $0x80] sm:$0xff]
      %v326 = vld [vmem:[%s2 + $0x88] sm:$0xff]
      %v327 = vld [vmem:[%s2 + $0x90] sm:$0xff]
      %v328 = vld [vmem:[%s2 + $0x98] sm:$0xff]
      %v329 = vld [vmem:[%s2 + $0xa0] sm:$0xff]
      %v330 = vld [vmem:[%s2 + $0xa8] sm:$0xff]
      %v331 = vld [vmem:[%s2 + $0xb0] sm:$0xff]
      %v332 = vld [vmem:[%s2 + $0xb8] sm:$0xff]
      %v333 = vld [vmem:[%s2 + $0xc0] sm:$0xff]
      %v334 = vld [vmem:[%s2 + $0xc8] sm:$0xff]
      %v335 = vld [vmem:[%s2 + $0xd0] sm:$0xff]
      %v336 = vld [vmem:[%s2 + $0xd8] sm:$0xff]
      %v337 = vld [vmem:[%s2 + $0xe0] sm:$0xff]
      %v338 = vld [vmem:[%s2 + $0xe8] sm:$0xff]
      %v339 = vld [vmem:[%s2 + $0xf0] sm:$0xff]
      %v340 = vld [vmem:[%s2 + $0xf8] sm:$0xff]
      %v341 = vld [vmem:[#allocation3] sm:$0xff]
      %v342 = vld [vmem:[%s3] sm:$0xff]
      %v343 = vld [vmem:[%s3 + $0x8] sm:$0xff]
      %v344 = vld [vmem:[%s3 + $0x10] sm:$0xff]
      %v345 = vld [vmem:[%s3 + $0x18] sm:$0xff]
      %v346 = vld [vmem:[%s3 + $0x20] sm:$0xff]
      %v347 = vld [vmem:[%s3 + $0x28] sm:$0xff]
      %v348 = vld [vmem:[%s3 + $0x30] sm:$0xff]
      %v349 = vld [vmem:[%s3 + $0x38] sm:$0xff]
      %v350 = vld [vmem:[%s3 + $0x40] sm:$0xff]
      %v351 = vld [vmem:[%s3 + $0x48] sm:$0xff]
      %v352 = vld [vmem:[%s3 + $0x50] sm:$0xff]
      %v353 = vld [vmem:[%s3 + $0x58] sm:$0xff]
      %v354 = vld [vmem:[%s3 + $0x60] sm:$0xff]
      %v355 = vld [vmem:[%s3 + $0x68] sm:$0xff]
      %v356 = vld [vmem:[%s3 + $0x70] sm:$0xff]
      %v357 = vld [vmem:[%s3 + $0x78] sm:$0xff]
      %v358 = vld [vmem:[%s3 + $0x80] sm:$0xff]
      %v359 = vld [vmem:[%s3 + $0x88] sm:$0xff]
      %v360 = vld [vmem:[%s3 + $0x90] sm:$0xff]
      %v361 = vld [vmem:[%s3 + $0x98] sm:$0xff]
      %v362 = vld [vmem:[%s3 + $0xa0] sm:$0xff]
      %v363 = vld [vmem:[%s3 + $0xa8] sm:$0xff]
      %v364 = vld [vmem:[%s3 + $0xb0] sm:$0xff]
      %v365 = vld [vmem:[%s3 + $0xb8] sm:$0xff]
      %v366 = vld [vmem:[%s3 + $0xc0] sm:$0xff]
      %v367 = vld [vmem:[%s3 + $0xc8] sm:$0xff]
      %v368 = vld [vmem:[%s3 + $0xd0] sm:$0xff]
      %v369 = vld [vmem:[%s3 + $0xd8] sm:$0xff]
      %v370 = vld [vmem:[%s3 + $0xe0] sm:$0xff]
      %v371 = vld [vmem:[%s3 + $0xe8] sm:$0xff]
      %v372 = vld [vmem:[%s3 + $0xf0] sm:$0xff]
      %v373 = vld [vmem:[%s3 + $0xf8] sm:$0xff]
      %374 = vmatprep.subr.mxu0 %v373
      %375 = vmatpush1.msra.mxu0 %v372
      %376 = vmatprep.subr.mxu0 %v371
      %377 = vmatpush1.msra.mxu0 %v370
      %378 = vmatprep.subr.mxu0 %v369
      %379 = vmatpush1.msra.mxu0 %v368
      %380 = vmatprep.subr.mxu0 %v367
      %381 = vmatpush1.msra.mxu0 %v366
      %382 = vmatprep.subr.mxu0 %v365
      %383 = vmatpush1.msra.mxu0 %v364
      %384 = vmatprep.subr.mxu0 %v363
      %385 = vmatpush1.msra.mxu0 %v362
      %386 = vmatprep.subr.mxu0 %v361
      %387 = vmatpush1.msra.mxu0 %v360
      %388 = vmatprep.subr.mxu0 %v359
      %389 = vmatpush1.msra.mxu0 %v358
      %390 = vmatprep.subr.mxu0 %v357
      %391 = vmatpush1.msra.mxu0 %v356
      %392 = vmatprep.subr.mxu0 %v355
      %393 = vmatpush1.msra.mxu0 %v354
      %394 = vmatprep.subr.mxu0 %v353
      %395 = vmatpush1.msra.mxu0 %v352
      %396 = vmatprep.subr.mxu0 %v351
      %397 = vmatpush1.msra.mxu0 %v350
      %398 = vmatprep.subr.mxu0 %v349
      %399 = vmatpush1.msra.mxu0 %v348
      %400 = vmatprep.subr.mxu0 %v347
      %401 = vmatpush1.msra.mxu0 %v346
      %402 = vmatprep.subr.mxu0 %v345
      %403 = vmatpush1.msra.mxu0 %v344
      %404 = vmatprep.subr.mxu0 %v343
      %405 = vmatpush1.msra.mxu0 %v342
      %406 = vmatprep.subr.mxu0 0.0
      %407 = vmatpush2.msra.mxu0 0.0
      %408 = vmatprep.subr.mxu0 0.0
      %409 = vmatpush2.msra.mxu0 0.0
      %410 = vmatprep.subr.mxu0 0.0
      %411 = vmatpush2.msra.mxu0 0.0
      %412 = vmatprep.subr.mxu0 0.0
      %413 = vmatpush2.msra.mxu0 0.0
      %414 = vmatprep.subr.mxu0 0.0
      %415 = vmatpush2.msra.mxu0 0.0
      %416 = vmatprep.subr.mxu0 0.0
      %417 = vmatpush2.msra.mxu0 0.0
      %418 = vmatprep.subr.mxu0 0.0
      %419 = vmatpush2.msra.mxu0 0.0
      %420 = vmatprep.subr.mxu0 0.0
      %421 = vmatpush2.msra.mxu0 0.0
      %422 = vmatprep.subr.mxu0 0.0
      %423 = vmatpush2.msra.mxu0 0.0
      %424 = vmatprep.subr.mxu0 0.0
      %425 = vmatpush2.msra.mxu0 0.0
      %426 = vmatprep.subr.mxu0 0.0
      %427 = vmatpush2.msra.mxu0 0.0
      %428 = vmatprep.subr.mxu0 0.0
      %429 = vmatpush2.msra.mxu0 0.0
      %430 = vmatprep.subr.mxu0 0.0
      %431 = vmatpush2.msra.mxu0 0.0
      %432 = vmatprep.subr.mxu0 0.0
      %433 = vmatpush2.msra.mxu0 0.0
      %434 = vmatprep.subr.mxu0 0.0
      %435 = vmatpush2.msra.mxu0 0.0
      %436 = vmatprep.subr.mxu0 0.0
      %437 = vmatpush2.msra.mxu0 0.0
      %438 = vmatprep.mubr.f32.mxu0 0.0
      %439 = vmatmul.mubr.f32.gmra.mxu0 %v341
      %v440 = vpop.f32.mrf.mxu0
      %v441 = vadd.f32 0.0, %v440
      %v442 = vpop.f32.mrf.mxu0
      %v443 = vadd.f32 0.0, %v442
      %444 = vdwg.mxu0
      %445 = vmatprep.subr.mxu0 %v340
      %446 = vmatpush1.msra.mxu0 %v339
      %447 = vmatprep.subr.mxu0 %v338
      %448 = vmatpush1.msra.mxu0 %v337
      %449 = vmatprep.subr.mxu0 %v336
      %450 = vmatpush1.msra.mxu0 %v335
      %451 = vmatprep.subr.mxu0 %v334
      %452 = vmatpush1.msra.mxu0 %v333
      %453 = vmatprep.subr.mxu0 %v332
      %454 = vmatpush1.msra.mxu0 %v331
      %455 = vmatprep.subr.mxu0 %v330
      %456 = vmatpush1.msra.mxu0 %v329
      %457 = vmatprep.subr.mxu0 %v328
      %458 = vmatpush1.msra.mxu0 %v327
      %459 = vmatprep.subr.mxu0 %v326
      %460 = vmatpush1.msra.mxu0 %v325
      %461 = vmatprep.subr.mxu0 %v324
      %462 = vmatpush1.msra.mxu0 %v323
      %463 = vmatprep.subr.mxu0 %v322
      %464 = vmatpush1.msra.mxu0 %v321
      %465 = vmatprep.subr.mxu0 %v320
      %466 = vmatpush1.msra.mxu0 %v319
      %467 = vmatprep.subr.mxu0 %v318
      %468 = vmatpush1.msra.mxu0 %v317
      %469 = vmatprep.subr.mxu0 %v316
      %470 = vmatpush1.msra.mxu0 %v315
      %471 = vmatprep.subr.mxu0 %v314
      %472 = vmatpush1.msra.mxu0 %v313
      %473 = vmatprep.subr.mxu0 %v312
      %474 = vmatpush1.msra.mxu0 %v311
      %475 = vmatprep.subr.mxu0 %v310
      %476 = vmatpush1.msra.mxu0 %v309
      %477 = vmatprep.subr.mxu0 0.0
      %478 = vmatpush2.msra.mxu0 0.0
      %479 = vmatprep.subr.mxu0 0.0
      %480 = vmatpush2.msra.mxu0 0.0
      %481 = vmatprep.subr.mxu0 0.0
      %482 = vmatpush2.msra.mxu0 0.0
      %483 = vmatprep.subr.mxu0 0.0
      %484 = vmatpush2.msra.mxu0 0.0
      %485 = vmatprep.subr.mxu0 0.0
      %486 = vmatpush2.msra.mxu0 0.0
      %487 = vmatprep.subr.mxu0 0.0
      %488 = vmatpush2.msra.mxu0 0.0
      %489 = vmatprep.subr.mxu0 0.0
      %490 = vmatpush2.msra.mxu0 0.0
      %491 = vmatprep.subr.mxu0 0.0
      %492 = vmatpush2.msra.mxu0 0.0
      %493 = vmatprep.subr.mxu0 0.0
      %494 = vmatpush2.msra.mxu0 0.0
      %495 = vmatprep.subr.mxu0 0.0
      %496 = vmatpush2.msra.mxu0 0.0
      %497 = vmatprep.subr.mxu0 0.0
      %498 = vmatpush2.msra.mxu0 0.0
      %499 = vmatprep.subr.mxu0 0.0
      %500 = vmatpush2.msra.mxu0 0.0
      %501 = vmatprep.subr.mxu0 0.0
      %502 = vmatpush2.msra.mxu0 0.0
      %503 = vmatprep.subr.mxu0 0.0
      %504 = vmatpush2.msra.mxu0 0.0
      %505 = vmatprep.subr.mxu0 0.0
      %506 = vmatpush2.msra.mxu0 0.0
      %507 = vmatprep.subr.mxu0 0.0
      %508 = vmatpush2.msra.mxu0 0.0
      %509 = vmatprep.mubr.f32.mxu0 0.0
      %510 = vmatmul.mubr.f32.gmra.mxu0 %v308
      %v511 = vpop.f32.mrf.mxu0
      %v512 = vadd.f32 %v441, %v511
      %v513 = vpop.f32.mrf.mxu0
      %v514 = vadd.f32 %v443, %v513
      %515 = vdwg.mxu0
      %v516 = vld [vmem:[#allocation2 + $0x1] sm:$0xff]
      %s517 = scalar_lea.vmem %s2, 256
      %v518 = vld [vmem:[%s517] sm:$0xff]
      %v519 = vld [vmem:[%s517 + $0x8] sm:$0xff]
      %v520 = vld [vmem:[%s517 + $0x10] sm:$0xff]
      %v521 = vld [vmem:[%s517 + $0x18] sm:$0xff]
      %v522 = vld [vmem:[%s517 + $0x20] sm:$0xff]
      %v523 = vld [vmem:[%s517 + $0x28] sm:$0xff]
      %v524 = vld [vmem:[%s517 + $0x30] sm:$0xff]
      %v525 = vld [vmem:[%s517 + $0x38] sm:$0xff]
      %v526 = vld [vmem:[%s517 + $0x40] sm:$0xff]
      %v527 = vld [vmem:[%s517 + $0x48] sm:$0xff]
      %v528 = vld [vmem:[%s517 + $0x50] sm:$0xff]
      %v529 = vld [vmem:[%s517 + $0x58] sm:$0xff]
      %v530 = vld [vmem:[%s517 + $0x60] sm:$0xff]
      %v531 = vld [vmem:[%s517 + $0x68] sm:$0xff]
      %v532 = vld [vmem:[%s517 + $0x70] sm:$0xff]
      %v533 = vld [vmem:[%s517 + $0x78] sm:$0xff]
      %v534 = vld [vmem:[%s517 + $0x80] sm:$0xff]
      %v535 = vld [vmem:[%s517 + $0x88] sm:$0xff]
      %v536 = vld [vmem:[%s517 + $0x90] sm:$0xff]
      %v537 = vld [vmem:[%s517 + $0x98] sm:$0xff]
      %v538 = vld [vmem:[%s517 + $0xa0] sm:$0xff]
      %v539 = vld [vmem:[%s517 + $0xa8] sm:$0xff]
      %v540 = vld [vmem:[%s517 + $0xb0] sm:$0xff]
      %v541 = vld [vmem:[%s517 + $0xb8] sm:$0xff]
      %v542 = vld [vmem:[%s517 + $0xc0] sm:$0xff]
      %v543 = vld [vmem:[%s517 + $0xc8] sm:$0xff]
      %v544 = vld [vmem:[%s517 + $0xd0] sm:$0xff]
      %v545 = vld [vmem:[%s517 + $0xd8] sm:$0xff]
      %v546 = vld [vmem:[%s517 + $0xe0] sm:$0xff]
      %v547 = vld [vmem:[%s517 + $0xe8] sm:$0xff]
      %v548 = vld [vmem:[%s517 + $0xf0] sm:$0xff]
      %v549 = vld [vmem:[%s517 + $0xf8] sm:$0xff]
      %550 = vmatprep.subr.mxu0 %v549
      %551 = vmatpush1.msra.mxu0 %v548
      %552 = vmatprep.subr.mxu0 %v547
      %553 = vmatpush1.msra.mxu0 %v546
      %554 = vmatprep.subr.mxu0 %v545
      %555 = vmatpush1.msra.mxu0 %v544
      %556 = vmatprep.subr.mxu0 %v543
      %557 = vmatpush1.msra.mxu0 %v542
      %558 = vmatprep.subr.mxu0 %v541
      %559 = vmatpush1.msra.mxu0 %v540
      %560 = vmatprep.subr.mxu0 %v539
      %561 = vmatpush1.msra.mxu0 %v538
      %562 = vmatprep.subr.mxu0 %v537
      %563 = vmatpush1.msra.mxu0 %v536
      %564 = vmatprep.subr.mxu0 %v535
      %565 = vmatpush1.msra.mxu0 %v534
      %566 = vmatprep.subr.mxu0 %v533
      %567 = vmatpush1.msra.mxu0 %v532
      %568 = vmatprep.subr.mxu0 %v531
      %569 = vmatpush1.msra.mxu0 %v530
      %570 = vmatprep.subr.mxu0 %v529
      %571 = vmatpush1.msra.mxu0 %v528
      %572 = vmatprep.subr.mxu0 %v527
      %573 = vmatpush1.msra.mxu0 %v526
      %574 = vmatprep.subr.mxu0 %v525
      %575 = vmatpush1.msra.mxu0 %v524
      %576 = vmatprep.subr.mxu0 %v523
      %577 = vmatpush1.msra.mxu0 %v522
      %578 = vmatprep.subr.mxu0 %v521
      %579 = vmatpush1.msra.mxu0 %v520
      %580 = vmatprep.subr.mxu0 %v519
      %581 = vmatpush1.msra.mxu0 %v518
      %582 = vmatprep.subr.mxu0 0.0
      %583 = vmatpush2.msra.mxu0 0.0
      %584 = vmatprep.subr.mxu0 0.0
      %585 = vmatpush2.msra.mxu0 0.0
      %586 = vmatprep.subr.mxu0 0.0
      %587 = vmatpush2.msra.mxu0 0.0
      %588 = vmatprep.subr.mxu0 0.0
      %589 = vmatpush2.msra.mxu0 0.0
      %590 = vmatprep.subr.mxu0 0.0
      %591 = vmatpush2.msra.mxu0 0.0
      %592 = vmatprep.subr.mxu0 0.0
      %593 = vmatpush2.msra.mxu0 0.0
      %594 = vmatprep.subr.mxu0 0.0
      %595 = vmatpush2.msra.mxu0 0.0
      %596 = vmatprep.subr.mxu0 0.0
      %597 = vmatpush2.msra.mxu0 0.0
      %598 = vmatprep.subr.mxu0 0.0
      %599 = vmatpush2.msra.mxu0 0.0
      %600 = vmatprep.subr.mxu0 0.0
      %601 = vmatpush2.msra.mxu0 0.0
      %602 = vmatprep.subr.mxu0 0.0
      %603 = vmatpush2.msra.mxu0 0.0
      %604 = vmatprep.subr.mxu0 0.0
      %605 = vmatpush2.msra.mxu0 0.0
      %606 = vmatprep.subr.mxu0 0.0
      %607 = vmatpush2.msra.mxu0 0.0
      %608 = vmatprep.subr.mxu0 0.0
      %609 = vmatpush2.msra.mxu0 0.0
      %610 = vmatprep.subr.mxu0 0.0
      %611 = vmatpush2.msra.mxu0 0.0
      %612 = vmatprep.subr.mxu0 0.0
      %613 = vmatpush2.msra.mxu0 0.0
      %614 = vmatprep.mubr.f32.mxu0 0.0
      %615 = vmatmul.mubr.f32.gmra.mxu0 %v516
      %v616 = vpop.f32.mrf.mxu0
      %v617 = vadd.f32 0.0, %v616
      %v618 = vpop.f32.mrf.mxu0
      %v619 = vadd.f32 0.0, %v618
      %620 = vdwg.mxu0
      %v621 = vadd.f32 %v512, %v617
      %v622 = vadd.f32 %v514, %v619
      %v623 = vld [vmem:[#allocation3 + $0x1] sm:$0xff]
      %s624 = scalar_lea.vmem %s3, 256
      %v625 = vld [vmem:[%s624] sm:$0xff]
      %v626 = vld [vmem:[%s624 + $0x8] sm:$0xff]
      %v627 = vld [vmem:[%s624 + $0x10] sm:$0xff]
      %v628 = vld [vmem:[%s624 + $0x18] sm:$0xff]
      %v629 = vld [vmem:[%s624 + $0x20] sm:$0xff]
      %v630 = vld [vmem:[%s624 + $0x28] sm:$0xff]
      %v631 = vld [vmem:[%s624 + $0x30] sm:$0xff]
      %v632 = vld [vmem:[%s624 + $0x38] sm:$0xff]
      %v633 = vld [vmem:[%s624 + $0x40] sm:$0xff]
      %v634 = vld [vmem:[%s624 + $0x48] sm:$0xff]
      %v635 = vld [vmem:[%s624 + $0x50] sm:$0xff]
      %v636 = vld [vmem:[%s624 + $0x58] sm:$0xff]
      %v637 = vld [vmem:[%s624 + $0x60] sm:$0xff]
      %v638 = vld [vmem:[%s624 + $0x68] sm:$0xff]
      %v639 = vld [vmem:[%s624 + $0x70] sm:$0xff]
      %v640 = vld [vmem:[%s624 + $0x78] sm:$0xff]
      %v641 = vld [vmem:[%s624 + $0x80] sm:$0xff]
      %v642 = vld [vmem:[%s624 + $0x88] sm:$0xff]
      %v643 = vld [vmem:[%s624 + $0x90] sm:$0xff]
      %v644 = vld [vmem:[%s624 + $0x98] sm:$0xff]
      %v645 = vld [vmem:[%s624 + $0xa0] sm:$0xff]
      %v646 = vld [vmem:[%s624 + $0xa8] sm:$0xff]
      %v647 = vld [vmem:[%s624 + $0xb0] sm:$0xff]
      %v648 = vld [vmem:[%s624 + $0xb8] sm:$0xff]
      %v649 = vld [vmem:[%s624 + $0xc0] sm:$0xff]
      %v650 = vld [vmem:[%s624 + $0xc8] sm:$0xff]
      %v651 = vld [vmem:[%s624 + $0xd0] sm:$0xff]
      %v652 = vld [vmem:[%s624 + $0xd8] sm:$0xff]
      %v653 = vld [vmem:[%s624 + $0xe0] sm:$0xff]
      %v654 = vld [vmem:[%s624 + $0xe8] sm:$0xff]
      %v655 = vld [vmem:[%s624 + $0xf0] sm:$0xff]
      %v656 = vld [vmem:[%s624 + $0xf8] sm:$0xff]
      %657 = vmatprep.subr.mxu0 %v656
      %658 = vmatpush1.msra.mxu0 %v655
      %659 = vmatprep.subr.mxu0 %v654
      %660 = vmatpush1.msra.mxu0 %v653
      %661 = vmatprep.subr.mxu0 %v652
      %662 = vmatpush1.msra.mxu0 %v651
      %663 = vmatprep.subr.mxu0 %v650
      %664 = vmatpush1.msra.mxu0 %v649
      %665 = vmatprep.subr.mxu0 %v648
      %666 = vmatpush1.msra.mxu0 %v647
      %667 = vmatprep.subr.mxu0 %v646
      %668 = vmatpush1.msra.mxu0 %v645
      %669 = vmatprep.subr.mxu0 %v644
      %670 = vmatpush1.msra.mxu0 %v643
      %671 = vmatprep.subr.mxu0 %v642
      %672 = vmatpush1.msra.mxu0 %v641
      %673 = vmatprep.subr.mxu0 %v640
      %674 = vmatpush1.msra.mxu0 %v639
      %675 = vmatprep.subr.mxu0 %v638
      %676 = vmatpush1.msra.mxu0 %v637
      %677 = vmatprep.subr.mxu0 %v636
      %678 = vmatpush1.msra.mxu0 %v635
      %679 = vmatprep.subr.mxu0 %v634
      %680 = vmatpush1.msra.mxu0 %v633
      %681 = vmatprep.subr.mxu0 %v632
      %682 = vmatpush1.msra.mxu0 %v631
      %683 = vmatprep.subr.mxu0 %v630
      %684 = vmatpush1.msra.mxu0 %v629
      %685 = vmatprep.subr.mxu0 %v628
      %686 = vmatpush1.msra.mxu0 %v627
      %687 = vmatprep.subr.mxu0 %v626
      %688 = vmatpush1.msra.mxu0 %v625
      %689 = vmatprep.subr.mxu0 0.0
      %690 = vmatpush2.msra.mxu0 0.0
      %691 = vmatprep.subr.mxu0 0.0
      %692 = vmatpush2.msra.mxu0 0.0
      %693 = vmatprep.subr.mxu0 0.0
      %694 = vmatpush2.msra.mxu0 0.0
      %695 = vmatprep.subr.mxu0 0.0
      %696 = vmatpush2.msra.mxu0 0.0
      %697 = vmatprep.subr.mxu0 0.0
      %698 = vmatpush2.msra.mxu0 0.0
      %699 = vmatprep.subr.mxu0 0.0
      %700 = vmatpush2.msra.mxu0 0.0
      %701 = vmatprep.subr.mxu0 0.0
      %702 = vmatpush2.msra.mxu0 0.0
      %703 = vmatprep.subr.mxu0 0.0
      %704 = vmatpush2.msra.mxu0 0.0
      %705 = vmatprep.subr.mxu0 0.0
      %706 = vmatpush2.msra.mxu0 0.0
      %707 = vmatprep.subr.mxu0 0.0
      %708 = vmatpush2.msra.mxu0 0.0
      %709 = vmatprep.subr.mxu0 0.0
      %710 = vmatpush2.msra.mxu0 0.0
      %711 = vmatprep.subr.mxu0 0.0
      %712 = vmatpush2.msra.mxu0 0.0
      %713 = vmatprep.subr.mxu0 0.0
      %714 = vmatpush2.msra.mxu0 0.0
      %715 = vmatprep.subr.mxu0 0.0
      %716 = vmatpush2.msra.mxu0 0.0
      %717 = vmatprep.subr.mxu0 0.0
      %718 = vmatpush2.msra.mxu0 0.0
      %719 = vmatprep.subr.mxu0 0.0
      %720 = vmatpush2.msra.mxu0 0.0
      %721 = vmatprep.mubr.f32.mxu0 0.0
      %722 = vmatmul.mubr.f32.gmra.mxu0 %v623
      %v723 = vpop.f32.mrf.mxu0
      %v724 = vadd.f32 0.0, %v723
      %v725 = vpop.f32.mrf.mxu0
      %v726 = vadd.f32 0.0, %v725
      %727 = vdwg.mxu0
      %v728 = vadd.f32 %v621, %v724
      %v729 = vadd.f32 %v622, %v726
      %v730 = vld [vmem:[#allocation2 + $0x2] sm:$0xff]
      %s731 = scalar_lea.vmem %s2, 512
      %v732 = vld [vmem:[%s731] sm:$0xff]
      %v733 = vld [vmem:[%s731 + $0x8] sm:$0xff]
      %v734 = vld [vmem:[%s731 + $0x10] sm:$0xff]
      %v735 = vld [vmem:[%s731 + $0x18] sm:$0xff]
      %v736 = vld [vmem:[%s731 + $0x20] sm:$0xff]
      %v737 = vld [vmem:[%s731 + $0x28] sm:$0xff]
      %v738 = vld [vmem:[%s731 + $0x30] sm:$0xff]
      %v739 = vld [vmem:[%s731 + $0x38] sm:$0xff]
      %v740 = vld [vmem:[%s731 + $0x40] sm:$0xff]
      %v741 = vld [vmem:[%s731 + $0x48] sm:$0xff]
      %v742 = vld [vmem:[%s731 + $0x50] sm:$0xff]
      %v743 = vld [vmem:[%s731 + $0x58] sm:$0xff]
      %v744 = vld [vmem:[%s731 + $0x60] sm:$0xff]
      %v745 = vld [vmem:[%s731 + $0x68] sm:$0xff]
      %v746 = vld [vmem:[%s731 + $0x70] sm:$0xff]
      %v747 = vld [vmem:[%s731 + $0x78] sm:$0xff]
      %v748 = vld [vmem:[%s731 + $0x80] sm:$0xff]
      %v749 = vld [vmem:[%s731 + $0x88] sm:$0xff]
      %v750 = vld [vmem:[%s731 + $0x90] sm:$0xff]
      %v751 = vld [vmem:[%s731 + $0x98] sm:$0xff]
      %v752 = vld [vmem:[%s731 + $0xa0] sm:$0xff]
      %v753 = vld [vmem:[%s731 + $0xa8] sm:$0xff]
      %v754 = vld [vmem:[%s731 + $0xb0] sm:$0xff]
      %v755 = vld [vmem:[%s731 + $0xb8] sm:$0xff]
      %v756 = vld [vmem:[%s731 + $0xc0] sm:$0xff]
      %v757 = vld [vmem:[%s731 + $0xc8] sm:$0xff]
      %v758 = vld [vmem:[%s731 + $0xd0] sm:$0xff]
      %v759 = vld [vmem:[%s731 + $0xd8] sm:$0xff]
      %v760 = vld [vmem:[%s731 + $0xe0] sm:$0xff]
      %v761 = vld [vmem:[%s731 + $0xe8] sm:$0xff]
      %v762 = vld [vmem:[%s731 + $0xf0] sm:$0xff]
      %v763 = vld [vmem:[%s731 + $0xf8] sm:$0xff]
      %764 = vmatprep.subr.mxu0 %v763
      %765 = vmatpush1.msra.mxu0 %v762
      %766 = vmatprep.subr.mxu0 %v761
      %767 = vmatpush1.msra.mxu0 %v760
      %768 = vmatprep.subr.mxu0 %v759
      %769 = vmatpush1.msra.mxu0 %v758
      %770 = vmatprep.subr.mxu0 %v757
      %771 = vmatpush1.msra.mxu0 %v756
      %772 = vmatprep.subr.mxu0 %v755
      %773 = vmatpush1.msra.mxu0 %v754
      %774 = vmatprep.subr.mxu0 %v753
      %775 = vmatpush1.msra.mxu0 %v752
      %776 = vmatprep.subr.mxu0 %v751
      %777 = vmatpush1.msra.mxu0 %v750
      %778 = vmatprep.subr.mxu0 %v749
      %779 = vmatpush1.msra.mxu0 %v748
      %780 = vmatprep.subr.mxu0 %v747
      %781 = vmatpush1.msra.mxu0 %v746
      %782 = vmatprep.subr.mxu0 %v745
      %783 = vmatpush1.msra.mxu0 %v744
      %784 = vmatprep.subr.mxu0 %v743
      %785 = vmatpush1.msra.mxu0 %v742
      %786 = vmatprep.subr.mxu0 %v741
      %787 = vmatpush1.msra.mxu0 %v740
      %788 = vmatprep.subr.mxu0 %v739
      %789 = vmatpush1.msra.mxu0 %v738
      %790 = vmatprep.subr.mxu0 %v737
      %791 = vmatpush1.msra.mxu0 %v736
      %792 = vmatprep.subr.mxu0 %v735
      %793 = vmatpush1.msra.mxu0 %v734
      %794 = vmatprep.subr.mxu0 %v733
      %795 = vmatpush1.msra.mxu0 %v732
      %796 = vmatprep.subr.mxu0 0.0
      %797 = vmatpush2.msra.mxu0 0.0
      %798 = vmatprep.subr.mxu0 0.0
      %799 = vmatpush2.msra.mxu0 0.0
      %800 = vmatprep.subr.mxu0 0.0
      %801 = vmatpush2.msra.mxu0 0.0
      %802 = vmatprep.subr.mxu0 0.0
      %803 = vmatpush2.msra.mxu0 0.0
      %804 = vmatprep.subr.mxu0 0.0
      %805 = vmatpush2.msra.mxu0 0.0
      %806 = vmatprep.subr.mxu0 0.0
      %807 = vmatpush2.msra.mxu0 0.0
      %808 = vmatprep.subr.mxu0 0.0
      %809 = vmatpush2.msra.mxu0 0.0
      %810 = vmatprep.subr.mxu0 0.0
      %811 = vmatpush2.msra.mxu0 0.0
      %812 = vmatprep.subr.mxu0 0.0
      %813 = vmatpush2.msra.mxu0 0.0
      %814 = vmatprep.subr.mxu0 0.0
      %815 = vmatpush2.msra.mxu0 0.0
      %816 = vmatprep.subr.mxu0 0.0
      %817 = vmatpush2.msra.mxu0 0.0
      %818 = vmatprep.subr.mxu0 0.0
      %819 = vmatpush2.msra.mxu0 0.0
      %820 = vmatprep.subr.mxu0 0.0
      %821 = vmatpush2.msra.mxu0 0.0
      %822 = vmatprep.subr.mxu0 0.0
      %823 = vmatpush2.msra.mxu0 0.0
      %824 = vmatprep.subr.mxu0 0.0
      %825 = vmatpush2.msra.mxu0 0.0
      %826 = vmatprep.subr.mxu0 0.0
      %827 = vmatpush2.msra.mxu0 0.0
      %828 = vmatprep.mubr.f32.mxu0 0.0
      %829 = vmatmul.mubr.f32.gmra.mxu0 %v730
      %v830 = vpop.f32.mrf.mxu0
      %v831 = vadd.f32 0.0, %v830
      %v832 = vpop.f32.mrf.mxu0
      %v833 = vadd.f32 0.0, %v832
      %834 = vdwg.mxu0
      %v835 = vadd.f32 %v728, %v831
      %v836 = vadd.f32 %v729, %v833
      %v837 = vld [vmem:[#allocation3 + $0x2] sm:$0xff]
      %s838 = scalar_lea.vmem %s3, 512
      %v839 = vld [vmem:[%s838] sm:$0xff]
      %v840 = vld [vmem:[%s838 + $0x8] sm:$0xff]
      %v841 = vld [vmem:[%s838 + $0x10] sm:$0xff]
      %v842 = vld [vmem:[%s838 + $0x18] sm:$0xff]
      %v843 = vld [vmem:[%s838 + $0x20] sm:$0xff]
      %v844 = vld [vmem:[%s838 + $0x28] sm:$0xff]
      %v845 = vld [vmem:[%s838 + $0x30] sm:$0xff]
      %v846 = vld [vmem:[%s838 + $0x38] sm:$0xff]
      %v847 = vld [vmem:[%s838 + $0x40] sm:$0xff]
      %v848 = vld [vmem:[%s838 + $0x48] sm:$0xff]
      %v849 = vld [vmem:[%s838 + $0x50] sm:$0xff]
      %v850 = vld [vmem:[%s838 + $0x58] sm:$0xff]
      %v851 = vld [vmem:[%s838 + $0x60] sm:$0xff]
      %v852 = vld [vmem:[%s838 + $0x68] sm:$0xff]
      %v853 = vld [vmem:[%s838 + $0x70] sm:$0xff]
      %v854 = vld [vmem:[%s838 + $0x78] sm:$0xff]
      %v855 = vld [vmem:[%s838 + $0x80] sm:$0xff]
      %v856 = vld [vmem:[%s838 + $0x88] sm:$0xff]
      %v857 = vld [vmem:[%s838 + $0x90] sm:$0xff]
      %v858 = vld [vmem:[%s838 + $0x98] sm:$0xff]
      %v859 = vld [vmem:[%s838 + $0xa0] sm:$0xff]
      %v860 = vld [vmem:[%s838 + $0xa8] sm:$0xff]
      %v861 = vld [vmem:[%s838 + $0xb0] sm:$0xff]
      %v862 = vld [vmem:[%s838 + $0xb8] sm:$0xff]
      %v863 = vld [vmem:[%s838 + $0xc0] sm:$0xff]
      %v864 = vld [vmem:[%s838 + $0xc8] sm:$0xff]
      %v865 = vld [vmem:[%s838 + $0xd0] sm:$0xff]
      %v866 = vld [vmem:[%s838 + $0xd8] sm:$0xff]
      %v867 = vld [vmem:[%s838 + $0xe0] sm:$0xff]
      %v868 = vld [vmem:[%s838 + $0xe8] sm:$0xff]
      %v869 = vld [vmem:[%s838 + $0xf0] sm:$0xff]
      %v870 = vld [vmem:[%s838 + $0xf8] sm:$0xff]
      %871 = vmatprep.subr.mxu0 %v870
      %872 = vmatpush1.msra.mxu0 %v869
      %873 = vmatprep.subr.mxu0 %v868
      %874 = vmatpush1.msra.mxu0 %v867
      %875 = vmatprep.subr.mxu0 %v866
      %876 = vmatpush1.msra.mxu0 %v865
      %877 = vmatprep.subr.mxu0 %v864
      %878 = vmatpush1.msra.mxu0 %v863
      %879 = vmatprep.subr.mxu0 %v862
      %880 = vmatpush1.msra.mxu0 %v861
      %881 = vmatprep.subr.mxu0 %v860
      %882 = vmatpush1.msra.mxu0 %v859
      %883 = vmatprep.subr.mxu0 %v858
      %884 = vmatpush1.msra.mxu0 %v857
      %885 = vmatprep.subr.mxu0 %v856
      %886 = vmatpush1.msra.mxu0 %v855
      %887 = vmatprep.subr.mxu0 %v854
      %888 = vmatpush1.msra.mxu0 %v853
      %889 = vmatprep.subr.mxu0 %v852
      %890 = vmatpush1.msra.mxu0 %v851
      %891 = vmatprep.subr.mxu0 %v850
      %892 = vmatpush1.msra.mxu0 %v849
      %893 = vmatprep.subr.mxu0 %v848
      %894 = vmatpush1.msra.mxu0 %v847
      %895 = vmatprep.subr.mxu0 %v846
      %896 = vmatpush1.msra.mxu0 %v845
      %897 = vmatprep.subr.mxu0 %v844
      %898 = vmatpush1.msra.mxu0 %v843
      %899 = vmatprep.subr.mxu0 %v842
      %900 = vmatpush1.msra.mxu0 %v841
      %901 = vmatprep.subr.mxu0 %v840
      %902 = vmatpush1.msra.mxu0 %v839
      %903 = vmatprep.subr.mxu0 0.0
      %904 = vmatpush2.msra.mxu0 0.0
      %905 = vmatprep.subr.mxu0 0.0
      %906 = vmatpush2.msra.mxu0 0.0
      %907 = vmatprep.subr.mxu0 0.0
      %908 = vmatpush2.msra.mxu0 0.0
      %909 = vmatprep.subr.mxu0 0.0
      %910 = vmatpush2.msra.mxu0 0.0
      %911 = vmatprep.subr.mxu0 0.0
      %912 = vmatpush2.msra.mxu0 0.0
      %913 = vmatprep.subr.mxu0 0.0
      %914 = vmatpush2.msra.mxu0 0.0
      %915 = vmatprep.subr.mxu0 0.0
      %916 = vmatpush2.msra.mxu0 0.0
      %917 = vmatprep.subr.mxu0 0.0
      %918 = vmatpush2.msra.mxu0 0.0
      %919 = vmatprep.subr.mxu0 0.0
      %920 = vmatpush2.msra.mxu0 0.0
      %921 = vmatprep.subr.mxu0 0.0
      %922 = vmatpush2.msra.mxu0 0.0
      %923 = vmatprep.subr.mxu0 0.0
      %924 = vmatpush2.msra.mxu0 0.0
      %925 = vmatprep.subr.mxu0 0.0
      %926 = vmatpush2.msra.mxu0 0.0
      %927 = vmatprep.subr.mxu0 0.0
      %928 = vmatpush2.msra.mxu0 0.0
      %929 = vmatprep.subr.mxu0 0.0
      %930 = vmatpush2.msra.mxu0 0.0
      %931 = vmatprep.subr.mxu0 0.0
      %932 = vmatpush2.msra.mxu0 0.0
      %933 = vmatprep.subr.mxu0 0.0
      %934 = vmatpush2.msra.mxu0 0.0
      %935 = vmatprep.mubr.f32.mxu0 0.0
      %936 = vmatmul.mubr.f32.gmra.mxu0 %v837
      %v937 = vpop.f32.mrf.mxu0
      %v938 = vadd.f32 0.0, %v937
      %v939 = vpop.f32.mrf.mxu0
      %v940 = vadd.f32 0.0, %v939
      %941 = vdwg.mxu0
      %v942 = vadd.f32 %v835, %v938
      %v943 = vadd.f32 %v836, %v940
      %v944 = vld [vmem:[%s4] sm:$0x3]
      %v946 = vlaneseq
      %v947 = vshrl.u32 %v946, 7
      %v948 = vsub.s32 0, %v947
      %v949 = vrot.slane %v944, %v948
      %v950 = vlaneseq
      %v951 = vshrl.u32 %v950, 7
      %v952 = vsub.s32 1, %v951
      %v953 = vrot.slane %v944, %v952
      %v956 = vadd.f32 %v942, %v949
      %v957 = vadd.f32 %v943, %v953
      %v958 = vmax.f32 %v956, 0.0
      %v959 = vmax.f32 %v957, 0.0
      %960 = vst [vmem:[%s266] sm:$0xff] %v958
      %961 = vst [vmem:[%s266 + $0x8] sm:$0xff] %v959
      %p962 = scmp.lt.s32.totalorder %s20, 1
      %s963 = scalar_select %p962, %s20, 1
      %p964 = scmp.lt.s32.totalorder %s21, 3
      %s965 = scalar_select %p964, %s21, 3
      %s966 = smul.addr %s965, 2
      %s967 = smul.addr %s963, 8
      %s968 = sadd.s32 %s966, %s967
      %s969 = smul.addr %s968, 8
      %s970 = scalar_lea.vmem %s5, %s969
      // Predicated region
      $region57: #{upsample_forward.4} parent=39 // pred_check
        %p971 = pneg %p163
      $region58: #{upsample_forward.4} parent=39 // pred_check_branch
        %973 = sbr.rel (%p971) target = $region60
      $region59: #{upsample_forward.4} parent=39 // pred_region
        _
      $region60: #{upsample_forward.4} parent=39 // pred_fallthru
        _
    $region40: #{upsample_forward.4} parent=5 // pred_fallthru
      _
    %p974 = scmp.le.s32.totalorder 2, %s11
    // Predicated region
    $region61: #{upsample_forward.4} parent=5 // pred_check
      %p975 = pneg %p974
    $region62: #{upsample_forward.4} parent=5 // pred_check_branch
      %977 = sbr.rel (%p975) target = $region64
    $region63: #{upsample_forward.4} parent=5 // pred_region
      %s978 = ssub.s32 %s11, 2
      // Predicated region
      $region65: #{upsample_forward.4} parent=63 // pred_check
        %p979 = pneg %p169
      $region66: #{upsample_forward.4} parent=63 // pred_check_branch
        %981 = sbr.rel (%p979) target = $region68
      $region67: #{upsample_forward.4} parent=63 // pred_region
        %p982 = scmp.lt.s32.totalorder %s22, 1
        %s983 = scalar_select %p982, %s22, 1
        %p984 = scmp.lt.s32.totalorder %s23, 3
        %s985 = scalar_select %p984, %s23, 3
        %s986 = smul.addr %s985, 2
        %s987 = smul.addr %s983, 8
        %s988 = sadd.s32 %s986, %s987
        %s989 = smul.addr %s988, 8
        %s990 = scalar_lea.vmem %s5, %s989
      $region68: #{upsample_forward.4} parent=63 // pred_fallthru
        _
    $region64: #{upsample_forward.4} parent=5 // pred_fallthru
      _
  $region6: #{upsample_forward.4} parent=0 // loop_footer
    %s15 = sadd.s32 1, %s11
  $region7: #{upsample_forward.4} parent=0 // loop_footer_branch
    %10 = sbr.rel target = $region3
  $region8: #{upsample_forward.4} parent=0 // loop_exit
    _

// kernel: tile.38
$region0: #{tile.38}
  #allocation0 [shape = 's32[1]{0}', space=sflag, size = 0x4, scoped, tag = 'scoped memory for tile.38']
  %s0 = inlined_call_operand.vmem [shape: f32[4], index: 0, kind: input, shape index: {}]
  %s1 = inlined_call_operand.vmem [shape: f32[32,4], index: 1, kind: output, shape index: {}]
  // Predicated region
  $region2: #{tile.38} parent=0 // pred_check
    _
  $region3: #{tile.38} parent=0 // pred_check_branch
    %3 = sbr.rel (0) target = $region5
  $region4: #{tile.38} parent=0 // pred_region
    _
  $region5: #{tile.38} parent=0 // pred_fallthru
    _
  %v4 = vld [vmem:[%s0] ss:$0 sm:$0xff]
  %5 = vst [vmem:[%s1] sm:$0xff] %v4
  %s6 = scalar_lea.vmem %s1, 8
  %7 = vst [vmem:[%s6] sm:$0xff] %v4
  %s8 = scalar_lea.vmem %s1, 16
  %9 = vst [vmem:[%s8] sm:$0xff] %v4
  %s10 = scalar_lea.vmem %s1, 24
  %11 = vst [vmem:[%s10] sm:$0xff] %v4

// kernel: tile.39
$region0: #{tile.39}
  %s0 = inlined_call_operand.vmem [shape: f32[32,4], index: 0, kind: input, shape index: {}]
  %s1 = inlined_call_operand.vmem [shape: f32[1,128], index: 1, kind: output, shape index: {}]
  $region1: #{tile.39} parent=0
    #allocation0 [shape = 'u8[4096]{0}', space=vmem, size = 0x1000, scoped, tag = 'scoped mem for output reshape']
    %v2 = vld [vmem:[%s0] sm:$0x1]
    %vm3 = vcmask 31744
    %4 = vst.msk [vmem:[#allocation0] sm:$0x1] %vm3, %v2
    %s5 = scalar_lea.vmem %s0, 31
    %v6 = vld [vmem:[%s5] sm:$0x1]
    %7 = vrot.lane.b32.xlu0 %v6, 124
    %v8 = vpop.permute.xlu0 %7
    %vm9 = vcmask 1048544
    %10 = vst.msk [vmem:[#allocation0] sm:$0x1] %vm9, %v8
    %s11 = scalar_lea.vmem %s0, 30
    %v12 = vld [vmem:[%s11] sm:$0x1]
    %13 = vrot.lane.b32.xlu0 %v12, 120
    %v14 = vpop.permute.xlu0 %13
    %vm15 = vcmask 1015744
    %16 = vst.msk [vmem:[#allocation0] sm:$0x1] %vm15, %v14
    %s17 = scalar_lea.vmem %s0, 29
    %v18 = vld [vmem:[%s17] sm:$0x1]
    %19 = vrot.lane.b32.xlu0 %v18, 116
    %v20 = vpop.permute.xlu0 %19
    %vm21 = vcmask 982944
    %22 = vst.msk [vmem:[#allocation0] sm:$0x1] %vm21, %v20
    %s23 = scalar_lea.vmem %s0, 28
    %v24 = vld [vmem:[%s23] sm:$0x1]
    %25 = vrot.lane.b32.xlu0 %v24, 112
    %v26 = vpop.permute.xlu0 %25
    %vm27 = vcmask 950144
    %28 = vst.msk [vmem:[#allocation0] sm:$0x1] %vm27, %v26
    %s29 = scalar_lea.vmem %s0, 27
    %v30 = vld [vmem:[%s29] sm:$0x1]
    %31 = vrot.lane.b32.xlu0 %v30, 108
    %v32 = vpop.permute.xlu0 %31
    %vm33 = vcmask 917344
    %34 = vst.msk [vmem:[#allocation0] sm:$0x1] %vm33, %v32
    %s35 = scalar_lea.vmem %s0, 26
    %v36 = vld [vmem:[%s35] sm:$0x1]
    %37 = vrot.lane.b32.xlu0 %v36, 104
    %v38 = vpop.permute.xlu0 %37
    %vm39 = vcmask 884544
    %40 = vst.msk [vmem:[#allocation0] sm:$0x1] %vm39, %v38
    %s41 = scalar_lea.vmem %s0, 25
    %v42 = vld [vmem:[%s41] sm:$0x1]
    %43 = vrot.lane.b32.xlu0 %v42, 100
    %v44 = vpop.permute.xlu0 %43
    %vm45 = vcmask 851744
    %46 = vst.msk [vmem:[#allocation0] sm:$0x1] %vm45, %v44
    %s47 = scalar_lea.vmem %s0, 24
    %v48 = vld [vmem:[%s47] sm:$0x1]
    %49 = vrot.lane.b32.xlu0 %v48, 96
    %v50 = vpop.permute.xlu0 %49
    %vm51 = vcmask 818944
    %52 = vst.msk [vmem:[#allocation0] sm:$0x1] %vm51, %v50
    %s53 = scalar_lea.vmem %s0, 23
    %v54 = vld [vmem:[%s53] sm:$0x1]
    %55 = vrot.lane.b32.xlu0 %v54, 92
    %v56 = vpop.permute.xlu0 %55
    %vm57 = vcmask 786144
    %58 = vst.msk [vmem:[#allocation0] sm:$0x1] %vm57, %v56
    %s59 = scalar_lea.vmem %s0, 22
    %v60 = vld [vmem:[%s59] sm:$0x1]
    %61 = vrot.lane.b32.xlu0 %v60, 88
    %v62 = vpop.permute.xlu0 %61
    %vm63 = vcmask 753344
    %64 = vst.msk [vmem:[#allocation0] sm:$0x1] %vm63, %v62
    %s65 = scalar_lea.vmem %s0, 21
    %v66 = vld [vmem:[%s65] sm:$0x1]
    %67 = vrot.lane.b32.xlu0 %v66, 84
    %v68 = vpop.permute.xlu0 %67
    %vm69 = vcmask 720544
    %70 = vst.msk [vmem:[#allocation0] sm:$0x1] %vm69, %v68
    %s71 = scalar_lea.vmem %s0, 20
    %v72 = vld [vmem:[%s71] sm:$0x1]
    %73 = vrot.lane.b32.xlu0 %v72, 80
    %v74 = vpop.permute.xlu0 %73
    %vm75 = vcmask 687744
    %76 = vst.msk [vmem:[#allocation0] sm:$0x1] %vm75, %v74
    %s77 = scalar_lea.vmem %s0, 19
    %v78 = vld [vmem:[%s77] sm:$0x1]
    %79 = vrot.lane.b32.xlu0 %v78, 76
    %v80 = vpop.permute.xlu0 %79
    %vm81 = vcmask 654944
    %82 = vst.msk [vmem:[#allocation0] sm:$0x1] %vm81, %v80
    %s83 = scalar_lea.vmem %s0, 18
    %v84 = vld [vmem:[%s83] sm:$0x1]
    %85 = vrot.lane.b32.xlu0 %v84, 72
    %v86 = vpop.permute.xlu0 %85
    %vm87 = vcmask 622144
    %88 = vst.msk [vmem:[#allocation0] sm:$0x1] %vm87, %v86
    %s89 = scalar_lea.vmem %s0, 17
    %v90 = vld [vmem:[%s89] sm:$0x1]
    %91 = vrot.lane.b32.xlu0 %v90, 68
    %v92 = vpop.permute.xlu0 %91
    %vm93 = vcmask 589344
    %94 = vst.msk [vmem:[#allocation0] sm:$0x1] %vm93, %v92
    %s95 = scalar_lea.vmem %s0, 16
    %v96 = vld [vmem:[%s95] sm:$0x1]
    %97 = vrot.lane.b32.xlu0 %v96, 64
    %v98 = vpop.permute.xlu0 %97
    %vm99 = vcmask 556544
    %100 = vst.msk [vmem:[#allocation0] sm:$0x1] %vm99, %v98
    %s101 = scalar_lea.vmem %s0, 15
    %v102 = vld [vmem:[%s101] sm:$0x1]
    %103 = vrot.lane.b32.xlu0 %v102, 60
    %v104 = vpop.permute.xlu0 %103
    %vm105 = vcmask 523744
    %106 = vst.msk [vmem:[#allocation0] sm:$0x1] %vm105, %v104
    %s107 = scalar_lea.vmem %s0, 14
    %v108 = vld [vmem:[%s107] sm:$0x1]
    %109 = vrot.lane.b32.xlu0 %v108, 56
    %v110 = vpop.permute.xlu0 %109
    %vm111 = vcmask 490944
    %112 = vst.msk [vmem:[#allocation0] sm:$0x1] %vm111, %v110
    %s113 = scalar_lea.vmem %s0, 13
    %v114 = vld [vmem:[%s113] sm:$0x1]
    %115 = vrot.lane.b32.xlu0 %v114, 52
    %v116 = vpop.permute.xlu0 %115
    %vm117 = vcmask 458144
    %118 = vst.msk [vmem:[#allocation0] sm:$0x1] %vm117, %v116
    %s119 = scalar_lea.vmem %s0, 12
    %v120 = vld [vmem:[%s119] sm:$0x1]
    %121 = vrot.lane.b32.xlu0 %v120, 48
    %v122 = vpop.permute.xlu0 %121
    %vm123 = vcmask 425344
    %124 = vst.msk [vmem:[#allocation0] sm:$0x1] %vm123, %v122
    %s125 = scalar_lea.vmem %s0, 11
    %v126 = vld [vmem:[%s125] sm:$0x1]
    %127 = vrot.lane.b32.xlu0 %v126, 44
    %v128 = vpop.permute.xlu0 %127
    %vm129 = vcmask 392544
    %130 = vst.msk [vmem:[#allocation0] sm:$0x1] %vm129, %v128
    %s131 = scalar_lea.vmem %s0, 10
    %v132 = vld [vmem:[%s131] sm:$0x1]
    %133 = vrot.lane.b32.xlu0 %v132, 40
    %v134 = vpop.permute.xlu0 %133
    %vm135 = vcmask 359744
    %136 = vst.msk [vmem:[#allocation0] sm:$0x1] %vm135, %v134
    %s137 = scalar_lea.vmem %s0, 9
    %v138 = vld [vmem:[%s137] sm:$0x1]
    %139 = vrot.lane.b32.xlu0 %v138, 36
    %v140 = vpop.permute.xlu0 %139
    %vm141 = vcmask 326944
    %142 = vst.msk [vmem:[#allocation0] sm:$0x1] %vm141, %v140
    %s143 = scalar_lea.vmem %s0, 8
    %v144 = vld [vmem:[%s143] sm:$0x1]
    %145 = vrot.lane.b32.xlu0 %v144, 32
    %v146 = vpop.permute.xlu0 %145
    %vm147 = vcmask 294144
    %148 = vst.msk [vmem:[#allocation0] sm:$0x1] %vm147, %v146
    %s149 = scalar_lea.vmem %s0, 7
    %v150 = vld [vmem:[%s149] sm:$0x1]
    %151 = vrot.lane.b32.xlu0 %v150, 28
    %v152 = vpop.permute.xlu0 %151
    %vm153 = vcmask 261344
    %154 = vst.msk [vmem:[#allocation0] sm:$0x1] %vm153, %v152
    %s155 = scalar_lea.vmem %s0, 6
    %v156 = vld [vmem:[%s155] sm:$0x1]
    %157 = vrot.lane.b32.xlu0 %v156, 24
    %v158 = vpop.permute.xlu0 %157
    %vm159 = vcmask 228544
    %160 = vst.msk [vmem:[#allocation0] sm:$0x1] %vm159, %v158
    %s161 = scalar_lea.vmem %s0, 5
    %v162 = vld [vmem:[%s161] sm:$0x1]
    %163 = vrot.lane.b32.xlu0 %v162, 20
    %v164 = vpop.permute.xlu0 %163
    %vm165 = vcmask 195744
    %166 = vst.msk [vmem:[#allocation0] sm:$0x1] %vm165, %v164
    %s167 = scalar_lea.vmem %s0, 4
    %v168 = vld [vmem:[%s167] sm:$0x1]
    %169 = vrot.lane.b32.xlu0 %v168, 16
    %v170 = vpop.permute.xlu0 %169
    %vm171 = vcmask 162944
    %172 = vst.msk [vmem:[#allocation0] sm:$0x1] %vm171, %v170
    %s173 = scalar_lea.vmem %s0, 3
    %v174 = vld [vmem:[%s173] sm:$0x1]
    %175 = vrot.lane.b32.xlu0 %v174, 12
    %v176 = vpop.permute.xlu0 %175
    %vm177 = vcmask 130144
    %178 = vst.msk [vmem:[#allocation0] sm:$0x1] %vm177, %v176
    %s179 = scalar_lea.vmem %s0, 2
    %v180 = vld [vmem:[%s179] sm:$0x1]
    %181 = vrot.lane.b32.xlu0 %v180, 8
    %v182 = vpop.permute.xlu0 %181
    %vm183 = vcmask 97344
    %184 = vst.msk [vmem:[#allocation0] sm:$0x1] %vm183, %v182
    %s185 = scalar_lea.vmem %s0, 1
    %v186 = vld [vmem:[%s185] sm:$0x1]
    %187 = vrot.lane.b32.xlu0 %v186, 4
    %v188 = vpop.permute.xlu0 %187
    %vm189 = vcmask 64544
    %190 = vst.msk [vmem:[#allocation0] sm:$0x1] %vm189, %v188
    %s192 = sshll.u32 1, 1
    %s193 = ssub.s32 %s192, 1
    %v195 = vld [vmem:[#allocation0] sm:%s193]
    %s196 = sshll.u32 1, 1
    %s197 = ssub.s32 %s196, 1
    %198 = vst [vmem:[%s1] sm:%s197] %v195

// kernel: upsample_forward.5
$region0: #{upsample_forward.5}
  #allocation0 [shape = 'u32[]', space=smem, size = 0x4, offset = 0x4, fixed_abs, tag = 'smem constant byte address 0x4 - core index']
  #allocation1 [shape = 'u32[144,128]{1,0:T(1,128)}', space=vmem, size = 0x12000, scoped, tag = 'internal scratch']
  #allocation2 [shape = 'f32[10,256]{1,0:T(8,128)}', space=vmem, size = 0x4000, scoped, tag = 'scratch operand']
  %s0 = inlined_call_operand.vmem [shape: f32[2,32,256], index: 0, kind: input, shape index: {}]
  %s1 = inlined_call_operand.vmem [shape: f32[3,256,128], index: 1, kind: input, shape index: {}]
  %s2 = inlined_call_operand.vmem [shape: f32[1,128], index: 2, kind: input, shape index: {}]
  %s3 = inlined_call_operand.vmem [shape: f32[2,32,128], index: 3, kind: output, shape index: {}]
  %s4 = sld [smem:[#allocation0]]
  $region53: #{upsample_forward.5} parent=0
    _
  %s6 = ssub.s32 1, %s4
  %s7 = scalar_select 0, %s6, %s4
  loop: start=0, step=1, limit=10
  $region2: #{upsample_forward.5} parent=0 // loop_pre_header
    _
  $region3: #{upsample_forward.5} parent=0 // loop_header
    %s9 = sphi 0, %s13
    %p10 = scmp.ge.s32.totalorder %s9, 10
    %s16 = sphi 0, %s28
    %s17 = sphi 0, %s24
    %s18 = sphi 0, %s16
    %s19 = sphi 0, %s17
    %s20 = sphi 0, %s18
    %s21 = sphi 0, %s19
    %s31 = sphi 0, %s33
    %s34 = sphi 0, %s31
    %s35 = sphi 0, %s34
    %s51 = sphi 0, %s35
    %s55 = sphi 0, %s55
    %s57 = sphi 0, %s55
    %s58 = sphi 0, %s57
    %s72 = sphi 0, %s58
    %s76 = sphi 0, %s76
    %s78 = sphi 0, %s76
    %s79 = sphi 0, %s78
    %s93 = sphi 0, %s79
    %s101 = sphi 0, %s103
    %s104 = sphi 0, %s101
    %s105 = sphi 0, %s104
    %s121 = sphi 0, %s105
  $region4: #{upsample_forward.5} parent=0 // loop_header_branch
    %12 = sbr.rel (%p10) target = $region8
  $region5: #{upsample_forward.5} parent=0 // loop_body
    %s14 = ssub.s32 %s9, 1
    %s15 = ssub.s32 %s9, 2
    %s22 = sadd.s32 1, %s17
    %p23 = scmp.ge.s32.totalorder %s22, 4
    %s24 = scalar_select %p23, 0, %s22
    %s25 = sadd.s32 1, %s16
    %s26 = scalar_select %p23, %s25, %s16
    %p27 = scmp.ge.s32.totalorder %s26, 2
    %s28 = scalar_select %p27, 0, %s26
    %s29 = ssub.s32 %s16, %s28
    %p30 = scmp.eq.s32.totalorder %s29, 0
    %s32 = sadd.s32 %s31, 1
    %s33 = scalar_select %p30, %s31, %s32
    %p36 = pneg %p30
    %p37 = scmp.eq.s32.totalorder %s9, 7
    %p38 = por %p36, %p37
    %p39 = scmp.ne.s32.totalorder %s31, %s34
    %p40 = scmp.eq.s32.totalorder %s9, 0
    %p41 = por %p39, %p40
    %p42 = scmp.ne.s32.totalorder %s31, %s34
    %p43 = scmp.eq.s32.totalorder %s14, 7
    %p44 = por %p42, %p43
    %p45 = scmp.ne.s32.totalorder %s34, %s35
    %p46 = scmp.eq.s32.totalorder %s14, 0
    %p47 = por %p45, %p46
    %p48 = scmp.ne.s32.totalorder %s34, %s35
    %p49 = scmp.eq.s32.totalorder %s15, 7
    %p50 = por %p48, %p49
    %p52 = scmp.ne.s32.totalorder %s35, %s51
    %p53 = scmp.eq.s32.totalorder %s15, 0
    %p54 = por %p52, %p53
    %s56 = sadd.s32 %s55, 1
    %p59 = scmp.eq.s32.totalorder %s9, 7
    %p60 = scmp.ne.s32.totalorder %s55, %s57
    %p61 = scmp.eq.s32.totalorder %s9, 0
    %p62 = por %p60, %p61
    %p63 = scmp.ne.s32.totalorder %s55, %s57
    %p64 = scmp.eq.s32.totalorder %s14, 7
    %p65 = por %p63, %p64
    %p66 = scmp.ne.s32.totalorder %s57, %s58
    %p67 = scmp.eq.s32.totalorder %s14, 0
    %p68 = por %p66, %p67
    %p69 = scmp.ne.s32.totalorder %s57, %s58
    %p70 = scmp.eq.s32.totalorder %s15, 7
    %p71 = por %p69, %p70
    %p73 = scmp.ne.s32.totalorder %s58, %s72
    %p74 = scmp.eq.s32.totalorder %s15, 0
    %p75 = por %p73, %p74
    %s77 = sadd.s32 %s76, 1
    %p80 = scmp.eq.s32.totalorder %s9, 7
    %p81 = scmp.ne.s32.totalorder %s76, %s78
    %p82 = scmp.eq.s32.totalorder %s9, 0
    %p83 = por %p81, %p82
    %p84 = scmp.ne.s32.totalorder %s76, %s78
    %p85 = scmp.eq.s32.totalorder %s14, 7
    %p86 = por %p84, %p85
    %p87 = scmp.ne.s32.totalorder %s78, %s79
    %p88 = scmp.eq.s32.totalorder %s14, 0
    %p89 = por %p87, %p88
    %p90 = scmp.ne.s32.totalorder %s78, %s79
    %p91 = scmp.eq.s32.totalorder %s15, 7
    %p92 = por %p90, %p91
    %p94 = scmp.ne.s32.totalorder %s79, %s93
    %p95 = scmp.eq.s32.totalorder %s15, 0
    %p96 = por %p94, %p95
    %s97 = ssub.s32 %s16, %s28
    %s98 = ssub.s32 %s17, %s24
    %s99 = sor.u32 %s97, %s98
    %p100 = scmp.eq.s32.totalorder %s99, 0
    %s102 = sadd.s32 %s101, 1
    %s103 = scalar_select %p100, %s101, %s102
    %p106 = pneg %p100
    %p107 = scmp.eq.s32.totalorder %s9, 7
    %p108 = por %p106, %p107
    %p109 = scmp.ne.s32.totalorder %s101, %s104
    %p110 = scmp.eq.s32.totalorder %s9, 0
    %p111 = por %p109, %p110
    %p112 = scmp.ne.s32.totalorder %s101, %s104
    %p113 = scmp.eq.s32.totalorder %s14, 7
    %p114 = por %p112, %p113
    %p115 = scmp.ne.s32.totalorder %s104, %s105
    %p116 = scmp.eq.s32.totalorder %s14, 0
    %p117 = por %p115, %p116
    %p118 = scmp.ne.s32.totalorder %s104, %s105
    %p119 = scmp.eq.s32.totalorder %s15, 7
    %p120 = por %p118, %p119
    %p122 = scmp.ne.s32.totalorder %s105, %s121
    %p123 = scmp.eq.s32.totalorder %s15, 0
    %p124 = por %p122, %p123
    %p125 = scmp.le.s32.totalorder 1, %s9
    %p126 = scmp.lt.s32.totalorder %s9, 9
    %p127 = pnand %p125, %p126
    %p128 = pneg %p127
    // Predicated region
    $region9: #{upsample_forward.5} parent=5 // pred_check
      _
    $region10: #{upsample_forward.5} parent=5 // pred_check_branch
      %130 = sbr.rel (%p127) target = $region12
    $region11: #{upsample_forward.5} parent=5 // pred_region
      %s131 = ssub.s32 %s9, 1
      // Predicated region
      $region13: #{upsample_forward.5} parent=11 // pred_check
        %p132 = pneg %p68
      $region14: #{upsample_forward.5} parent=11 // pred_check_branch
        %134 = sbr.rel (%p132) target = $region16
      $region15: #{upsample_forward.5} parent=11 // pred_region
        _
      $region16: #{upsample_forward.5} parent=11 // pred_fallthru
        _
      // Predicated region
      $region17: #{upsample_forward.5} parent=11 // pred_check
        %p135 = pneg %p89
      $region18: #{upsample_forward.5} parent=11 // pred_check_branch
        %137 = sbr.rel (%p135) target = $region20
      $region19: #{upsample_forward.5} parent=11 // pred_region
        _
      $region20: #{upsample_forward.5} parent=11 // pred_fallthru
        _
    $region12: #{upsample_forward.5} parent=5 // pred_fallthru
      _
    %p138 = scmp.lt.s32.totalorder %s9, 8
    // Predicated region
    $region21: #{upsample_forward.5} parent=5 // pred_check
      %p139 = pneg %p138
    $region22: #{upsample_forward.5} parent=5 // pred_check_branch
      %141 = sbr.rel (%p139) target = $region24
    $region23: #{upsample_forward.5} parent=5 // pred_region
      // Predicated region
      $region25: #{upsample_forward.5} parent=23 // pred_check
        %p142 = pneg %p41
      $region26: #{upsample_forward.5} parent=23 // pred_check_branch
        %144 = sbr.rel (%p142) target = $region28
      $region27: #{upsample_forward.5} parent=23 // pred_region
        %p145 = scmp.lt.s32.totalorder %s16, 1
        %s146 = scalar_select %p145, %s16, 1
        %s147 = smul.addr %s146, 8
        %s148 = smul.addr %s147, 8
        %s149 = scalar_lea.vmem %s0, %s148
      $region28: #{upsample_forward.5} parent=23 // pred_fallthru
        _
    $region24: #{upsample_forward.5} parent=5 // pred_fallthru
      _
    %p150 = scmp.le.s32.totalorder 1, %s9
    %p151 = scmp.lt.s32.totalorder %s9, 9
    %p152 = pnand %p150, %p151
    %p153 = pneg %p152
    // Predicated region
    $region29: #{upsample_forward.5} parent=5 // pred_check
      _
    $region30: #{upsample_forward.5} parent=5 // pred_check_branch
      %155 = sbr.rel (%p152) target = $region32
    $region31: #{upsample_forward.5} parent=5 // pred_region
      %s156 = ssub.s32 %s9, 1
      %p157 = scmp.lt.s32.totalorder %s18, 1
      %s158 = scalar_select %p157, %s18, 1
      %s159 = smul.addr %s158, 8
      %s160 = smul.addr %s159, 8
      %s161 = scalar_lea.vmem %s0, %s160
      %p162 = pneg %p47
      %p163 = pneg %p44
      %p164 = pneg %p68
      %p165 = pneg %p65
      %p166 = pneg %p89
      %p167 = pneg %p86
      %p168 = pneg %p117
      %p169 = pneg %p114
      %p170 = scmp.lt.s32.totalorder %s18, 1
      %s171 = scalar_select %p170, %s18, 1
      %p172 = scmp.lt.s32.totalorder %s19, 3
      %s173 = scalar_select %p172, %s19, 3
      %s174 = smul.addr %s171, 4
      %s175 = sadd.s32 %s173, %s174
      %s176 = smul.addr %s175, 8
      %s177 = scalar_lea.vmem %s3, %s176
      %p178 = scmp.lt.s32.totalorder %s18, 1
      %s179 = scalar_select %p178, %s18, 1
      %s180 = smul.addr %s179, 8
      %s181 = smul.addr %s180, 8
      %s182 = scalar_lea.vmem %s0, %s181
      %p183 = scmp.lt.s32.totalorder %s18, 1
      %s184 = scalar_select %p183, %s18, 1
      %p185 = scmp.lt.s32.totalorder %s19, 3
      %s186 = scalar_select %p185, %s19, 3
      %s187 = smul.addr %s184, 4
      %s188 = sadd.s32 %s186, %s187
      %s189 = smul.addr %s188, 8
      %s190 = scalar_lea.vmem %s3, %s189
      %s191 = smul.u32 %s19, 8
      %v192 = vlaneseq
      %vm193 = vcmp.ge.s32.totalorder %v192, 0
      %vm194 = vcmp.lt.s32.totalorder %v192, 256
      %vm195 = vmand %vm193, %vm194
      %196 = vst.msk [vmem:[#allocation2] ss:$8 sm:$0x3] %vm195, 0.0
      %197 = vst.msk [vmem:[#allocation2] ss:$8 sm:$0x0] %vm195, 0.0
      %s198 = scalar_lea.vmem [#allocation2], 17
      %199 = vst.msk [vmem:[%s198] ss:$8 sm:$0x3] %vm195, 0.0
      %200 = vst.msk [vmem:[%s198] ss:$8 sm:$0x0] %vm195, 0.0
      %s201 = sshra.s32 %s191, 3
      %s202 = sand.u32 %s191, 7
      %s203 = smul.u32 %s201, 2
      %s204 = smul.addr %s203, 8
      %s205 = scalar_lea.vmem %s182, %s204
      %v206 = vld [vmem:[%s205] sm:$0xff]
      %v207 = vld [vmem:[%s205 + $0x8] sm:$0xff]
      %v210 = vrot.slane %v206, 7
      %v211 = vrot.slane %v207, 7
      %214 = vst [vmem:[#allocation2] sm:$0xfe] %v210
      %215 = vst [vmem:[#allocation2 + $0x8] sm:$0xfe] %v211
      %216 = vst [vmem:[#allocation2 + $0x10] sm:$0x1] %v210
      %217 = vst [vmem:[#allocation2 + $0x18] sm:$0x1] %v211
      %p218 = scmp.gt.s32.totalorder %s19, 0
      // Predicated region
      $region33: #{upsample_forward.5} parent=31 // pred_check
        %p219 = pneg %p218
      $region34: #{upsample_forward.5} parent=31 // pred_check_branch
        %221 = sbr.rel (%p219) target = $region36
      $region35: #{upsample_forward.5} parent=31 // pred_region
        %s222 = ssub.s32 %s191, 8
        %s223 = sshra.s32 %s222, 3
        %s224 = sand.u32 %s222, 7
        %s225 = smul.u32 %s223, 2
        %s226 = smul.addr %s225, 8
        %s227 = scalar_lea.vmem %s182, %s226
        %v228 = vld [vmem:[%s227] sm:$0xff]
        %v229 = vld [vmem:[%s227 + $0x8] sm:$0xff]
        %v232 = vcombine.high %v228, %v229
        %v234 = vunpack.c.l.s4 1966171168
        %v235 = vunpack.c.0.s8 %v234
        %v236 = vlaneseq
        %v237 = vshrl.u32 %v236, 7
        %v238 = vsub.s32 %v235, %v237
        %v239 = vrot.slane %v232, %v238
        %v240 = vcombine.high %v239, %v239
        %v242 = vunpack.c.l.s4 1966171168
        %v243 = vunpack.c.0.s8 %v242
        %v244 = vlaneseq
        %v245 = vshrl.u32 %v244, 7
        %v246 = vsub.s32 %v243, %v245
        %v247 = vrot.slane %v240, %v246
        %v248 = vcombine.high %v247, %v247
        %250 = vst.msk [vmem:[#allocation2] ss:$8 sm:$0x3] %vm195, %v248
        %251 = vst.msk [vmem:[#allocation2] ss:$8 sm:$0x0] %vm195, %v248
      $region36: #{upsample_forward.5} parent=31 // pred_fallthru
        _
      %p252 = scmp.lt.s32.totalorder %s19, 3
      // Predicated region
      $region37: #{upsample_forward.5} parent=31 // pred_check
        %p253 = pneg %p252
      $region38: #{upsample_forward.5} parent=31 // pred_check_branch
        %255 = sbr.rel (%p253) target = $region40
      $region39: #{upsample_forward.5} parent=31 // pred_region
        %s256 = sadd.s32 %s191, 8
        %s257 = sshra.s32 %s256, 3
        %s258 = sand.u32 %s256, 7
        %s259 = smul.u32 %s257, 2
        %s260 = smul.addr %s259, 8
        %s261 = scalar_lea.vmem %s182, %s260
        %v262 = vld [vmem:[%s261] sm:$0xff]
        %v263 = vld [vmem:[%s261 + $0x8] sm:$0xff]
        %v266 = vcombine.low %v262, %v263
        %v268 = vunpack.c.l.s4 1966171168
        %v269 = vunpack.c.0.s8 %v268
        %v270 = vlaneseq
        %v271 = vshrl.u32 %v270, 7
        %v272 = vsub.s32 %v269, %v271
        %v273 = vrot.slane %v266, %v272
        %v275 = vunpack.c.l.s4 1966171168
        %v276 = vunpack.c.0.s8 %v275
        %v277 = vlaneseq
        %v278 = vshrl.u32 %v277, 7
        %v279 = vsub.s32 %v276, %v278
        %v280 = vrot.slane %v273, %v279
        %282 = vst.msk [vmem:[%s198] ss:$8 sm:$0x3] %vm195, %v280
        %283 = vst.msk [vmem:[%s198] ss:$8 sm:$0x0] %vm195, %v280
      $region40: #{upsample_forward.5} parent=31 // pred_fallthru
        _
      %v284 = vld [vmem:[#allocation2] sm:$0xff]
      %v285 = vld [vmem:[#allocation2 + $0x8] sm:$0xff]
      %v286 = vld [vmem:[%s1] sm:$0xff]
      %v287 = vld [vmem:[%s1 + $0x8] sm:$0xff]
      %v288 = vld [vmem:[%s1 + $0x10] sm:$0xff]
      %v289 = vld [vmem:[%s1 + $0x18] sm:$0xff]
      %v290 = vld [vmem:[%s1 + $0x20] sm:$0xff]
      %v291 = vld [vmem:[%s1 + $0x28] sm:$0xff]
      %v292 = vld [vmem:[%s1 + $0x30] sm:$0xff]
      %v293 = vld [vmem:[%s1 + $0x38] sm:$0xff]
      %v294 = vld [vmem:[%s1 + $0x40] sm:$0xff]
      %v295 = vld [vmem:[%s1 + $0x48] sm:$0xff]
      %v296 = vld [vmem:[%s1 + $0x50] sm:$0xff]
      %v297 = vld [vmem:[%s1 + $0x58] sm:$0xff]
      %v298 = vld [vmem:[%s1 + $0x60] sm:$0xff]
      %v299 = vld [vmem:[%s1 + $0x68] sm:$0xff]
      %v300 = vld [vmem:[%s1 + $0x70] sm:$0xff]
      %v301 = vld [vmem:[%s1 + $0x78] sm:$0xff]
      %v302 = vld [vmem:[%s1 + $0x80] sm:$0xff]
      %v303 = vld [vmem:[%s1 + $0x88] sm:$0xff]
      %v304 = vld [vmem:[%s1 + $0x90] sm:$0xff]
      %v305 = vld [vmem:[%s1 + $0x98] sm:$0xff]
      %v306 = vld [vmem:[%s1 + $0xa0] sm:$0xff]
      %v307 = vld [vmem:[%s1 + $0xa8] sm:$0xff]
      %v308 = vld [vmem:[%s1 + $0xb0] sm:$0xff]
      %v309 = vld [vmem:[%s1 + $0xb8] sm:$0xff]
      %v310 = vld [vmem:[%s1 + $0xc0] sm:$0xff]
      %v311 = vld [vmem:[%s1 + $0xc8] sm:$0xff]
      %v312 = vld [vmem:[%s1 + $0xd0] sm:$0xff]
      %v313 = vld [vmem:[%s1 + $0xd8] sm:$0xff]
      %v314 = vld [vmem:[%s1 + $0xe0] sm:$0xff]
      %v315 = vld [vmem:[%s1 + $0xe8] sm:$0xff]
      %v316 = vld [vmem:[%s1 + $0xf0] sm:$0xff]
      %v317 = vld [vmem:[%s1 + $0xf8] sm:$0xff]
      %v318 = vld [vmem:[#allocation2] sm:$0xfe]
      %v319 = vld [vmem:[#allocation2 + $0x8] sm:$0xfe]
      %v320 = vld [vmem:[#allocation2 + $0x10] sm:$0x1]
      %v321 = vld [vmem:[#allocation2 + $0x18] sm:$0x1]
      %s322 = scalar_lea.vmem %s1, 256
      %v323 = vld [vmem:[%s322] sm:$0xff]
      %v324 = vld [vmem:[%s322 + $0x8] sm:$0xff]
      %v325 = vld [vmem:[%s322 + $0x10] sm:$0xff]
      %v326 = vld [vmem:[%s322 + $0x18] sm:$0xff]
      %v327 = vld [vmem:[%s322 + $0x20] sm:$0xff]
      %v328 = vld [vmem:[%s322 + $0x28] sm:$0xff]
      %v329 = vld [vmem:[%s322 + $0x30] sm:$0xff]
      %v330 = vld [vmem:[%s322 + $0x38] sm:$0xff]
      %v331 = vld [vmem:[%s322 + $0x40] sm:$0xff]
      %v332 = vld [vmem:[%s322 + $0x48] sm:$0xff]
      %v333 = vld [vmem:[%s322 + $0x50] sm:$0xff]
      %v334 = vld [vmem:[%s322 + $0x58] sm:$0xff]
      %v335 = vld [vmem:[%s322 + $0x60] sm:$0xff]
      %v336 = vld [vmem:[%s322 + $0x68] sm:$0xff]
      %v337 = vld [vmem:[%s322 + $0x70] sm:$0xff]
      %v338 = vld [vmem:[%s322 + $0x78] sm:$0xff]
      %v339 = vld [vmem:[%s322 + $0x80] sm:$0xff]
      %v340 = vld [vmem:[%s322 + $0x88] sm:$0xff]
      %v341 = vld [vmem:[%s322 + $0x90] sm:$0xff]
      %v342 = vld [vmem:[%s322 + $0x98] sm:$0xff]
      %v343 = vld [vmem:[%s322 + $0xa0] sm:$0xff]
      %v344 = vld [vmem:[%s322 + $0xa8] sm:$0xff]
      %v345 = vld [vmem:[%s322 + $0xb0] sm:$0xff]
      %v346 = vld [vmem:[%s322 + $0xb8] sm:$0xff]
      %v347 = vld [vmem:[%s322 + $0xc0] sm:$0xff]
      %v348 = vld [vmem:[%s322 + $0xc8] sm:$0xff]
      %v349 = vld [vmem:[%s322 + $0xd0] sm:$0xff]
      %v350 = vld [vmem:[%s322 + $0xd8] sm:$0xff]
      %v351 = vld [vmem:[%s322 + $0xe0] sm:$0xff]
      %v352 = vld [vmem:[%s322 + $0xe8] sm:$0xff]
      %v353 = vld [vmem:[%s322 + $0xf0] sm:$0xff]
      %v354 = vld [vmem:[%s322 + $0xf8] sm:$0xff]
      %vm359 = vcmask 1046528
      %v360 = vrot.slane %v318, 1
      %v361 = vrot.slane %v320, 1
      %v362 = vsel %vm359, %v360, %v361
      %v363 = vrot.slane %v319, 1
      %v364 = vrot.slane %v321, 1
      %v365 = vsel %vm359, %v363, %v364
      %368 = vmatprep.subr.mxu0 0.0
      %369 = vmatpush1.msra.mxu0 %v338
      %370 = vmatprep.subr.mxu0 0.0
      %371 = vmatpush1.msra.mxu0 %v337
      %372 = vmatprep.subr.mxu0 0.0
      %373 = vmatpush1.msra.mxu0 %v336
      %374 = vmatprep.subr.mxu0 0.0
      %375 = vmatpush1.msra.mxu0 %v335
      %376 = vmatprep.subr.mxu0 0.0
      %377 = vmatpush1.msra.mxu0 %v334
      %378 = vmatprep.subr.mxu0 0.0
      %379 = vmatpush1.msra.mxu0 %v333
      %380 = vmatprep.subr.mxu0 0.0
      %381 = vmatpush1.msra.mxu0 %v332
      %382 = vmatprep.subr.mxu0 0.0
      %383 = vmatpush1.msra.mxu0 %v331
      %384 = vmatprep.subr.mxu0 0.0
      %385 = vmatpush1.msra.mxu0 %v330
      %386 = vmatprep.subr.mxu0 0.0
      %387 = vmatpush1.msra.mxu0 %v329
      %388 = vmatprep.subr.mxu0 0.0
      %389 = vmatpush1.msra.mxu0 %v328
      %390 = vmatprep.subr.mxu0 0.0
      %391 = vmatpush1.msra.mxu0 %v327
      %392 = vmatprep.subr.mxu0 0.0
      %393 = vmatpush1.msra.mxu0 %v326
      %394 = vmatprep.subr.mxu0 0.0
      %395 = vmatpush1.msra.mxu0 %v325
      %396 = vmatprep.subr.mxu0 0.0
      %397 = vmatpush1.msra.mxu0 %v324
      %398 = vmatprep.subr.mxu0 0.0
      %399 = vmatpush1.msra.mxu0 %v323
      %400 = vmatprep.subr.mxu0 0.0
      %401 = vmatpush2.msra.mxu0 %v354
      %402 = vmatprep.subr.mxu0 0.0
      %403 = vmatpush2.msra.mxu0 %v353
      %404 = vmatprep.subr.mxu0 0.0
      %405 = vmatpush2.msra.mxu0 %v352
      %406 = vmatprep.subr.mxu0 0.0
      %407 = vmatpush2.msra.mxu0 %v351
      %408 = vmatprep.subr.mxu0 0.0
      %409 = vmatpush2.msra.mxu0 %v350
      %410 = vmatprep.subr.mxu0 0.0
      %411 = vmatpush2.msra.mxu0 %v349
      %412 = vmatprep.subr.mxu0 0.0
      %413 = vmatpush2.msra.mxu0 %v348
      %414 = vmatprep.subr.mxu0 0.0
      %415 = vmatpush2.msra.mxu0 %v347
      %416 = vmatprep.subr.mxu0 0.0
      %417 = vmatpush2.msra.mxu0 %v346
      %418 = vmatprep.subr.mxu0 0.0
      %419 = vmatpush2.msra.mxu0 %v345
      %420 = vmatprep.subr.mxu0 0.0
      %421 = vmatpush2.msra.mxu0 %v344
      %422 = vmatprep.subr.mxu0 0.0
      %423 = vmatpush2.msra.mxu0 %v343
      %424 = vmatprep.subr.mxu0 0.0
      %425 = vmatpush2.msra.mxu0 %v342
      %426 = vmatprep.subr.mxu0 0.0
      %427 = vmatpush2.msra.mxu0 %v341
      %428 = vmatprep.subr.mxu0 0.0
      %429 = vmatpush2.msra.mxu0 %v340
      %430 = vmatprep.subr.mxu0 0.0
      %431 = vmatpush2.msra.mxu0 %v339
      %432 = vmatprep.mubr.f32.mxu0 %v365
      %433 = vmatmul.mubr.f32.gmra.mxu0 %v362
      %v434 = vpop.f32.mrf.mxu0
      %v435 = vadd.f32 0.0, %v434
      %v436 = vpop.f32.mrf.mxu0
      %437 = vdwg.mxu0
      %438 = vmatprep.subr.mxu0 0.0
      %439 = vmatpush1.msra.mxu0 %v301
      %440 = vmatprep.subr.mxu0 0.0
      %441 = vmatpush1.msra.mxu0 %v300
      %442 = vmatprep.subr.mxu0 0.0
      %443 = vmatpush1.msra.mxu0 %v299
      %444 = vmatprep.subr.mxu0 0.0
      %445 = vmatpush1.msra.mxu0 %v298
      %446 = vmatprep.subr.mxu0 0.0
      %447 = vmatpush1.msra.mxu0 %v297
      %448 = vmatprep.subr.mxu0 0.0
      %449 = vmatpush1.msra.mxu0 %v296
      %450 = vmatprep.subr.mxu0 0.0
      %451 = vmatpush1.msra.mxu0 %v295
      %452 = vmatprep.subr.mxu0 0.0
      %453 = vmatpush1.msra.mxu0 %v294
      %454 = vmatprep.subr.mxu0 0.0
      %455 = vmatpush1.msra.mxu0 %v293
      %456 = vmatprep.subr.mxu0 0.0
      %457 = vmatpush1.msra.mxu0 %v292
      %458 = vmatprep.subr.mxu0 0.0
      %459 = vmatpush1.msra.mxu0 %v291
      %460 = vmatprep.subr.mxu0 0.0
      %461 = vmatpush1.msra.mxu0 %v290
      %462 = vmatprep.subr.mxu0 0.0
      %463 = vmatpush1.msra.mxu0 %v289
      %464 = vmatprep.subr.mxu0 0.0
      %465 = vmatpush1.msra.mxu0 %v288
      %466 = vmatprep.subr.mxu0 0.0
      %467 = vmatpush1.msra.mxu0 %v287
      %468 = vmatprep.subr.mxu0 0.0
      %469 = vmatpush1.msra.mxu0 %v286
      %470 = vmatprep.subr.mxu0 0.0
      %471 = vmatpush2.msra.mxu0 %v317
      %472 = vmatprep.subr.mxu0 0.0
      %473 = vmatpush2.msra.mxu0 %v316
      %474 = vmatprep.subr.mxu0 0.0
      %475 = vmatpush2.msra.mxu0 %v315
      %476 = vmatprep.subr.mxu0 0.0
      %477 = vmatpush2.msra.mxu0 %v314
      %478 = vmatprep.subr.mxu0 0.0
      %479 = vmatpush2.msra.mxu0 %v313
      %480 = vmatprep.subr.mxu0 0.0
      %481 = vmatpush2.msra.mxu0 %v312
      %482 = vmatprep.subr.mxu0 0.0
      %483 = vmatpush2.msra.mxu0 %v311
      %484 = vmatprep.subr.mxu0 0.0
      %485 = vmatpush2.msra.mxu0 %v310
      %486 = vmatprep.subr.mxu0 0.0
      %487 = vmatpush2.msra.mxu0 %v309
      %488 = vmatprep.subr.mxu0 0.0
      %489 = vmatpush2.msra.mxu0 %v308
      %490 = vmatprep.subr.mxu0 0.0
      %491 = vmatpush2.msra.mxu0 %v307
      %492 = vmatprep.subr.mxu0 0.0
      %493 = vmatpush2.msra.mxu0 %v306
      %494 = vmatprep.subr.mxu0 0.0
      %495 = vmatpush2.msra.mxu0 %v305
      %496 = vmatprep.subr.mxu0 0.0
      %497 = vmatpush2.msra.mxu0 %v304
      %498 = vmatprep.subr.mxu0 0.0
      %499 = vmatpush2.msra.mxu0 %v303
      %500 = vmatprep.subr.mxu0 0.0
      %501 = vmatpush2.msra.mxu0 %v302
      %502 = vmatprep.mubr.f32.mxu0 %v285
      %503 = vmatmul.mubr.f32.gmra.mxu0 %v284
      %v504 = vpop.f32.mrf.mxu0
      %v505 = vadd.f32 %v435, %v504
      %v506 = vpop.f32.mrf.mxu0
      %507 = vdwg.mxu0
      %v508 = vld [vmem:[#allocation2] sm:$0xfc]
      %v509 = vld [vmem:[#allocation2 + $0x8] sm:$0xfc]
      %v510 = vld [vmem:[#allocation2 + $0x10] sm:$0x3]
      %v511 = vld [vmem:[#allocation2 + $0x18] sm:$0x3]
      %s512 = scalar_lea.vmem %s1, 512
      %v513 = vld [vmem:[%s512] sm:$0xff]
      %v514 = vld [vmem:[%s512 + $0x8] sm:$0xff]
      %v515 = vld [vmem:[%s512 + $0x10] sm:$0xff]
      %v516 = vld [vmem:[%s512 + $0x18] sm:$0xff]
      %v517 = vld [vmem:[%s512 + $0x20] sm:$0xff]
      %v518 = vld [vmem:[%s512 + $0x28] sm:$0xff]
      %v519 = vld [vmem:[%s512 + $0x30] sm:$0xff]
      %v520 = vld [vmem:[%s512 + $0x38] sm:$0xff]
      %v521 = vld [vmem:[%s512 + $0x40] sm:$0xff]
      %v522 = vld [vmem:[%s512 + $0x48] sm:$0xff]
      %v523 = vld [vmem:[%s512 + $0x50] sm:$0xff]
      %v524 = vld [vmem:[%s512 + $0x58] sm:$0xff]
      %v525 = vld [vmem:[%s512 + $0x60] sm:$0xff]
      %v526 = vld [vmem:[%s512 + $0x68] sm:$0xff]
      %v527 = vld [vmem:[%s512 + $0x70] sm:$0xff]
      %v528 = vld [vmem:[%s512 + $0x78] sm:$0xff]
      %v529 = vld [vmem:[%s512 + $0x80] sm:$0xff]
      %v530 = vld [vmem:[%s512 + $0x88] sm:$0xff]
      %v531 = vld [vmem:[%s512 + $0x90] sm:$0xff]
      %v532 = vld [vmem:[%s512 + $0x98] sm:$0xff]
      %v533 = vld [vmem:[%s512 + $0xa0] sm:$0xff]
      %v534 = vld [vmem:[%s512 + $0xa8] sm:$0xff]
      %v535 = vld [vmem:[%s512 + $0xb0] sm:$0xff]
      %v536 = vld [vmem:[%s512 + $0xb8] sm:$0xff]
      %v537 = vld [vmem:[%s512 + $0xc0] sm:$0xff]
      %v538 = vld [vmem:[%s512 + $0xc8] sm:$0xff]
      %v539 = vld [vmem:[%s512 + $0xd0] sm:$0xff]
      %v540 = vld [vmem:[%s512 + $0xd8] sm:$0xff]
      %v541 = vld [vmem:[%s512 + $0xe0] sm:$0xff]
      %v542 = vld [vmem:[%s512 + $0xe8] sm:$0xff]
      %v543 = vld [vmem:[%s512 + $0xf0] sm:$0xff]
      %v544 = vld [vmem:[%s512 + $0xf8] sm:$0xff]
      %vm549 = vcmask 1045504
      %v550 = vrot.slane %v508, 2
      %v551 = vrot.slane %v510, 2
      %v552 = vsel %vm549, %v550, %v551
      %v553 = vrot.slane %v509, 2
      %v554 = vrot.slane %v511, 2
      %v555 = vsel %vm549, %v553, %v554
      %558 = vmatprep.subr.mxu0 0.0
      %559 = vmatpush1.msra.mxu0 %v528
      %560 = vmatprep.subr.mxu0 0.0
      %561 = vmatpush1.msra.mxu0 %v527
      %562 = vmatprep.subr.mxu0 0.0
      %563 = vmatpush1.msra.mxu0 %v526
      %564 = vmatprep.subr.mxu0 0.0
      %565 = vmatpush1.msra.mxu0 %v525
      %566 = vmatprep.subr.mxu0 0.0
      %567 = vmatpush1.msra.mxu0 %v524
      %568 = vmatprep.subr.mxu0 0.0
      %569 = vmatpush1.msra.mxu0 %v523
      %570 = vmatprep.subr.mxu0 0.0
      %571 = vmatpush1.msra.mxu0 %v522
      %572 = vmatprep.subr.mxu0 0.0
      %573 = vmatpush1.msra.mxu0 %v521
      %574 = vmatprep.subr.mxu0 0.0
      %575 = vmatpush1.msra.mxu0 %v520
      %576 = vmatprep.subr.mxu0 0.0
      %577 = vmatpush1.msra.mxu0 %v519
      %578 = vmatprep.subr.mxu0 0.0
      %579 = vmatpush1.msra.mxu0 %v518
      %580 = vmatprep.subr.mxu0 0.0
      %581 = vmatpush1.msra.mxu0 %v517
      %582 = vmatprep.subr.mxu0 0.0
      %583 = vmatpush1.msra.mxu0 %v516
      %584 = vmatprep.subr.mxu0 0.0
      %585 = vmatpush1.msra.mxu0 %v515
      %586 = vmatprep.subr.mxu0 0.0
      %587 = vmatpush1.msra.mxu0 %v514
      %588 = vmatprep.subr.mxu0 0.0
      %589 = vmatpush1.msra.mxu0 %v513
      %590 = vmatprep.subr.mxu0 0.0
      %591 = vmatpush2.msra.mxu0 %v544
      %592 = vmatprep.subr.mxu0 0.0
      %593 = vmatpush2.msra.mxu0 %v543
      %594 = vmatprep.subr.mxu0 0.0
      %595 = vmatpush2.msra.mxu0 %v542
      %596 = vmatprep.subr.mxu0 0.0
      %597 = vmatpush2.msra.mxu0 %v541
      %598 = vmatprep.subr.mxu0 0.0
      %599 = vmatpush2.msra.mxu0 %v540
      %600 = vmatprep.subr.mxu0 0.0
      %601 = vmatpush2.msra.mxu0 %v539
      %602 = vmatprep.subr.mxu0 0.0
      %603 = vmatpush2.msra.mxu0 %v538
      %604 = vmatprep.subr.mxu0 0.0
      %605 = vmatpush2.msra.mxu0 %v537
      %606 = vmatprep.subr.mxu0 0.0
      %607 = vmatpush2.msra.mxu0 %v536
      %608 = vmatprep.subr.mxu0 0.0
      %609 = vmatpush2.msra.mxu0 %v535
      %610 = vmatprep.subr.mxu0 0.0
      %611 = vmatpush2.msra.mxu0 %v534
      %612 = vmatprep.subr.mxu0 0.0
      %613 = vmatpush2.msra.mxu0 %v533
      %614 = vmatprep.subr.mxu0 0.0
      %615 = vmatpush2.msra.mxu0 %v532
      %616 = vmatprep.subr.mxu0 0.0
      %617 = vmatpush2.msra.mxu0 %v531
      %618 = vmatprep.subr.mxu0 0.0
      %619 = vmatpush2.msra.mxu0 %v530
      %620 = vmatprep.subr.mxu0 0.0
      %621 = vmatpush2.msra.mxu0 %v529
      %622 = vmatprep.mubr.f32.mxu0 %v555
      %623 = vmatmul.mubr.f32.gmra.mxu0 %v552
      %v624 = vpop.f32.mrf.mxu0
      %v625 = vadd.f32 0.0, %v624
      %v626 = vpop.f32.mrf.mxu0
      %627 = vdwg.mxu0
      %v628 = vadd.f32 %v505, %v625
      %v629 = vld [vmem:[%s2] sm:$0x1]
      %v631 = vlaneseq
      %v632 = vshrl.u32 %v631, 7
      %v633 = vsub.s32 0, %v632
      %v634 = vrot.slane %v629, %v633
      %v636 = vadd.f32 %v628, %v634
      %v637 = vmax.f32 %v636, 0.0
      %638 = vst [vmem:[%s190] sm:$0xff] %v637
      %p639 = scmp.lt.s32.totalorder %s18, 1
      %s640 = scalar_select %p639, %s18, 1
      %p641 = scmp.lt.s32.totalorder %s19, 3
      %s642 = scalar_select %p641, %s19, 3
      %s643 = smul.addr %s640, 4
      %s644 = sadd.s32 %s642, %s643
      %s645 = smul.addr %s644, 8
      %s646 = scalar_lea.vmem %s3, %s645
      // Predicated region
      $region41: #{upsample_forward.5} parent=31 // pred_check
        %p647 = pneg %p114
      $region42: #{upsample_forward.5} parent=31 // pred_check_branch
        %649 = sbr.rel (%p647) target = $region44
      $region43: #{upsample_forward.5} parent=31 // pred_region
        _
      $region44: #{upsample_forward.5} parent=31 // pred_fallthru
        _
    $region32: #{upsample_forward.5} parent=5 // pred_fallthru
      _
    %p650 = scmp.le.s32.totalorder 2, %s9
    // Predicated region
    $region45: #{upsample_forward.5} parent=5 // pred_check
      %p651 = pneg %p650
    $region46: #{upsample_forward.5} parent=5 // pred_check_branch
      %653 = sbr.rel (%p651) target = $region48
    $region47: #{upsample_forward.5} parent=5 // pred_region
      %s654 = ssub.s32 %s9, 2
      // Predicated region
      $region49: #{upsample_forward.5} parent=47 // pred_check
        %p655 = pneg %p120
      $region50: #{upsample_forward.5} parent=47 // pred_check_branch
        %657 = sbr.rel (%p655) target = $region52
      $region51: #{upsample_forward.5} parent=47 // pred_region
        %p658 = scmp.lt.s32.totalorder %s20, 1
        %s659 = scalar_select %p658, %s20, 1
        %p660 = scmp.lt.s32.totalorder %s21, 3
        %s661 = scalar_select %p660, %s21, 3
        %s662 = smul.addr %s659, 4
        %s663 = sadd.s32 %s661, %s662
        %s664 = smul.addr %s663, 8
        %s665 = scalar_lea.vmem %s3, %s664
      $region52: #{upsample_forward.5} parent=47 // pred_fallthru
        _
    $region48: #{upsample_forward.5} parent=5 // pred_fallthru
      _
  $region6: #{upsample_forward.5} parent=0 // loop_footer
    %s13 = sadd.s32 1, %s9
  $region7: #{upsample_forward.5} parent=0 // loop_footer_branch
    %8 = sbr.rel target = $region3
  $region8: #{upsample_forward.5} parent=0 // loop_exit
    _

</llo_original>
